<compile_context>
chip_gen: v5e
topology: v5e:2x2
jax: 0.10.0
libtpu: 0.0.40
codegen_flags: <defaults>
</compile_context>

<pallas_src>
import math
import functools

import jax
import jax.numpy as jnp
from jax import lax
from jax.experimental import pallas as pl
from jax.experimental.pallas import tpu as pltpu


def _pick_tb(B, L):
    """Batch tile so TB*L >= ~128 (fills the MXU M dim) while keeping the
    BlockSpec second-minor dim valid (multiple of 8 or equal to the full B)."""
    target = max(1, -(-128 // L))
    if B <= target:
        return B
    cands = [t for t in range(8, min(B, target) + 1, 8) if B % t == 0]
    return max(cands) if cands else B


def _mamba_layer_kernel(
    x_ref,        # (L, TB, C)   l-major rows for this batch tile
    ln_wb_ref,    # (2, C)       rows: [ln_weight, ln_bias]
    w_in_ref,     # (C, 2*d_inner)   fused in_proj (x half | z half)
    conv_w_ref,   # (d_conv, d_inner)
    vec_ref,      # (3, d_inner) rows: [conv_bias, dt_bias, D]
    w_dtin_ref,   # (d_inner, dt_pad)   x_proj rows producing dt_low (zero padded)
    w_dt_ref,     # (dt_pad, d_inner)   dt_proj weight (zero padded rows)
    w_bc_ref,     # (2*d_state, d_inner) x_proj rows producing B then C (untransposed)
    a_log_t_ref,  # (d_state, d_inner)   A_log^T
    w_out_ref,    # (d_inner, C)
    o_ref,        # (L, TB, C)
    # scratch
    delta_ref,    # (M, d_inner)
    du_ref,       # (M, d_inner)
    bct_ref,      # (L, 2*d_state, TB)   B/C columns in scan layout
    dA_ref,       # (M, d_state, d_inner)  hoisted exp(delta ⊗ A)
    h_ref,        # (TB, d_state, d_inner) scan state, d_inner on lanes
    ys_ref,       # (M, d_inner)          lane-dense per-step outputs
    *, L, TB, C, d_inner, d_state, d_conv, dt_pad, mxu_dtype,
):
    M = L * TB

    # ---------------- load block as (M, C), rows ordered (l, b) --------------
    x = x_ref[...].reshape(M, C).astype(jnp.float32)

    # ---------------- LayerNorm over channels --------------------------------
    mean = jnp.mean(x, axis=-1, keepdims=True)
    xc = x - mean
    var = jnp.mean(xc * xc, axis=-1, keepdims=True)
    xn = xc * lax.rsqrt(var + 1e-5)
    xn = xn * ln_wb_ref[0:1, :] + ln_wb_ref[1:2, :]

    # ---------------- fused in_proj (bias=False), split x / z ----------------
    xz = jnp.dot(xn.astype(mxu_dtype), w_in_ref[...].astype(mxu_dtype),
                 preferred_element_type=jnp.float32)          # (M, 2*d_inner)
    xp = xz[:, :d_inner]
    z = xz[:, d_inner:]

    # ---------------- causal depthwise conv1d + SiLU --------------------------
    # Rows are l-major, so a shift of s timesteps is a shift of s*TB rows and
    # the zero prefix exactly covers l < s for every batch element.
    acc = xp * conv_w_ref[d_conv - 1:d_conv, :]
    for s in range(1, d_conv):
        shifted = jnp.concatenate(
            [jnp.zeros((s * TB, d_inner), jnp.float32), xp[:M - s * TB, :]],
            axis=0)
        acc = acc + shifted * conv_w_ref[d_conv - 1 - s:d_conv - s, :]
    u = acc + vec_ref[0:1, :]
    u = u * jax.nn.sigmoid(u)                                 # SiLU, (M, d_inner)

    # ---------------- x_proj / dt_proj ----------------------------------------
    # B and C are produced directly in scan layout (d_state on sublanes) by a
    # single transposed matmul; dt uses the low-rank pair of matmuls on the MXU.
    uT = u.astype(mxu_dtype).T                                # (d_inner, M)
    bct = jnp.dot(w_bc_ref[...].astype(mxu_dtype), uT,
                  preferred_element_type=jnp.float32)         # (2*d_state, M)
    dt_low = jnp.dot(u.astype(mxu_dtype), w_dtin_ref[...].astype(mxu_dtype),
                     preferred_element_type=jnp.float32)      # (M, dt_pad)
    dt = jnp.dot(dt_low.astype(mxu_dtype), w_dt_ref[...].astype(mxu_dtype),
                 preferred_element_type=jnp.float32)          # (M, d_inner)
    delta = jax.nn.softplus(dt + vec_ref[1:2, :])             # (M, d_inner)
    du = delta * u

    delta_ref[...] = delta
    du_ref[...] = du
    # Relayout B/C once (outside the recurrence) into per-timestep column blocks.
    for l in range(L):
        bct_ref[l] = bct[:, l * TB:(l + 1) * TB]              # (2*d_state, TB)

    A_t = -jnp.exp(a_log_t_ref[...])                          # (d_state, d_inner)

    # ---------------- hoist exp off the recurrence ----------------------------
    def _precompute_dA(l, carry):
        for b in range(TB):
            m = l * TB + b
            drow = delta_ref[pl.ds(m, 1), :]                  # (1, d_inner)
            dA_ref[pl.ds(m, 1)] = jnp.exp(A_t * drow)[None]   # (1, d_state, d_inner)
        return carry

    lax.fori_loop(0, L, _precompute_dA, 0)

    # ---------------- selective scan ------------------------------------------
    # h has d_inner on lanes; per-step y rows are lane-dense stores.
    # TODO(synk): for production-sized L, chunk dA over L to bound the scratch.
    h_ref[...] = jnp.zeros((TB, d_state, d_inner), jnp.float32)

    def _scan_step(l, carry):
        bc_blk = bct_ref[l]                                   # (2*d_state, TB)
        rows = []
        for b in range(TB):
            m = l * TB + b
            b_col = bc_blk[:d_state, b:b + 1]                 # (d_state, 1)
            c_col = bc_blk[d_state:, b:b + 1]                 # (d_state, 1)
            du_row = du_ref[pl.ds(m, 1), :]                   # (1, d_inner)
            dA = dA_ref[m]                                    # (d_state, d_inner)
            h_new = dA * h_ref[b] + b_col * du_row            # (d_state, d_inner)
            h_ref[b] = h_new
            rows.append(jnp.sum(h_new * c_col, axis=0, keepdims=True))  # (1, d_inner)
        ys_ref[pl.ds(l * TB, TB), :] = jnp.concatenate(rows, axis=0)
        return carry

    lax.fori_loop(0, L, _scan_step, 0)

    # ---------------- skip, gate, out_proj ------------------------------------
    y = ys_ref[...] + u * vec_ref[2:3, :]                     # D * u skip
    y = y * (z * jax.nn.sigmoid(z))                           # gate with SiLU(z)
    out = jnp.dot(y.astype(mxu_dtype), w_out_ref[...].astype(mxu_dtype),
                  preferred_element_type=jnp.float32)         # (M, C)
    o_ref[...] = out.reshape(L, TB, C).astype(o_ref.dtype)


def mamba_layer_forward(x, params, *, d_state, d_conv, expand,
                        mxu_dtype=jnp.float32):
    # Note: on v6e/v7x set mxu_dtype=jnp.bfloat16 to use the bf16 MXU path;
    # keep f32 on v5e (no bf16 VPU/EUP) and for bit-tight validation.
    B, L, C = x.shape
    d_inner = expand * C
    dt_rank = math.ceil(C / 16)
    dt_pad = max(8, ((dt_rank + 7) // 8) * 8)

    TB = _pick_tb(B, L)
    assert B % TB == 0
    M = L * TB

    # ----- parameter plumbing (plain JAX glue): fuse / transpose / pad --------
    ln_wb = jnp.stack([params["ln_w"], params["ln_b"]], axis=0)            # (2, C)
    w_in_t = params["in_proj_w"].T                                         # (C, 2*d_inner)
    conv_w = params["conv_w"][:, 0, :].T                                   # (d_conv, d_inner)
    vec3 = jnp.stack([params["conv_b"], params["dt_proj_b"], params["D"]],
                     axis=0)                                               # (3, d_inner)
    w_xp = params["x_proj_w"]                                              # (dt_rank+2*d_state, d_inner)
    w_dtin_t = jnp.zeros((d_inner, dt_pad), jnp.float32).at[:, :dt_rank].set(
        w_xp[:dt_rank].T)                                                  # (d_inner, dt_pad)
    w_dt_t = jnp.zeros((dt_pad, d_inner), jnp.float32).at[:dt_rank, :].set(
        params["dt_proj_w"].T)                                             # (dt_pad, d_inner)
    w_bc = w_xp[dt_rank:]                                                  # (2*d_state, d_inner)
    a_log_t = params["A_log"].T                                            # (d_state, d_inner)
    w_out_t = params["out_proj_w"].T                                       # (d_inner, C)

    weights = [ln_wb, w_in_t, conv_w, vec3, w_dtin_t, w_dt_t, w_bc,
               a_log_t, w_out_t]

    # l-major layout so TB batch rows per timestep are contiguous in the block.
    x_t = jnp.transpose(x, (1, 0, 2))                                      # (L, B, C)

    def wspec(arr):
        nd = arr.ndim
        return pl.BlockSpec(arr.shape, lambda g, _nd=nd: (0,) * _nd)

    kernel = functools.partial(
        _mamba_layer_kernel, L=L, TB=TB, C=C, d_inner=d_inner,
        d_state=d_state, d_conv=d_conv, dt_pad=dt_pad, mxu_dtype=mxu_dtype)

    out_lbc = pl.pallas_call(
        kernel,
        out_shape=jax.ShapeDtypeStruct((L, B, C), x.dtype),
        grid_spec=pltpu.PrefetchScalarGridSpec(
            num_scalar_prefetch=0,
            grid=(B // TB,),
            in_specs=[pl.BlockSpec((L, TB, C), lambda g: (0, g, 0))]
                     + [wspec(w) for w in weights],
            out_specs=pl.BlockSpec((L, TB, C), lambda g: (0, g, 0)),
            scratch_shapes=[
                pltpu.VMEM((M, d_inner), jnp.float32),            # delta
                pltpu.VMEM((M, d_inner), jnp.float32),            # delta * u
                pltpu.VMEM((L, 2 * d_state, TB), jnp.float32),    # B/C (scan layout)
                pltpu.VMEM((M, d_state, d_inner), jnp.float32),   # dA (hoisted exp)
                pltpu.VMEM((TB, d_state, d_inner), jnp.float32),  # h state
                pltpu.VMEM((M, d_inner), jnp.float32),            # y rows
            ],
        ),
        compiler_params=pltpu.CompilerParams(
            dimension_semantics=("parallel",),
            vmem_limit_bytes=32 * 1024 * 1024),
    )(x_t, *weights)

    return jnp.transpose(out_lbc, (1, 0, 2))                              # (B, L, C)


def init_params(key, dim, d_state, d_conv, expand):
    """Deterministic synthetic parameters matching the module's shapes."""
    d_inner = expand * dim
    dt_rank = math.ceil(dim / 16)
    ks = jax.random.split(key, 6)
    s = 0.1
    return {
        "ln_w": jnp.ones((dim,), jnp.float32),
        "ln_b": jnp.zeros((dim,), jnp.float32),
        "in_proj_w": s * jax.random.normal(ks[0], (2 * d_inner, dim), jnp.float32),
        "conv_w": s * jax.random.normal(ks[1], (d_inner, 1, d_conv), jnp.float32),
        "conv_b": s * jax.random.normal(ks[2], (d_inner,), jnp.float32),
        "x_proj_w": s * jax.random.normal(ks[3], (dt_rank + 2 * d_state, d_inner), jnp.float32),
        "dt_proj_w": s * jax.random.normal(ks[4], (d_inner, dt_rank), jnp.float32),
        "dt_proj_b": jnp.full((d_inner,), float(math.log(math.expm1(0.01))), jnp.float32),
        "A_log": jnp.log(jnp.broadcast_to(
            jnp.arange(1, d_state + 1, dtype=jnp.float32), (d_inner, d_state))),
        "D": jnp.ones((d_inner,), jnp.float32),
        "out_proj_w": s * jax.random.normal(ks[5], (dim, d_inner), jnp.float32),
    }


def mamba_layer_ref(x, params, *, d_state, d_conv, expand):
    """Pure-JAX reference with identical semantics (for validation)."""
    B, L, C = x.shape
    d_inner = expand * C
    dt_rank = math.ceil(C / 16)
    mean = x.mean(-1, keepdims=True)
    var = ((x - mean) ** 2).mean(-1, keepdims=True)
    xn = (x - mean) / jnp.sqrt(var + 1e-5) * params["ln_w"] + params["ln_b"]
    xz = xn @ params["in_proj_w"].T
    xp, z = xz[..., :d_inner], xz[..., d_inner:]
    w = params["conv_w"][:, 0, :]                       # (d_inner, d_conv)
    xpad = jnp.pad(xp, ((0, 0), (d_conv - 1, 0), (0, 0)))
    u = sum(xpad[:, k:k + L, :] * w[:, k] for k in range(d_conv)) + params["conv_b"]
    u = u * jax.nn.sigmoid(u)
    x_dbl = u @ params["x_proj_w"].T
    dt_low = x_dbl[..., :dt_rank]
    Bm = x_dbl[..., dt_rank:dt_rank + d_state]
    Cm = x_dbl[..., dt_rank + d_state:]
    dt = dt_low @ params["dt_proj_w"].T
    delta = jax.nn.softplus(dt + params["dt_proj_b"])
    A = -jnp.exp(params["A_log"])
    dA = jnp.exp(delta[..., None] * A)                  # (B, L, d_inner, d_state)
    dBu = (delta * u)[..., None] * Bm[:, :, None, :]
    h = jnp.zeros((B, d_inner, d_state), jnp.float32)
    ys = []
    for l in range(L):
        h = dA[:, l] * h + dBu[:, l]
        ys.append(jnp.einsum("bdn,bn->bd", h, Cm[:, l]))
    y = jnp.stack(ys, axis=1)                           # (B, L, d_inner)
    y = y + u * params["D"]
    y = y * (z * jax.nn.sigmoid(z))
    return y @ params["out_proj_w"].T


if __name__ == "__main__":
    dim, d_state, d_conv, expand = 16, 64, 4, 2          # MambaLayer(dim=16) defaults
    B, L = 16, 16                                        # TB=8 -> M=128, grid=(2,)

    key = jax.random.PRNGKey(0)
    kx, kp = jax.random.split(key)
    x = jax.random.normal(kx, (B, L, dim), jnp.float32)
    params = init_params(kp, dim, d_state, d_conv, expand)

    out = mamba_layer_forward(x, params, d_state=d_state, d_conv=d_conv, expand=expand)
    out = jax.block_until_ready(out)

    ref = mamba_layer_ref(x, params, d_state=d_state, d_conv=d_conv, expand=expand)
    assert out.shape == (B, L, dim)
    max_err = float(jnp.max(jnp.abs(out - ref)))
    assert jnp.allclose(out, ref, atol=1e-2, rtol=1e-2), max_err

    print("KERNEL_OK")
</pallas_src>

<mosaic_0001>
module attributes {stable_mosaic.version = 11 : i64} {
  func.func @_mamba_layer_kernel(%arg0: i32, %arg1: memref<16x8x16xf32, #tpu.memory_space<vmem>>, %arg2: memref<2x16xf32, #tpu.memory_space<vmem>>, %arg3: memref<16x64xf32, #tpu.memory_space<vmem>>, %arg4: memref<4x32xf32, #tpu.memory_space<vmem>>, %arg5: memref<3x32xf32, #tpu.memory_space<vmem>>, %arg6: memref<32x8xf32, #tpu.memory_space<vmem>>, %arg7: memref<8x32xf32, #tpu.memory_space<vmem>>, %arg8: memref<128x32xf32, #tpu.memory_space<vmem>>, %arg9: memref<64x32xf32, #tpu.memory_space<vmem>>, %arg10: memref<32x16xf32, #tpu.memory_space<vmem>>, %arg11: memref<16x8x16xf32, #tpu.memory_space<vmem>>, %arg12: memref<128x32xf32, #tpu.memory_space<vmem>>, %arg13: memref<128x32xf32, #tpu.memory_space<vmem>>, %arg14: memref<16x128x8xf32, #tpu.memory_space<vmem>>, %arg15: memref<128x64x32xf32, #tpu.memory_space<vmem>>, %arg16: memref<8x64x32xf32, #tpu.memory_space<vmem>>, %arg17: memref<128x32xf32, #tpu.memory_space<vmem>>) attributes {dimension_semantics = [#tpu.dimension_semantics<parallel>], iteration_bounds = array<i64: 2>, scalar_prefetch = 0 : i64, scratch_operands = 6 : i64, tpu.core_type = #tpu.core_type<tc>, window_params = [{transform_indices = @transform_0, window_bounds = array<i64: 16, 8, 16>}, {pipeline_mode = #tpu.pipeline_mode<synchronous>, transform_indices = @transform_1, window_bounds = array<i64: 2, 16>}, {pipeline_mode = #tpu.pipeline_mode<synchronous>, transform_indices = @transform_2, window_bounds = array<i64: 16, 64>}, {pipeline_mode = #tpu.pipeline_mode<synchronous>, transform_indices = @transform_3, window_bounds = array<i64: 4, 32>}, {pipeline_mode = #tpu.pipeline_mode<synchronous>, transform_indices = @transform_4, window_bounds = array<i64: 3, 32>}, {pipeline_mode = #tpu.pipeline_mode<synchronous>, transform_indices = @transform_5, window_bounds = array<i64: 32, 8>}, {pipeline_mode = #tpu.pipeline_mode<synchronous>, transform_indices = @transform_6, window_bounds = array<i64: 8, 32>}, {pipeline_mode = #tpu.pipeline_mode<synchronous>, transform_indices = @transform_7, window_bounds = array<i64: 128, 32>}, {pipeline_mode = #tpu.pipeline_mode<synchronous>, transform_indices = @transform_8, window_bounds = array<i64: 64, 32>}, {pipeline_mode = #tpu.pipeline_mode<synchronous>, transform_indices = @transform_9, window_bounds = array<i64: 32, 16>}, {transform_indices = @transform_10, window_bounds = array<i64: 16, 8, 16>}]} {
    %c0 = arith.constant 0 : index
    %c0_0 = arith.constant 0 : index
    %c0_1 = arith.constant 0 : index
    %0 = vector.load %arg1[%c0, %c0_0, %c0_1] : memref<16x8x16xf32, #tpu.memory_space<vmem>>, vector<16x8x16xf32>
    %1 = vector.shape_cast %0 : vector<16x8x16xf32> to vector<128x16xf32>
    %cst = arith.constant dense<0.000000e+00> : vector<128xf32>
    %2 = vector.multi_reduction <add>, %1, %cst [1] : vector<128x16xf32> to vector<128xf32>
    %3 = vector.shape_cast %2 : vector<128xf32> to vector<128x1xf32>
    %cst_2 = arith.constant 1.600000e+01 : f32
    %4 = vector.broadcast %cst_2 : f32 to vector<128x1xf32>
    %5 = arith.divf %3, %4 : vector<128x1xf32>
    %6 = vector.broadcast %5 : vector<128x1xf32> to vector<128x16xf32>
    %7 = arith.subf %1, %6 : vector<128x16xf32>
    %8 = arith.mulf %7, %7 : vector<128x16xf32>
    %cst_3 = arith.constant dense<0.000000e+00> : vector<128xf32>
    %9 = vector.multi_reduction <add>, %8, %cst_3 [1] : vector<128x16xf32> to vector<128xf32>
    %10 = vector.shape_cast %9 : vector<128xf32> to vector<128x1xf32>
    %cst_4 = arith.constant 1.600000e+01 : f32
    %11 = vector.broadcast %cst_4 : f32 to vector<128x1xf32>
    %12 = arith.divf %10, %11 : vector<128x1xf32>
    %cst_5 = arith.constant 9.99999974E-6 : f32
    %13 = vector.broadcast %cst_5 : f32 to vector<128x1xf32>
    %14 = arith.addf %12, %13 : vector<128x1xf32>
    %15 = math.rsqrt %14 : vector<128x1xf32>
    %16 = vector.broadcast %15 : vector<128x1xf32> to vector<128x16xf32>
    %17 = arith.mulf %7, %16 : vector<128x16xf32>
    %c0_6 = arith.constant 0 : index
    %c0_7 = arith.constant 0 : index
    %18 = vector.load %arg2[%c0_6, %c0_7] : memref<2x16xf32, #tpu.memory_space<vmem>>, vector<1x16xf32>
    %19 = vector.broadcast %18 : vector<1x16xf32> to vector<128x16xf32>
    %20 = arith.mulf %17, %19 : vector<128x16xf32>
    %c1 = arith.constant 1 : index
    %c0_8 = arith.constant 0 : index
    %21 = vector.load %arg2[%c1, %c0_8] : memref<2x16xf32, #tpu.memory_space<vmem>>, vector<1x16xf32>
    %22 = vector.broadcast %21 : vector<1x16xf32> to vector<128x16xf32>
    %23 = arith.addf %20, %22 : vector<128x16xf32>
    %c0_9 = arith.constant 0 : index
    %c0_10 = arith.constant 0 : index
    %24 = vector.load %arg3[%c0_9, %c0_10] : memref<16x64xf32, #tpu.memory_space<vmem>>, vector<16x64xf32>
    %cst_11 = arith.constant dense<0.000000e+00> : vector<128x64xf32>
    %25 = tpu.matmul %23, %24, %cst_11 {dimension_numbers = #tpu.dot_dimension_numbers<[1], [0], [0], [1], [0, 0, 1, 1], [], []>} : vector<128x16xf32>, vector<16x64xf32>, vector<128x64xf32> -> vector<128x64xf32>
    %26 = vector.extract_strided_slice %25 {offsets = [0, 0], sizes = [128, 32], strides = [1, 1]} : vector<128x64xf32> to vector<128x32xf32>
    %27 = vector.extract_strided_slice %25 {offsets = [0, 32], sizes = [128, 32], strides = [1, 1]} : vector<128x64xf32> to vector<128x32xf32>
    %c3 = arith.constant 3 : index
    %c0_12 = arith.constant 0 : index
    %28 = vector.load %arg4[%c3, %c0_12] : memref<4x32xf32, #tpu.memory_space<vmem>>, vector<1x32xf32>
    %29 = vector.broadcast %28 : vector<1x32xf32> to vector<128x32xf32>
    %30 = arith.mulf %26, %29 : vector<128x32xf32>
    %cst_13 = arith.constant 0.000000e+00 : f32
    %31 = vector.broadcast %cst_13 : f32 to vector<8x32xf32>
    %32 = vector.extract_strided_slice %26 {offsets = [0, 0], sizes = [120, 32], strides = [1, 1]} : vector<128x32xf32> to vector<120x32xf32>
    %33 = tpu.concatenate %31, %32 in 0 : vector<8x32xf32>, vector<120x32xf32> -> vector<128x32xf32>
    %c2 = arith.constant 2 : index
    %c0_14 = arith.constant 0 : index
    %34 = vector.load %arg4[%c2, %c0_14] : memref<4x32xf32, #tpu.memory_space<vmem>>, vector<1x32xf32>
    %35 = vector.broadcast %34 : vector<1x32xf32> to vector<128x32xf32>
    %36 = arith.mulf %33, %35 : vector<128x32xf32>
    %37 = arith.addf %30, %36 : vector<128x32xf32>
    %cst_15 = arith.constant 0.000000e+00 : f32
    %38 = vector.broadcast %cst_15 : f32 to vector<16x32xf32>
    %39 = vector.extract_strided_slice %26 {offsets = [0, 0], sizes = [112, 32], strides = [1, 1]} : vector<128x32xf32> to vector<112x32xf32>
    %40 = tpu.concatenate %38, %39 in 0 : vector<16x32xf32>, vector<112x32xf32> -> vector<128x32xf32>
    %c1_16 = arith.constant 1 : index
    %c0_17 = arith.constant 0 : index
    %41 = vector.load %arg4[%c1_16, %c0_17] : memref<4x32xf32, #tpu.memory_space<vmem>>, vector<1x32xf32>
    %42 = vector.broadcast %41 : vector<1x32xf32> to vector<128x32xf32>
    %43 = arith.mulf %40, %42 : vector<128x32xf32>
    %44 = arith.addf %37, %43 : vector<128x32xf32>
    %cst_18 = arith.constant 0.000000e+00 : f32
    %45 = vector.broadcast %cst_18 : f32 to vector<24x32xf32>
    %46 = vector.extract_strided_slice %26 {offsets = [0, 0], sizes = [104, 32], strides = [1, 1]} : vector<128x32xf32> to vector<104x32xf32>
    %47 = tpu.concatenate %45, %46 in 0 : vector<24x32xf32>, vector<104x32xf32> -> vector<128x32xf32>
    %c0_19 = arith.constant 0 : index
    %c0_20 = arith.constant 0 : index
    %48 = vector.load %arg4[%c0_19, %c0_20] : memref<4x32xf32, #tpu.memory_space<vmem>>, vector<1x32xf32>
    %49 = vector.broadcast %48 : vector<1x32xf32> to vector<128x32xf32>
    %50 = arith.mulf %47, %49 : vector<128x32xf32>
    %51 = arith.addf %44, %50 : vector<128x32xf32>
    %c0_21 = arith.constant 0 : index
    %c0_22 = arith.constant 0 : index
    %52 = vector.load %arg5[%c0_21, %c0_22] : memref<3x32xf32, #tpu.memory_space<vmem>>, vector<1x32xf32>
    %53 = vector.broadcast %52 : vector<1x32xf32> to vector<128x32xf32>
    %54 = arith.addf %51, %53 : vector<128x32xf32>
    %55 = arith.negf %54 : vector<128x32xf32>
    %56 = math.exp %55 : vector<128x32xf32>
    %cst_23 = arith.constant 1.000000e+00 : f32
    %57 = vector.broadcast %cst_23 : f32 to vector<128x32xf32>
    %58 = arith.addf %57, %56 : vector<128x32xf32>
    %59 = arith.divf %57, %58 : vector<128x32xf32>
    %60 = arith.mulf %54, %59 : vector<128x32xf32>
    %61 = tpu.transpose %60, [1, 0] : vector<128x32xf32> -> vector<32x128xf32>
    %c0_24 = arith.constant 0 : index
    %c0_25 = arith.constant 0 : index
    %62 = vector.load %arg8[%c0_24, %c0_25] : memref<128x32xf32, #tpu.memory_space<vmem>>, vector<128x32xf32>
    %cst_26 = arith.constant dense<0.000000e+00> : vector<128x128xf32>
    %63 = tpu.matmul %62, %61, %cst_26 {dimension_numbers = #tpu.dot_dimension_numbers<[1], [0], [0], [1], [0, 0, 1, 1], [], []>} : vector<128x32xf32>, vector<32x128xf32>, vector<128x128xf32> -> vector<128x128xf32>
    %c0_27 = arith.constant 0 : index
    %c0_28 = arith.constant 0 : index
    %64 = vector.load %arg6[%c0_27, %c0_28] : memref<32x8xf32, #tpu.memory_space<vmem>>, vector<32x8xf32>
    %cst_29 = arith.constant dense<0.000000e+00> : vector<128x8xf32>
    %65 = tpu.matmul %60, %64, %cst_29 {dimension_numbers = #tpu.dot_dimension_numbers<[1], [0], [0], [1], [0, 0, 1, 1], [], []>} : vector<128x32xf32>, vector<32x8xf32>, vector<128x8xf32> -> vector<128x8xf32>
    %c0_30 = arith.constant 0 : index
    %c0_31 = arith.constant 0 : index
    %66 = vector.load %arg7[%c0_30, %c0_31] : memref<8x32xf32, #tpu.memory_space<vmem>>, vector<8x32xf32>
    %cst_32 = arith.constant dense<0.000000e+00> : vector<128x32xf32>
    %67 = tpu.matmul %65, %66, %cst_32 {dimension_numbers = #tpu.dot_dimension_numbers<[1], [0], [0], [1], [0, 0, 1, 1], [], []>} : vector<128x8xf32>, vector<8x32xf32>, vector<128x32xf32> -> vector<128x32xf32>
    %c1_33 = arith.constant 1 : index
    %c0_34 = arith.constant 0 : index
    %68 = vector.load %arg5[%c1_33, %c0_34] : memref<3x32xf32, #tpu.memory_space<vmem>>, vector<1x32xf32>
    %69 = vector.broadcast %68 : vector<1x32xf32> to vector<128x32xf32>
    %70 = arith.addf %67, %69 : vector<128x32xf32>
    %cst_35 = arith.constant 0.000000e+00 : f32
    %71 = vector.broadcast %cst_35 : f32 to vector<128x32xf32>
    %72 = arith.maximumf %70, %71 : vector<128x32xf32>
    %73 = vector.broadcast %cst_35 : f32 to vector<128x32xf32>
    %74 = arith.subf %70, %73 : vector<128x32xf32>
    %75 = arith.cmpf one, %74, %74 : vector<128x32xf32>
    %76 = vector.broadcast %cst_35 : f32 to vector<128x32xf32>
    %77 = arith.addf %70, %76 : vector<128x32xf32>
    %78 = math.absf %74 : vector<128x32xf32>
    %cst_36 = arith.constant 0.000000e+00 : f32
    %79 = vector.broadcast %cst_36 : f32 to vector<128x32xf32>
    %80 = arith.subf %79, %78 : vector<128x32xf32>
    %81 = math.exp %80 : vector<128x32xf32>
    %82 = math.log1p %81 : vector<128x32xf32>
    %83 = arith.addf %72, %82 : vector<128x32xf32>
    %84 = arith.select %75, %77, %83 : vector<128x32xi1>, vector<128x32xf32>
    %85 = arith.mulf %84, %60 : vector<128x32xf32>
    %c0_37 = arith.constant 0 : index
    %c0_38 = arith.constant 0 : index
    %86 = vector.load %arg12[%c0_37, %c0_38] : memref<128x32xf32, #tpu.memory_space<vmem>>, vector<128x32xf32>
    tpu.vector_store %arg12[%c0_37, %c0_38], %84 {strides = array<i32>} : memref<128x32xf32, #tpu.memory_space<vmem>>, vector<128x32xf32>,
    %c0_39 = arith.constant 0 : index
    %c0_40 = arith.constant 0 : index
    %87 = vector.load %arg13[%c0_39, %c0_40] : memref<128x32xf32, #tpu.memory_space<vmem>>, vector<128x32xf32>
    tpu.vector_store %arg13[%c0_39, %c0_40], %85 {strides = array<i32>} : memref<128x32xf32, #tpu.memory_space<vmem>>, vector<128x32xf32>,
    %88 = vector.extract_strided_slice %63 {offsets = [0, 0], sizes = [128, 8], strides = [1, 1]} : vector<128x128xf32> to vector<128x8xf32>
    %c0_41 = arith.constant 0 : index
    %c0_42 = arith.constant 0 : index
    %c0_43 = arith.constant 0 : index
    %89 = vector.load %arg14[%c0_41, %c0_42, %c0_43] : memref<16x128x8xf32, #tpu.memory_space<vmem>>, vector<1x128x8xf32>
    %90 = vector.shape_cast %89 : vector<1x128x8xf32> to vector<128x8xf32>
    %91 = vector.shape_cast %88 : vector<128x8xf32> to vector<1x128x8xf32>
    tpu.vector_store %arg14[%c0_41, %c0_42, %c0_43], %91 {strides = array<i32>} : memref<16x128x8xf32, #tpu.memory_space<vmem>>, vector<1x128x8xf32>,
    %92 = vector.extract_strided_slice %63 {offsets = [0, 8], sizes = [128, 8], strides = [1, 1]} : vector<128x128xf32> to vector<128x8xf32>
    %c1_44 = arith.constant 1 : index
    %c0_45 = arith.constant 0 : index
    %c0_46 = arith.constant 0 : index
    %93 = vector.load %arg14[%c1_44, %c0_45, %c0_46] : memref<16x128x8xf32, #tpu.memory_space<vmem>>, vector<1x128x8xf32>
    %94 = vector.shape_cast %93 : vector<1x128x8xf32> to vector<128x8xf32>
    %95 = vector.shape_cast %92 : vector<128x8xf32> to vector<1x128x8xf32>
    tpu.vector_store %arg14[%c1_44, %c0_45, %c0_46], %95 {strides = array<i32>} : memref<16x128x8xf32, #tpu.memory_space<vmem>>, vector<1x128x8xf32>,
    %96 = vector.extract_strided_slice %63 {offsets = [0, 16], sizes = [128, 8], strides = [1, 1]} : vector<128x128xf32> to vector<128x8xf32>
    %c2_47 = arith.constant 2 : index
    %c0_48 = arith.constant 0 : index
    %c0_49 = arith.constant 0 : index
    %97 = vector.load %arg14[%c2_47, %c0_48, %c0_49] : memref<16x128x8xf32, #tpu.memory_space<vmem>>, vector<1x128x8xf32>
    %98 = vector.shape_cast %97 : vector<1x128x8xf32> to vector<128x8xf32>
    %99 = vector.shape_cast %96 : vector<128x8xf32> to vector<1x128x8xf32>
    tpu.vector_store %arg14[%c2_47, %c0_48, %c0_49], %99 {strides = array<i32>} : memref<16x128x8xf32, #tpu.memory_space<vmem>>, vector<1x128x8xf32>,
    %100 = vector.extract_strided_slice %63 {offsets = [0, 24], sizes = [128, 8], strides = [1, 1]} : vector<128x128xf32> to vector<128x8xf32>
    %c3_50 = arith.constant 3 : index
    %c0_51 = arith.constant 0 : index
    %c0_52 = arith.constant 0 : index
    %101 = vector.load %arg14[%c3_50, %c0_51, %c0_52] : memref<16x128x8xf32, #tpu.memory_space<vmem>>, vector<1x128x8xf32>
    %102 = vector.shape_cast %101 : vector<1x128x8xf32> to vector<128x8xf32>
    %103 = vector.shape_cast %100 : vector<128x8xf32> to vector<1x128x8xf32>
    tpu.vector_store %arg14[%c3_50, %c0_51, %c0_52], %103 {strides = array<i32>} : memref<16x128x8xf32, #tpu.memory_space<vmem>>, vector<1x128x8xf32>,
    %104 = vector.extract_strided_slice %63 {offsets = [0, 32], sizes = [128, 8], strides = [1, 1]} : vector<128x128xf32> to vector<128x8xf32>
    %c4 = arith.constant 4 : index
    %c0_53 = arith.constant 0 : index
    %c0_54 = arith.constant 0 : index
    %105 = vector.load %arg14[%c4, %c0_53, %c0_54] : memref<16x128x8xf32, #tpu.memory_space<vmem>>, vector<1x128x8xf32>
    %106 = vector.shape_cast %105 : vector<1x128x8xf32> to vector<128x8xf32>
    %107 = vector.shape_cast %104 : vector<128x8xf32> to vector<1x128x8xf32>
    tpu.vector_store %arg14[%c4, %c0_53, %c0_54], %107 {strides = array<i32>} : memref<16x128x8xf32, #tpu.memory_space<vmem>>, vector<1x128x8xf32>,
    %108 = vector.extract_strided_slice %63 {offsets = [0, 40], sizes = [128, 8], strides = [1, 1]} : vector<128x128xf32> to vector<128x8xf32>
    %c5 = arith.constant 5 : index
    %c0_55 = arith.constant 0 : index
    %c0_56 = arith.constant 0 : index
    %109 = vector.load %arg14[%c5, %c0_55, %c0_56] : memref<16x128x8xf32, #tpu.memory_space<vmem>>, vector<1x128x8xf32>
    %110 = vector.shape_cast %109 : vector<1x128x8xf32> to vector<128x8xf32>
    %111 = vector.shape_cast %108 : vector<128x8xf32> to vector<1x128x8xf32>
    tpu.vector_store %arg14[%c5, %c0_55, %c0_56], %111 {strides = array<i32>} : memref<16x128x8xf32, #tpu.memory_space<vmem>>, vector<1x128x8xf32>,
    %112 = vector.extract_strided_slice %63 {offsets = [0, 48], sizes = [128, 8], strides = [1, 1]} : vector<128x128xf32> to vector<128x8xf32>
    %c6 = arith.constant 6 : index
    %c0_57 = arith.constant 0 : index
    %c0_58 = arith.constant 0 : index
    %113 = vector.load %arg14[%c6, %c0_57, %c0_58] : memref<16x128x8xf32, #tpu.memory_space<vmem>>, vector<1x128x8xf32>
    %114 = vector.shape_cast %113 : vector<1x128x8xf32> to vector<128x8xf32>
    %115 = vector.shape_cast %112 : vector<128x8xf32> to vector<1x128x8xf32>
    tpu.vector_store %arg14[%c6, %c0_57, %c0_58], %115 {strides = array<i32>} : memref<16x128x8xf32, #tpu.memory_space<vmem>>, vector<1x128x8xf32>,
    %116 = vector.extract_strided_slice %63 {offsets = [0, 56], sizes = [128, 8], strides = [1, 1]} : vector<128x128xf32> to vector<128x8xf32>
    %c7 = arith.constant 7 : index
    %c0_59 = arith.constant 0 : index
    %c0_60 = arith.constant 0 : index
    %117 = vector.load %arg14[%c7, %c0_59, %c0_60] : memref<16x128x8xf32, #tpu.memory_space<vmem>>, vector<1x128x8xf32>
    %118 = vector.shape_cast %117 : vector<1x128x8xf32> to vector<128x8xf32>
    %119 = vector.shape_cast %116 : vector<128x8xf32> to vector<1x128x8xf32>
    tpu.vector_store %arg14[%c7, %c0_59, %c0_60], %119 {strides = array<i32>} : memref<16x128x8xf32, #tpu.memory_space<vmem>>, vector<1x128x8xf32>,
    %120 = vector.extract_strided_slice %63 {offsets = [0, 64], sizes = [128, 8], strides = [1, 1]} : vector<128x128xf32> to vector<128x8xf32>
    %c8 = arith.constant 8 : index
    %c0_61 = arith.constant 0 : index
    %c0_62 = arith.constant 0 : index
    %121 = vector.load %arg14[%c8, %c0_61, %c0_62] : memref<16x128x8xf32, #tpu.memory_space<vmem>>, vector<1x128x8xf32>
    %122 = vector.shape_cast %121 : vector<1x128x8xf32> to vector<128x8xf32>
    %123 = vector.shape_cast %120 : vector<128x8xf32> to vector<1x128x8xf32>
    tpu.vector_store %arg14[%c8, %c0_61, %c0_62], %123 {strides = array<i32>} : memref<16x128x8xf32, #tpu.memory_space<vmem>>, vector<1x128x8xf32>,
    %124 = vector.extract_strided_slice %63 {offsets = [0, 72], sizes = [128, 8], strides = [1, 1]} : vector<128x128xf32> to vector<128x8xf32>
    %c9 = arith.constant 9 : index
    %c0_63 = arith.constant 0 : index
    %c0_64 = arith.constant 0 : index
    %125 = vector.load %arg14[%c9, %c0_63, %c0_64] : memref<16x128x8xf32, #tpu.memory_space<vmem>>, vector<1x128x8xf32>
    %126 = vector.shape_cast %125 : vector<1x128x8xf32> to vector<128x8xf32>
    %127 = vector.shape_cast %124 : vector<128x8xf32> to vector<1x128x8xf32>
    tpu.vector_store %arg14[%c9, %c0_63, %c0_64], %127 {strides = array<i32>} : memref<16x128x8xf32, #tpu.memory_space<vmem>>, vector<1x128x8xf32>,
    %128 = vector.extract_strided_slice %63 {offsets = [0, 80], sizes = [128, 8], strides = [1, 1]} : vector<128x128xf32> to vector<128x8xf32>
    %c10 = arith.constant 10 : index
    %c0_65 = arith.constant 0 : index
    %c0_66 = arith.constant 0 : index
    %129 = vector.load %arg14[%c10, %c0_65, %c0_66] : memref<16x128x8xf32, #tpu.memory_space<vmem>>, vector<1x128x8xf32>
    %130 = vector.shape_cast %129 : vector<1x128x8xf32> to vector<128x8xf32>
    %131 = vector.shape_cast %128 : vector<128x8xf32> to vector<1x128x8xf32>
    tpu.vector_store %arg14[%c10, %c0_65, %c0_66], %131 {strides = array<i32>} : memref<16x128x8xf32, #tpu.memory_space<vmem>>, vector<1x128x8xf32>,
    %132 = vector.extract_strided_slice %63 {offsets = [0, 88], sizes = [128, 8], strides = [1, 1]} : vector<128x128xf32> to vector<128x8xf32>
    %c11 = arith.constant 11 : index
    %c0_67 = arith.constant 0 : index
    %c0_68 = arith.constant 0 : index
    %133 = vector.load %arg14[%c11, %c0_67, %c0_68] : memref<16x128x8xf32, #tpu.memory_space<vmem>>, vector<1x128x8xf32>
    %134 = vector.shape_cast %133 : vector<1x128x8xf32> to vector<128x8xf32>
    %135 = vector.shape_cast %132 : vector<128x8xf32> to vector<1x128x8xf32>
    tpu.vector_store %arg14[%c11, %c0_67, %c0_68], %135 {strides = array<i32>} : memref<16x128x8xf32, #tpu.memory_space<vmem>>, vector<1x128x8xf32>,
    %136 = vector.extract_strided_slice %63 {offsets = [0, 96], sizes = [128, 8], strides = [1, 1]} : vector<128x128xf32> to vector<128x8xf32>
    %c12 = arith.constant 12 : index
    %c0_69 = arith.constant 0 : index
    %c0_70 = arith.constant 0 : index
    %137 = vector.load %arg14[%c12, %c0_69, %c0_70] : memref<16x128x8xf32, #tpu.memory_space<vmem>>, vector<1x128x8xf32>
    %138 = vector.shape_cast %137 : vector<1x128x8xf32> to vector<128x8xf32>
    %139 = vector.shape_cast %136 : vector<128x8xf32> to vector<1x128x8xf32>
    tpu.vector_store %arg14[%c12, %c0_69, %c0_70], %139 {strides = array<i32>} : memref<16x128x8xf32, #tpu.memory_space<vmem>>, vector<1x128x8xf32>,
    %140 = vector.extract_strided_slice %63 {offsets = [0, 104], sizes = [128, 8], strides = [1, 1]} : vector<128x128xf32> to vector<128x8xf32>
    %c13 = arith.constant 13 : index
    %c0_71 = arith.constant 0 : index
    %c0_72 = arith.constant 0 : index
    %141 = vector.load %arg14[%c13, %c0_71, %c0_72] : memref<16x128x8xf32, #tpu.memory_space<vmem>>, vector<1x128x8xf32>
    %142 = vector.shape_cast %141 : vector<1x128x8xf32> to vector<128x8xf32>
    %143 = vector.shape_cast %140 : vector<128x8xf32> to vector<1x128x8xf32>
    tpu.vector_store %arg14[%c13, %c0_71, %c0_72], %143 {strides = array<i32>} : memref<16x128x8xf32, #tpu.memory_space<vmem>>, vector<1x128x8xf32>,
    %144 = vector.extract_strided_slice %63 {offsets = [0, 112], sizes = [128, 8], strides = [1, 1]} : vector<128x128xf32> to vector<128x8xf32>
    %c14 = arith.constant 14 : index
    %c0_73 = arith.constant 0 : index
    %c0_74 = arith.constant 0 : index
    %145 = vector.load %arg14[%c14, %c0_73, %c0_74] : memref<16x128x8xf32, #tpu.memory_space<vmem>>, vector<1x128x8xf32>
    %146 = vector.shape_cast %145 : vector<1x128x8xf32> to vector<128x8xf32>
    %147 = vector.shape_cast %144 : vector<128x8xf32> to vector<1x128x8xf32>
    tpu.vector_store %arg14[%c14, %c0_73, %c0_74], %147 {strides = array<i32>} : memref<16x128x8xf32, #tpu.memory_space<vmem>>, vector<1x128x8xf32>,
    %148 = vector.extract_strided_slice %63 {offsets = [0, 120], sizes = [128, 8], strides = [1, 1]} : vector<128x128xf32> to vector<128x8xf32>
    %c15 = arith.constant 15 : index
    %c0_75 = arith.constant 0 : index
    %c0_76 = arith.constant 0 : index
    %149 = vector.load %arg14[%c15, %c0_75, %c0_76] : memref<16x128x8xf32, #tpu.memory_space<vmem>>, vector<1x128x8xf32>
    %150 = vector.shape_cast %149 : vector<1x128x8xf32> to vector<128x8xf32>
    %151 = vector.shape_cast %148 : vector<128x8xf32> to vector<1x128x8xf32>
    tpu.vector_store %arg14[%c15, %c0_75, %c0_76], %151 {strides = array<i32>} : memref<16x128x8xf32, #tpu.memory_space<vmem>>, vector<1x128x8xf32>,
    %c0_77 = arith.constant 0 : index
    %c0_78 = arith.constant 0 : index
    %152 = vector.load %arg9[%c0_77, %c0_78] : memref<64x32xf32, #tpu.memory_space<vmem>>, vector<64x32xf32>
    %153 = math.exp %152 : vector<64x32xf32>
    %cst_79 = arith.constant 0.000000e+00 : f32
    %154 = vector.broadcast %cst_79 : f32 to vector<64x32xf32>
    %155 = arith.subf %154, %153 : vector<64x32xf32>
    %c0_i32 = arith.constant 0 : i32
    %c16_i32 = arith.constant 16 : i32
    %156 = arith.addi %c0_i32, %c16_i32 : i32
    %c1_i32 = arith.constant 1 : i32
    scf.for %arg18 = %c0_i32 to %156 step %c1_i32  : i32 {
      %c8_i32 = arith.constant 8 : i32
      %176 = arith.muli %arg18, %c8_i32 : i32
      %c0_i32_100 = arith.constant 0 : i32
      %177 = arith.addi %176, %c0_i32_100 : i32
      %178 = arith.index_cast %177 : i32 to index
      %c0_101 = arith.constant 0 : index
      %179 = vector.load %arg12[%178, %c0_101] : memref<128x32xf32, #tpu.memory_space<vmem>>, vector<1x32xf32>
      %180 = vector.broadcast %179 : vector<1x32xf32> to vector<64x32xf32>
      %181 = arith.mulf %155, %180 : vector<64x32xf32>
      %182 = math.exp %181 : vector<64x32xf32>
      %183 = vector.shape_cast %182 : vector<64x32xf32> to vector<1x64x32xf32>
      %184 = arith.index_cast %177 : i32 to index
      %c0_102 = arith.constant 0 : index
      %c0_103 = arith.constant 0 : index
      %185 = vector.load %arg15[%184, %c0_102, %c0_103] : memref<128x64x32xf32, #tpu.memory_space<vmem>>, vector<1x64x32xf32>
      tpu.vector_store %arg15[%184, %c0_102, %c0_103], %183 {strides = array<i32>} : memref<128x64x32xf32, #tpu.memory_space<vmem>>, vector<1x64x32xf32>,
      %c8_i32_104 = arith.constant 8 : i32
      %186 = arith.muli %arg18, %c8_i32_104 : i32
      %c1_i32_105 = arith.constant 1 : i32
      %187 = arith.addi %186, %c1_i32_105 : i32
      %188 = arith.index_cast %187 : i32 to index
      %c0_106 = arith.constant 0 : index
      %189 = vector.load %arg12[%188, %c0_106] : memref<128x32xf32, #tpu.memory_space<vmem>>, vector<1x32xf32>
      %190 = vector.broadcast %189 : vector<1x32xf32> to vector<64x32xf32>
      %191 = arith.mulf %155, %190 : vector<64x32xf32>
      %192 = math.exp %191 : vector<64x32xf32>
      %193 = vector.shape_cast %192 : vector<64x32xf32> to vector<1x64x32xf32>
      %194 = arith.index_cast %187 : i32 to index
      %c0_107 = arith.constant 0 : index
      %c0_108 = arith.constant 0 : index
      %195 = vector.load %arg15[%194, %c0_107, %c0_108] : memref<128x64x32xf32, #tpu.memory_space<vmem>>, vector<1x64x32xf32>
      tpu.vector_store %arg15[%194, %c0_107, %c0_108], %193 {strides = array<i32>} : memref<128x64x32xf32, #tpu.memory_space<vmem>>, vector<1x64x32xf32>,
      %c8_i32_109 = arith.constant 8 : i32
      %196 = arith.muli %arg18, %c8_i32_109 : i32
      %c2_i32 = arith.constant 2 : i32
      %197 = arith.addi %196, %c2_i32 : i32
      %198 = arith.index_cast %197 : i32 to index
      %c0_110 = arith.constant 0 : index
      %199 = vector.load %arg12[%198, %c0_110] : memref<128x32xf32, #tpu.memory_space<vmem>>, vector<1x32xf32>
      %200 = vector.broadcast %199 : vector<1x32xf32> to vector<64x32xf32>
      %201 = arith.mulf %155, %200 : vector<64x32xf32>
      %202 = math.exp %201 : vector<64x32xf32>
      %203 = vector.shape_cast %202 : vector<64x32xf32> to vector<1x64x32xf32>
      %204 = arith.index_cast %197 : i32 to index
      %c0_111 = arith.constant 0 : index
      %c0_112 = arith.constant 0 : index
      %205 = vector.load %arg15[%204, %c0_111, %c0_112] : memref<128x64x32xf32, #tpu.memory_space<vmem>>, vector<1x64x32xf32>
      tpu.vector_store %arg15[%204, %c0_111, %c0_112], %203 {strides = array<i32>} : memref<128x64x32xf32, #tpu.memory_space<vmem>>, vector<1x64x32xf32>,
      %c8_i32_113 = arith.constant 8 : i32
      %206 = arith.muli %arg18, %c8_i32_113 : i32
      %c3_i32 = arith.constant 3 : i32
      %207 = arith.addi %206, %c3_i32 : i32
      %208 = arith.index_cast %207 : i32 to index
      %c0_114 = arith.constant 0 : index
      %209 = vector.load %arg12[%208, %c0_114] : memref<128x32xf32, #tpu.memory_space<vmem>>, vector<1x32xf32>
      %210 = vector.broadcast %209 : vector<1x32xf32> to vector<64x32xf32>
      %211 = arith.mulf %155, %210 : vector<64x32xf32>
      %212 = math.exp %211 : vector<64x32xf32>
      %213 = vector.shape_cast %212 : vector<64x32xf32> to vector<1x64x32xf32>
      %214 = arith.index_cast %207 : i32 to index
      %c0_115 = arith.constant 0 : index
      %c0_116 = arith.constant 0 : index
      %215 = vector.load %arg15[%214, %c0_115, %c0_116] : memref<128x64x32xf32, #tpu.memory_space<vmem>>, vector<1x64x32xf32>
      tpu.vector_store %arg15[%214, %c0_115, %c0_116], %213 {strides = array<i32>} : memref<128x64x32xf32, #tpu.memory_space<vmem>>, vector<1x64x32xf32>,
      %c8_i32_117 = arith.constant 8 : i32
      %216 = arith.muli %arg18, %c8_i32_117 : i32
      %c4_i32 = arith.constant 4 : i32
      %217 = arith.addi %216, %c4_i32 : i32
      %218 = arith.index_cast %217 : i32 to index
      %c0_118 = arith.constant 0 : index
      %219 = vector.load %arg12[%218, %c0_118] : memref<128x32xf32, #tpu.memory_space<vmem>>, vector<1x32xf32>
      %220 = vector.broadcast %219 : vector<1x32xf32> to vector<64x32xf32>
      %221 = arith.mulf %155, %220 : vector<64x32xf32>
      %222 = math.exp %221 : vector<64x32xf32>
      %223 = vector.shape_cast %222 : vector<64x32xf32> to vector<1x64x32xf32>
      %224 = arith.index_cast %217 : i32 to index
      %c0_119 = arith.constant 0 : index
      %c0_120 = arith.constant 0 : index
      %225 = vector.load %arg15[%224, %c0_119, %c0_120] : memref<128x64x32xf32, #tpu.memory_space<vmem>>, vector<1x64x32xf32>
      tpu.vector_store %arg15[%224, %c0_119, %c0_120], %223 {strides = array<i32>} : memref<128x64x32xf32, #tpu.memory_space<vmem>>, vector<1x64x32xf32>,
      %c8_i32_121 = arith.constant 8 : i32
      %226 = arith.muli %arg18, %c8_i32_121 : i32
      %c5_i32 = arith.constant 5 : i32
      %227 = arith.addi %226, %c5_i32 : i32
      %228 = arith.index_cast %227 : i32 to index
      %c0_122 = arith.constant 0 : index
      %229 = vector.load %arg12[%228, %c0_122] : memref<128x32xf32, #tpu.memory_space<vmem>>, vector<1x32xf32>
      %230 = vector.broadcast %229 : vector<1x32xf32> to vector<64x32xf32>
      %231 = arith.mulf %155, %230 : vector<64x32xf32>
      %232 = math.exp %231 : vector<64x32xf32>
      %233 = vector.shape_cast %232 : vector<64x32xf32> to vector<1x64x32xf32>
      %234 = arith.index_cast %227 : i32 to index
      %c0_123 = arith.constant 0 : index
      %c0_124 = arith.constant 0 : index
      %235 = vector.load %arg15[%234, %c0_123, %c0_124] : memref<128x64x32xf32, #tpu.memory_space<vmem>>, vector<1x64x32xf32>
      tpu.vector_store %arg15[%234, %c0_123, %c0_124], %233 {strides = array<i32>} : memref<128x64x32xf32, #tpu.memory_space<vmem>>, vector<1x64x32xf32>,
      %c8_i32_125 = arith.constant 8 : i32
      %236 = arith.muli %arg18, %c8_i32_125 : i32
      %c6_i32 = arith.constant 6 : i32
      %237 = arith.addi %236, %c6_i32 : i32
      %238 = arith.index_cast %237 : i32 to index
      %c0_126 = arith.constant 0 : index
      %239 = vector.load %arg12[%238, %c0_126] : memref<128x32xf32, #tpu.memory_space<vmem>>, vector<1x32xf32>
      %240 = vector.broadcast %239 : vector<1x32xf32> to vector<64x32xf32>
      %241 = arith.mulf %155, %240 : vector<64x32xf32>
      %242 = math.exp %241 : vector<64x32xf32>
      %243 = vector.shape_cast %242 : vector<64x32xf32> to vector<1x64x32xf32>
      %244 = arith.index_cast %237 : i32 to index
      %c0_127 = arith.constant 0 : index
      %c0_128 = arith.constant 0 : index
      %245 = vector.load %arg15[%244, %c0_127, %c0_128] : memref<128x64x32xf32, #tpu.memory_space<vmem>>, vector<1x64x32xf32>
      tpu.vector_store %arg15[%244, %c0_127, %c0_128], %243 {strides = array<i32>} : memref<128x64x32xf32, #tpu.memory_space<vmem>>, vector<1x64x32xf32>,
      %c8_i32_129 = arith.constant 8 : i32
      %246 = arith.muli %arg18, %c8_i32_129 : i32
      %c7_i32 = arith.constant 7 : i32
      %247 = arith.addi %246, %c7_i32 : i32
      %248 = arith.index_cast %247 : i32 to index
      %c0_130 = arith.constant 0 : index
      %249 = vector.load %arg12[%248, %c0_130] : memref<128x32xf32, #tpu.memory_space<vmem>>, vector<1x32xf32>
      %250 = vector.broadcast %249 : vector<1x32xf32> to vector<64x32xf32>
      %251 = arith.mulf %155, %250 : vector<64x32xf32>
      %252 = math.exp %251 : vector<64x32xf32>
      %253 = vector.shape_cast %252 : vector<64x32xf32> to vector<1x64x32xf32>
      %254 = arith.index_cast %247 : i32 to index
      %c0_131 = arith.constant 0 : index
      %c0_132 = arith.constant 0 : index
      %255 = vector.load %arg15[%254, %c0_131, %c0_132] : memref<128x64x32xf32, #tpu.memory_space<vmem>>, vector<1x64x32xf32>
      tpu.vector_store %arg15[%254, %c0_131, %c0_132], %253 {strides = array<i32>} : memref<128x64x32xf32, #tpu.memory_space<vmem>>, vector<1x64x32xf32>,
    }
    %c16_i32_80 = arith.constant 16 : i32
    %cst_81 = arith.constant 0.000000e+00 : f32
    %157 = vector.broadcast %cst_81 : f32 to vector<8x64x32xf32>
    %c0_82 = arith.constant 0 : index
    %c0_83 = arith.constant 0 : index
    %c0_84 = arith.constant 0 : index
    %158 = vector.load %arg16[%c0_82, %c0_83, %c0_84] : memref<8x64x32xf32, #tpu.memory_space<vmem>>, vector<8x64x32xf32>
    tpu.vector_store %arg16[%c0_82, %c0_83, %c0_84], %157 {strides = array<i32>} : memref<8x64x32xf32, #tpu.memory_space<vmem>>, vector<8x64x32xf32>,
    %c0_i32_85 = arith.constant 0 : i32
    %c16_i32_86 = arith.constant 16 : i32
    %159 = arith.addi %c0_i32_85, %c16_i32_86 : i32
    %c1_i32_87 = arith.constant 1 : i32
    scf.for %arg18 = %c0_i32_85 to %159 step %c1_i32_87  : i32 {
      %176 = arith.index_cast %arg18 : i32 to index
      %c0_100 = arith.constant 0 : index
      %c0_101 = arith.constant 0 : index
      %177 = vector.load %arg14[%176, %c0_100, %c0_101] : memref<16x128x8xf32, #tpu.memory_space<vmem>>, vector<1x128x8xf32>
      %178 = vector.shape_cast %177 : vector<1x128x8xf32> to vector<128x8xf32>
      %c8_i32 = arith.constant 8 : i32
      %179 = arith.muli %arg18, %c8_i32 : i32
      %c0_i32_102 = arith.constant 0 : i32
      %180 = arith.addi %179, %c0_i32_102 : i32
      %181 = vector.extract_strided_slice %178 {offsets = [0, 0], sizes = [64, 1], strides = [1, 1]} : vector<128x8xf32> to vector<64x1xf32>
      %182 = vector.extract_strided_slice %178 {offsets = [64, 0], sizes = [64, 1], strides = [1, 1]} : vector<128x8xf32> to vector<64x1xf32>
      %183 = arith.index_cast %180 : i32 to index
      %c0_103 = arith.constant 0 : index
      %184 = vector.load %arg13[%183, %c0_103] : memref<128x32xf32, #tpu.memory_space<vmem>>, vector<1x32xf32>
      %185 = arith.index_cast %180 : i32 to index
      %c0_104 = arith.constant 0 : index
      %c0_105 = arith.constant 0 : index
      %186 = vector.load %arg15[%185, %c0_104, %c0_105] : memref<128x64x32xf32, #tpu.memory_space<vmem>>, vector<1x64x32xf32>
      %187 = vector.shape_cast %186 : vector<1x64x32xf32> to vector<64x32xf32>
      %c0_106 = arith.constant 0 : index
      %c0_107 = arith.constant 0 : index
      %c0_108 = arith.constant 0 : index
      %188 = vector.load %arg16[%c0_106, %c0_107, %c0_108] : memref<8x64x32xf32, #tpu.memory_space<vmem>>, vector<1x64x32xf32>
      %189 = vector.shape_cast %188 : vector<1x64x32xf32> to vector<64x32xf32>
      %190 = arith.mulf %187, %189 : vector<64x32xf32>
      %191 = vector.broadcast %181 : vector<64x1xf32> to vector<64x32xf32>
      %192 = vector.broadcast %184 : vector<1x32xf32> to vector<64x32xf32>
      %193 = arith.mulf %191, %192 : vector<64x32xf32>
      %194 = arith.addf %190, %193 : vector<64x32xf32>
      %c0_109 = arith.constant 0 : index
      %c0_110 = arith.constant 0 : index
      %c0_111 = arith.constant 0 : index
      %195 = vector.load %arg16[%c0_109, %c0_110, %c0_111] : memref<8x64x32xf32, #tpu.memory_space<vmem>>, vector<1x64x32xf32>
      %196 = vector.shape_cast %195 : vector<1x64x32xf32> to vector<64x32xf32>
      %197 = vector.shape_cast %194 : vector<64x32xf32> to vector<1x64x32xf32>
      tpu.vector_store %arg16[%c0_109, %c0_110, %c0_111], %197 {strides = array<i32>} : memref<8x64x32xf32, #tpu.memory_space<vmem>>, vector<1x64x32xf32>,
      %198 = vector.broadcast %182 : vector<64x1xf32> to vector<64x32xf32>
      %199 = arith.mulf %194, %198 : vector<64x32xf32>
      %cst_112 = arith.constant dense<0.000000e+00> : vector<32xf32>
      %200 = vector.multi_reduction <add>, %199, %cst_112 [0] : vector<64x32xf32> to vector<32xf32>
      %201 = vector.shape_cast %200 : vector<32xf32> to vector<1x32xf32>
      %c8_i32_113 = arith.constant 8 : i32
      %202 = arith.muli %arg18, %c8_i32_113 : i32
      %c1_i32_114 = arith.constant 1 : i32
      %203 = arith.addi %202, %c1_i32_114 : i32
      %204 = vector.extract_strided_slice %178 {offsets = [0, 1], sizes = [64, 1], strides = [1, 1]} : vector<128x8xf32> to vector<64x1xf32>
      %205 = vector.extract_strided_slice %178 {offsets = [64, 1], sizes = [64, 1], strides = [1, 1]} : vector<128x8xf32> to vector<64x1xf32>
      %206 = arith.index_cast %203 : i32 to index
      %c0_115 = arith.constant 0 : index
      %207 = vector.load %arg13[%206, %c0_115] : memref<128x32xf32, #tpu.memory_space<vmem>>, vector<1x32xf32>
      %208 = arith.index_cast %203 : i32 to index
      %c0_116 = arith.constant 0 : index
      %c0_117 = arith.constant 0 : index
      %209 = vector.load %arg15[%208, %c0_116, %c0_117] : memref<128x64x32xf32, #tpu.memory_space<vmem>>, vector<1x64x32xf32>
      %210 = vector.shape_cast %209 : vector<1x64x32xf32> to vector<64x32xf32>
      %c1_118 = arith.constant 1 : index
      %c0_119 = arith.constant 0 : index
      %c0_120 = arith.constant 0 : index
      %211 = vector.load %arg16[%c1_118, %c0_119, %c0_120] : memref<8x64x32xf32, #tpu.memory_space<vmem>>, vector<1x64x32xf32>
      %212 = vector.shape_cast %211 : vector<1x64x32xf32> to vector<64x32xf32>
      %213 = arith.mulf %210, %212 : vector<64x32xf32>
      %214 = vector.broadcast %204 : vector<64x1xf32> to vector<64x32xf32>
      %215 = vector.broadcast %207 : vector<1x32xf32> to vector<64x32xf32>
      %216 = arith.mulf %214, %215 : vector<64x32xf32>
      %217 = arith.addf %213, %216 : vector<64x32xf32>
      %c1_121 = arith.constant 1 : index
      %c0_122 = arith.constant 0 : index
      %c0_123 = arith.constant 0 : index
      %218 = vector.load %arg16[%c1_121, %c0_122, %c0_123] : memref<8x64x32xf32, #tpu.memory_space<vmem>>, vector<1x64x32xf32>
      %219 = vector.shape_cast %218 : vector<1x64x32xf32> to vector<64x32xf32>
      %220 = vector.shape_cast %217 : vector<64x32xf32> to vector<1x64x32xf32>
      tpu.vector_store %arg16[%c1_121, %c0_122, %c0_123], %220 {strides = array<i32>} : memref<8x64x32xf32, #tpu.memory_space<vmem>>, vector<1x64x32xf32>,
      %221 = vector.broadcast %205 : vector<64x1xf32> to vector<64x32xf32>
      %222 = arith.mulf %217, %221 : vector<64x32xf32>
      %cst_124 = arith.constant dense<0.000000e+00> : vector<32xf32>
      %223 = vector.multi_reduction <add>, %222, %cst_124 [0] : vector<64x32xf32> to vector<32xf32>
      %224 = vector.shape_cast %223 : vector<32xf32> to vector<1x32xf32>
      %c8_i32_125 = arith.constant 8 : i32
      %225 = arith.muli %arg18, %c8_i32_125 : i32
      %c2_i32 = arith.constant 2 : i32
      %226 = arith.addi %225, %c2_i32 : i32
      %227 = vector.extract_strided_slice %178 {offsets = [0, 2], sizes = [64, 1], strides = [1, 1]} : vector<128x8xf32> to vector<64x1xf32>
      %228 = vector.extract_strided_slice %178 {offsets = [64, 2], sizes = [64, 1], strides = [1, 1]} : vector<128x8xf32> to vector<64x1xf32>
      %229 = arith.index_cast %226 : i32 to index
      %c0_126 = arith.constant 0 : index
      %230 = vector.load %arg13[%229, %c0_126] : memref<128x32xf32, #tpu.memory_space<vmem>>, vector<1x32xf32>
      %231 = arith.index_cast %226 : i32 to index
      %c0_127 = arith.constant 0 : index
      %c0_128 = arith.constant 0 : index
      %232 = vector.load %arg15[%231, %c0_127, %c0_128] : memref<128x64x32xf32, #tpu.memory_space<vmem>>, vector<1x64x32xf32>
      %233 = vector.shape_cast %232 : vector<1x64x32xf32> to vector<64x32xf32>
      %c2_129 = arith.constant 2 : index
      %c0_130 = arith.constant 0 : index
      %c0_131 = arith.constant 0 : index
      %234 = vector.load %arg16[%c2_129, %c0_130, %c0_131] : memref<8x64x32xf32, #tpu.memory_space<vmem>>, vector<1x64x32xf32>
      %235 = vector.shape_cast %234 : vector<1x64x32xf32> to vector<64x32xf32>
      %236 = arith.mulf %233, %235 : vector<64x32xf32>
      %237 = vector.broadcast %227 : vector<64x1xf32> to vector<64x32xf32>
      %238 = vector.broadcast %230 : vector<1x32xf32> to vector<64x32xf32>
      %239 = arith.mulf %237, %238 : vector<64x32xf32>
      %240 = arith.addf %236, %239 : vector<64x32xf32>
      %c2_132 = arith.constant 2 : index
      %c0_133 = arith.constant 0 : index
      %c0_134 = arith.constant 0 : index
      %241 = vector.load %arg16[%c2_132, %c0_133, %c0_134] : memref<8x64x32xf32, #tpu.memory_space<vmem>>, vector<1x64x32xf32>
      %242 = vector.shape_cast %241 : vector<1x64x32xf32> to vector<64x32xf32>
      %243 = vector.shape_cast %240 : vector<64x32xf32> to vector<1x64x32xf32>
      tpu.vector_store %arg16[%c2_132, %c0_133, %c0_134], %243 {strides = array<i32>} : memref<8x64x32xf32, #tpu.memory_space<vmem>>, vector<1x64x32xf32>,
      %244 = vector.broadcast %228 : vector<64x1xf32> to vector<64x32xf32>
      %245 = arith.mulf %240, %244 : vector<64x32xf32>
      %cst_135 = arith.constant dense<0.000000e+00> : vector<32xf32>
      %246 = vector.multi_reduction <add>, %245, %cst_135 [0] : vector<64x32xf32> to vector<32xf32>
      %247 = vector.shape_cast %246 : vector<32xf32> to vector<1x32xf32>
      %c8_i32_136 = arith.constant 8 : i32
      %248 = arith.muli %arg18, %c8_i32_136 : i32
      %c3_i32 = arith.constant 3 : i32
      %249 = arith.addi %248, %c3_i32 : i32
      %250 = vector.extract_strided_slice %178 {offsets = [0, 3], sizes = [64, 1], strides = [1, 1]} : vector<128x8xf32> to vector<64x1xf32>
      %251 = vector.extract_strided_slice %178 {offsets = [64, 3], sizes = [64, 1], strides = [1, 1]} : vector<128x8xf32> to vector<64x1xf32>
      %252 = arith.index_cast %249 : i32 to index
      %c0_137 = arith.constant 0 : index
      %253 = vector.load %arg13[%252, %c0_137] : memref<128x32xf32, #tpu.memory_space<vmem>>, vector<1x32xf32>
      %254 = arith.index_cast %249 : i32 to index
      %c0_138 = arith.constant 0 : index
      %c0_139 = arith.constant 0 : index
      %255 = vector.load %arg15[%254, %c0_138, %c0_139] : memref<128x64x32xf32, #tpu.memory_space<vmem>>, vector<1x64x32xf32>
      %256 = vector.shape_cast %255 : vector<1x64x32xf32> to vector<64x32xf32>
      %c3_140 = arith.constant 3 : index
      %c0_141 = arith.constant 0 : index
      %c0_142 = arith.constant 0 : index
      %257 = vector.load %arg16[%c3_140, %c0_141, %c0_142] : memref<8x64x32xf32, #tpu.memory_space<vmem>>, vector<1x64x32xf32>
      %258 = vector.shape_cast %257 : vector<1x64x32xf32> to vector<64x32xf32>
      %259 = arith.mulf %256, %258 : vector<64x32xf32>
      %260 = vector.broadcast %250 : vector<64x1xf32> to vector<64x32xf32>
      %261 = vector.broadcast %253 : vector<1x32xf32> to vector<64x32xf32>
      %262 = arith.mulf %260, %261 : vector<64x32xf32>
      %263 = arith.addf %259, %262 : vector<64x32xf32>
      %c3_143 = arith.constant 3 : index
      %c0_144 = arith.constant 0 : index
      %c0_145 = arith.constant 0 : index
      %264 = vector.load %arg16[%c3_143, %c0_144, %c0_145] : memref<8x64x32xf32, #tpu.memory_space<vmem>>, vector<1x64x32xf32>
      %265 = vector.shape_cast %264 : vector<1x64x32xf32> to vector<64x32xf32>
      %266 = vector.shape_cast %263 : vector<64x32xf32> to vector<1x64x32xf32>
      tpu.vector_store %arg16[%c3_143, %c0_144, %c0_145], %266 {strides = array<i32>} : memref<8x64x32xf32, #tpu.memory_space<vmem>>, vector<1x64x32xf32>,
      %267 = vector.broadcast %251 : vector<64x1xf32> to vector<64x32xf32>
      %268 = arith.mulf %263, %267 : vector<64x32xf32>
      %cst_146 = arith.constant dense<0.000000e+00> : vector<32xf32>
      %269 = vector.multi_reduction <add>, %268, %cst_146 [0] : vector<64x32xf32> to vector<32xf32>
      %270 = vector.shape_cast %269 : vector<32xf32> to vector<1x32xf32>
      %c8_i32_147 = arith.constant 8 : i32
      %271 = arith.muli %arg18, %c8_i32_147 : i32
      %c4_i32 = arith.constant 4 : i32
      %272 = arith.addi %271, %c4_i32 : i32
      %273 = vector.extract_strided_slice %178 {offsets = [0, 4], sizes = [64, 1], strides = [1, 1]} : vector<128x8xf32> to vector<64x1xf32>
      %274 = vector.extract_strided_slice %178 {offsets = [64, 4], sizes = [64, 1], strides = [1, 1]} : vector<128x8xf32> to vector<64x1xf32>
      %275 = arith.index_cast %272 : i32 to index
      %c0_148 = arith.constant 0 : index
      %276 = vector.load %arg13[%275, %c0_148] : memref<128x32xf32, #tpu.memory_space<vmem>>, vector<1x32xf32>
      %277 = arith.index_cast %272 : i32 to index
      %c0_149 = arith.constant 0 : index
      %c0_150 = arith.constant 0 : index
      %278 = vector.load %arg15[%277, %c0_149, %c0_150] : memref<128x64x32xf32, #tpu.memory_space<vmem>>, vector<1x64x32xf32>
      %279 = vector.shape_cast %278 : vector<1x64x32xf32> to vector<64x32xf32>
      %c4_151 = arith.constant 4 : index
      %c0_152 = arith.constant 0 : index
      %c0_153 = arith.constant 0 : index
      %280 = vector.load %arg16[%c4_151, %c0_152, %c0_153] : memref<8x64x32xf32, #tpu.memory_space<vmem>>, vector<1x64x32xf32>
      %281 = vector.shape_cast %280 : vector<1x64x32xf32> to vector<64x32xf32>
      %282 = arith.mulf %279, %281 : vector<64x32xf32>
      %283 = vector.broadcast %273 : vector<64x1xf32> to vector<64x32xf32>
      %284 = vector.broadcast %276 : vector<1x32xf32> to vector<64x32xf32>
      %285 = arith.mulf %283, %284 : vector<64x32xf32>
      %286 = arith.addf %282, %285 : vector<64x32xf32>
      %c4_154 = arith.constant 4 : index
      %c0_155 = arith.constant 0 : index
      %c0_156 = arith.constant 0 : index
      %287 = vector.load %arg16[%c4_154, %c0_155, %c0_156] : memref<8x64x32xf32, #tpu.memory_space<vmem>>, vector<1x64x32xf32>
      %288 = vector.shape_cast %287 : vector<1x64x32xf32> to vector<64x32xf32>
      %289 = vector.shape_cast %286 : vector<64x32xf32> to vector<1x64x32xf32>
      tpu.vector_store %arg16[%c4_154, %c0_155, %c0_156], %289 {strides = array<i32>} : memref<8x64x32xf32, #tpu.memory_space<vmem>>, vector<1x64x32xf32>,
      %290 = vector.broadcast %274 : vector<64x1xf32> to vector<64x32xf32>
      %291 = arith.mulf %286, %290 : vector<64x32xf32>
      %cst_157 = arith.constant dense<0.000000e+00> : vector<32xf32>
      %292 = vector.multi_reduction <add>, %291, %cst_157 [0] : vector<64x32xf32> to vector<32xf32>
      %293 = vector.shape_cast %292 : vector<32xf32> to vector<1x32xf32>
      %c8_i32_158 = arith.constant 8 : i32
      %294 = arith.muli %arg18, %c8_i32_158 : i32
      %c5_i32 = arith.constant 5 : i32
      %295 = arith.addi %294, %c5_i32 : i32
      %296 = vector.extract_strided_slice %178 {offsets = [0, 5], sizes = [64, 1], strides = [1, 1]} : vector<128x8xf32> to vector<64x1xf32>
      %297 = vector.extract_strided_slice %178 {offsets = [64, 5], sizes = [64, 1], strides = [1, 1]} : vector<128x8xf32> to vector<64x1xf32>
      %298 = arith.index_cast %295 : i32 to index
      %c0_159 = arith.constant 0 : index
      %299 = vector.load %arg13[%298, %c0_159] : memref<128x32xf32, #tpu.memory_space<vmem>>, vector<1x32xf32>
      %300 = arith.index_cast %295 : i32 to index
      %c0_160 = arith.constant 0 : index
      %c0_161 = arith.constant 0 : index
      %301 = vector.load %arg15[%300, %c0_160, %c0_161] : memref<128x64x32xf32, #tpu.memory_space<vmem>>, vector<1x64x32xf32>
      %302 = vector.shape_cast %301 : vector<1x64x32xf32> to vector<64x32xf32>
      %c5_162 = arith.constant 5 : index
      %c0_163 = arith.constant 0 : index
      %c0_164 = arith.constant 0 : index
      %303 = vector.load %arg16[%c5_162, %c0_163, %c0_164] : memref<8x64x32xf32, #tpu.memory_space<vmem>>, vector<1x64x32xf32>
      %304 = vector.shape_cast %303 : vector<1x64x32xf32> to vector<64x32xf32>
      %305 = arith.mulf %302, %304 : vector<64x32xf32>
      %306 = vector.broadcast %296 : vector<64x1xf32> to vector<64x32xf32>
      %307 = vector.broadcast %299 : vector<1x32xf32> to vector<64x32xf32>
      %308 = arith.mulf %306, %307 : vector<64x32xf32>
      %309 = arith.addf %305, %308 : vector<64x32xf32>
      %c5_165 = arith.constant 5 : index
      %c0_166 = arith.constant 0 : index
      %c0_167 = arith.constant 0 : index
      %310 = vector.load %arg16[%c5_165, %c0_166, %c0_167] : memref<8x64x32xf32, #tpu.memory_space<vmem>>, vector<1x64x32xf32>
      %311 = vector.shape_cast %310 : vector<1x64x32xf32> to vector<64x32xf32>
      %312 = vector.shape_cast %309 : vector<64x32xf32> to vector<1x64x32xf32>
      tpu.vector_store %arg16[%c5_165, %c0_166, %c0_167], %312 {strides = array<i32>} : memref<8x64x32xf32, #tpu.memory_space<vmem>>, vector<1x64x32xf32>,
      %313 = vector.broadcast %297 : vector<64x1xf32> to vector<64x32xf32>
      %314 = arith.mulf %309, %313 : vector<64x32xf32>
      %cst_168 = arith.constant dense<0.000000e+00> : vector<32xf32>
      %315 = vector.multi_reduction <add>, %314, %cst_168 [0] : vector<64x32xf32> to vector<32xf32>
      %316 = vector.shape_cast %315 : vector<32xf32> to vector<1x32xf32>
      %c8_i32_169 = arith.constant 8 : i32
      %317 = arith.muli %arg18, %c8_i32_169 : i32
      %c6_i32 = arith.constant 6 : i32
      %318 = arith.addi %317, %c6_i32 : i32
      %319 = vector.extract_strided_slice %178 {offsets = [0, 6], sizes = [64, 1], strides = [1, 1]} : vector<128x8xf32> to vector<64x1xf32>
      %320 = vector.extract_strided_slice %178 {offsets = [64, 6], sizes = [64, 1], strides = [1, 1]} : vector<128x8xf32> to vector<64x1xf32>
      %321 = arith.index_cast %318 : i32 to index
      %c0_170 = arith.constant 0 : index
      %322 = vector.load %arg13[%321, %c0_170] : memref<128x32xf32, #tpu.memory_space<vmem>>, vector<1x32xf32>
      %323 = arith.index_cast %318 : i32 to index
      %c0_171 = arith.constant 0 : index
      %c0_172 = arith.constant 0 : index
      %324 = vector.load %arg15[%323, %c0_171, %c0_172] : memref<128x64x32xf32, #tpu.memory_space<vmem>>, vector<1x64x32xf32>
      %325 = vector.shape_cast %324 : vector<1x64x32xf32> to vector<64x32xf32>
      %c6_173 = arith.constant 6 : index
      %c0_174 = arith.constant 0 : index
      %c0_175 = arith.constant 0 : index
      %326 = vector.load %arg16[%c6_173, %c0_174, %c0_175] : memref<8x64x32xf32, #tpu.memory_space<vmem>>, vector<1x64x32xf32>
      %327 = vector.shape_cast %326 : vector<1x64x32xf32> to vector<64x32xf32>
      %328 = arith.mulf %325, %327 : vector<64x32xf32>
      %329 = vector.broadcast %319 : vector<64x1xf32> to vector<64x32xf32>
      %330 = vector.broadcast %322 : vector<1x32xf32> to vector<64x32xf32>
      %331 = arith.mulf %329, %330 : vector<64x32xf32>
      %332 = arith.addf %328, %331 : vector<64x32xf32>
      %c6_176 = arith.constant 6 : index
      %c0_177 = arith.constant 0 : index
      %c0_178 = arith.constant 0 : index
      %333 = vector.load %arg16[%c6_176, %c0_177, %c0_178] : memref<8x64x32xf32, #tpu.memory_space<vmem>>, vector<1x64x32xf32>
      %334 = vector.shape_cast %333 : vector<1x64x32xf32> to vector<64x32xf32>
      %335 = vector.shape_cast %332 : vector<64x32xf32> to vector<1x64x32xf32>
      tpu.vector_store %arg16[%c6_176, %c0_177, %c0_178], %335 {strides = array<i32>} : memref<8x64x32xf32, #tpu.memory_space<vmem>>, vector<1x64x32xf32>,
      %336 = vector.broadcast %320 : vector<64x1xf32> to vector<64x32xf32>
      %337 = arith.mulf %332, %336 : vector<64x32xf32>
      %cst_179 = arith.constant dense<0.000000e+00> : vector<32xf32>
      %338 = vector.multi_reduction <add>, %337, %cst_179 [0] : vector<64x32xf32> to vector<32xf32>
      %339 = vector.shape_cast %338 : vector<32xf32> to vector<1x32xf32>
      %c8_i32_180 = arith.constant 8 : i32
      %340 = arith.muli %arg18, %c8_i32_180 : i32
      %c7_i32 = arith.constant 7 : i32
      %341 = arith.addi %340, %c7_i32 : i32
      %342 = vector.extract_strided_slice %178 {offsets = [0, 7], sizes = [64, 1], strides = [1, 1]} : vector<128x8xf32> to vector<64x1xf32>
      %343 = vector.extract_strided_slice %178 {offsets = [64, 7], sizes = [64, 1], strides = [1, 1]} : vector<128x8xf32> to vector<64x1xf32>
      %344 = arith.index_cast %341 : i32 to index
      %c0_181 = arith.constant 0 : index
      %345 = vector.load %arg13[%344, %c0_181] : memref<128x32xf32, #tpu.memory_space<vmem>>, vector<1x32xf32>
      %346 = arith.index_cast %341 : i32 to index
      %c0_182 = arith.constant 0 : index
      %c0_183 = arith.constant 0 : index
      %347 = vector.load %arg15[%346, %c0_182, %c0_183] : memref<128x64x32xf32, #tpu.memory_space<vmem>>, vector<1x64x32xf32>
      %348 = vector.shape_cast %347 : vector<1x64x32xf32> to vector<64x32xf32>
      %c7_184 = arith.constant 7 : index
      %c0_185 = arith.constant 0 : index
      %c0_186 = arith.constant 0 : index
      %349 = vector.load %arg16[%c7_184, %c0_185, %c0_186] : memref<8x64x32xf32, #tpu.memory_space<vmem>>, vector<1x64x32xf32>
      %350 = vector.shape_cast %349 : vector<1x64x32xf32> to vector<64x32xf32>
      %351 = arith.mulf %348, %350 : vector<64x32xf32>
      %352 = vector.broadcast %342 : vector<64x1xf32> to vector<64x32xf32>
      %353 = vector.broadcast %345 : vector<1x32xf32> to vector<64x32xf32>
      %354 = arith.mulf %352, %353 : vector<64x32xf32>
      %355 = arith.addf %351, %354 : vector<64x32xf32>
      %c7_187 = arith.constant 7 : index
      %c0_188 = arith.constant 0 : index
      %c0_189 = arith.constant 0 : index
      %356 = vector.load %arg16[%c7_187, %c0_188, %c0_189] : memref<8x64x32xf32, #tpu.memory_space<vmem>>, vector<1x64x32xf32>
      %357 = vector.shape_cast %356 : vector<1x64x32xf32> to vector<64x32xf32>
      %358 = vector.shape_cast %355 : vector<64x32xf32> to vector<1x64x32xf32>
      tpu.vector_store %arg16[%c7_187, %c0_188, %c0_189], %358 {strides = array<i32>} : memref<8x64x32xf32, #tpu.memory_space<vmem>>, vector<1x64x32xf32>,
      %359 = vector.broadcast %343 : vector<64x1xf32> to vector<64x32xf32>
      %360 = arith.mulf %355, %359 : vector<64x32xf32>
      %cst_190 = arith.constant dense<0.000000e+00> : vector<32xf32>
      %361 = vector.multi_reduction <add>, %360, %cst_190 [0] : vector<64x32xf32> to vector<32xf32>
      %362 = vector.shape_cast %361 : vector<32xf32> to vector<1x32xf32>
      %363 = tpu.concatenate %201, %224, %247, %270, %293, %316, %339, %362 in 0 : vector<1x32xf32>, vector<1x32xf32>, vector<1x32xf32>, vector<1x32xf32>, vector<1x32xf32>, vector<1x32xf32>, vector<1x32xf32>, vector<1x32xf32> -> vector<8x32xf32>
      %c8_i32_191 = arith.constant 8 : i32
      %364 = arith.muli %arg18, %c8_i32_191 : i32
      %365 = arith.index_cast %364 : i32 to index
      %c0_192 = arith.constant 0 : index
      %366 = vector.load %arg17[%365, %c0_192] : memref<128x32xf32, #tpu.memory_space<vmem>>, vector<8x32xf32>
      tpu.vector_store %arg17[%365, %c0_192], %363 {strides = array<i32>} : memref<128x32xf32, #tpu.memory_space<vmem>>, vector<8x32xf32>,
    }
    %c16_i32_88 = arith.constant 16 : i32
    %c0_89 = arith.constant 0 : index
    %c0_90 = arith.constant 0 : index
    %160 = vector.load %arg17[%c0_89, %c0_90] : memref<128x32xf32, #tpu.memory_space<vmem>>, vector<128x32xf32>
    %c2_91 = arith.constant 2 : index
    %c0_92 = arith.constant 0 : index
    %161 = vector.load %arg5[%c2_91, %c0_92] : memref<3x32xf32, #tpu.memory_space<vmem>>, vector<1x32xf32>
    %162 = vector.broadcast %161 : vector<1x32xf32> to vector<128x32xf32>
    %163 = arith.mulf %60, %162 : vector<128x32xf32>
    %164 = arith.addf %160, %163 : vector<128x32xf32>
    %165 = arith.negf %27 : vector<128x32xf32>
    %166 = math.exp %165 : vector<128x32xf32>
    %cst_93 = arith.constant 1.000000e+00 : f32
    %167 = vector.broadcast %cst_93 : f32 to vector<128x32xf32>
    %168 = arith.addf %167, %166 : vector<128x32xf32>
    %169 = arith.divf %167, %168 : vector<128x32xf32>
    %170 = arith.mulf %27, %169 : vector<128x32xf32>
    %171 = arith.mulf %164, %170 : vector<128x32xf32>
    %c0_94 = arith.constant 0 : index
    %c0_95 = arith.constant 0 : index
    %172 = vector.load %arg10[%c0_94, %c0_95] : memref<32x16xf32, #tpu.memory_space<vmem>>, vector<32x16xf32>
    %cst_96 = arith.constant dense<0.000000e+00> : vector<128x16xf32>
    %173 = tpu.matmul %171, %172, %cst_96 {dimension_numbers = #tpu.dot_dimension_numbers<[1], [0], [0], [1], [0, 0, 1, 1], [], []>} : vector<128x32xf32>, vector<32x16xf32>, vector<128x16xf32> -> vector<128x16xf32>
    %174 = vector.shape_cast %173 : vector<128x16xf32> to vector<16x8x16xf32>
    %c0_97 = arith.constant 0 : index
    %c0_98 = arith.constant 0 : index
    %c0_99 = arith.constant 0 : index
    %175 = vector.load %arg11[%c0_97, %c0_98, %c0_99] : memref<16x8x16xf32, #tpu.memory_space<vmem>>, vector<16x8x16xf32>
    tpu.vector_store %arg11[%c0_97, %c0_98, %c0_99], %174 {strides = array<i32>} : memref<16x8x16xf32, #tpu.memory_space<vmem>>, vector<16x8x16xf32>,
    return
  }
  func.func @transform_0(%arg0: i32) -> (i32, i32, i32) {
    %c0_i32 = arith.constant 0 : i32
    %c0_i32_0 = arith.constant 0 : i32
    %c0_i32_1 = arith.constant 0 : i32
    return %c0_i32, %arg0, %c0_i32_0 : i32, i32, i32
  }
  func.func @transform_1(%arg0: i32) -> (i32, i32) {
    %c0_i32 = arith.constant 0 : i32
    %c0_i32_0 = arith.constant 0 : i32
    %c0_i32_1 = arith.constant 0 : i32
    return %c0_i32, %c0_i32_0 : i32, i32
  }
  func.func @transform_2(%arg0: i32) -> (i32, i32) {
    %c0_i32 = arith.constant 0 : i32
    %c0_i32_0 = arith.constant 0 : i32
    %c0_i32_1 = arith.constant 0 : i32
    return %c0_i32, %c0_i32_0 : i32, i32
  }
  func.func @transform_3(%arg0: i32) -> (i32, i32) {
    %c0_i32 = arith.constant 0 : i32
    %c0_i32_0 = arith.constant 0 : i32
    %c0_i32_1 = arith.constant 0 : i32
    return %c0_i32, %c0_i32_0 : i32, i32
  }
  func.func @transform_4(%arg0: i32) -> (i32, i32) {
    %c0_i32 = arith.constant 0 : i32
    %c0_i32_0 = arith.constant 0 : i32
    %c0_i32_1 = arith.constant 0 : i32
    return %c0_i32, %c0_i32_0 : i32, i32
  }
  func.func @transform_5(%arg0: i32) -> (i32, i32) {
    %c0_i32 = arith.constant 0 : i32
    %c0_i32_0 = arith.constant 0 : i32
    %c0_i32_1 = arith.constant 0 : i32
    return %c0_i32, %c0_i32_0 : i32, i32
  }
  func.func @transform_6(%arg0: i32) -> (i32, i32) {
    %c0_i32 = arith.constant 0 : i32
    %c0_i32_0 = arith.constant 0 : i32
    %c0_i32_1 = arith.constant 0 : i32
    return %c0_i32, %c0_i32_0 : i32, i32
  }
  func.func @transform_7(%arg0: i32) -> (i32, i32) {
    %c0_i32 = arith.constant 0 : i32
    %c0_i32_0 = arith.constant 0 : i32
    %c0_i32_1 = arith.constant 0 : i32
    return %c0_i32, %c0_i32_0 : i32, i32
  }
  func.func @transform_8(%arg0: i32) -> (i32, i32) {
    %c0_i32 = arith.constant 0 : i32
    %c0_i32_0 = arith.constant 0 : i32
    %c0_i32_1 = arith.constant 0 : i32
    return %c0_i32, %c0_i32_0 : i32, i32
  }
  func.func @transform_9(%arg0: i32) -> (i32, i32) {
    %c0_i32 = arith.constant 0 : i32
    %c0_i32_0 = arith.constant 0 : i32
    %c0_i32_1 = arith.constant 0 : i32
    return %c0_i32, %c0_i32_0 : i32, i32
  }
  func.func @transform_10(%arg0: i32) -> (i32, i32, i32) {
    %c0_i32 = arith.constant 0 : i32
    %c0_i32_0 = arith.constant 0 : i32
    %c0_i32_1 = arith.constant 0 : i32
    return %c0_i32, %arg0, %c0_i32_0 : i32, i32, i32
  }
}

</mosaic_0001>

<llo_original>
// kernel: tpu_custom_call.1
$region0: #{tpu_custom_call.1}
  #allocation0 [shape = 'u32[]', space=smem, size = 0x4, offset = 0x4, fixed_abs, tag = 'smem constant byte address 0x4 - core index']
  #allocation1 [shape = 'u32[72,128]{1,0:T(1,128)}', space=vmem, size = 0x9000, scoped, tag = 'internal scratch']
  #allocation2 [shape = 'f32[128,32]{1,0:T(8,128)}', space=vmem, size = 0x10000, scoped, tag = 'scratch operand']
  #allocation3 [shape = 'f32[128,32]{1,0:T(8,128)}', space=vmem, size = 0x10000, scoped, tag = 'scratch operand']
  #allocation4 [shape = 'f32[16,128,8]{2,1,0:T(8,128)}', space=vmem, size = 0x100000, scoped, tag = 'scratch operand']
  #allocation5 [shape = 'f32[128,64,32]{2,1,0:T(8,128)}', space=vmem, size = 0x400000, scoped, tag = 'scratch operand']
  #allocation6 [shape = 'f32[8,64,32]{2,1,0:T(8,128)}', space=vmem, size = 0x40000, scoped, tag = 'scratch operand']
  #allocation7 [shape = 'f32[128,32]{1,0:T(8,128)}', space=vmem, size = 0x10000, scoped, tag = 'scratch operand']
  %s0 = inlined_call_operand.hbm [shape: f32[16,16,16], index: 0, kind: input, shape index: {}]
  %s1 = inlined_call_operand.vmem [shape: f32[2,16], index: 1, kind: input, shape index: {}]
  %s2 = inlined_call_operand.vmem [shape: f32[16,64], index: 2, kind: input, shape index: {}]
  %s3 = inlined_call_operand.vmem [shape: f32[4,32], index: 3, kind: input, shape index: {}]
  %s4 = inlined_call_operand.vmem [shape: f32[3,32], index: 4, kind: input, shape index: {}]
  %s5 = inlined_call_operand.vmem [shape: f32[32,8], index: 5, kind: input, shape index: {}]
  %s6 = inlined_call_operand.vmem [shape: f32[8,32], index: 6, kind: input, shape index: {}]
  %s7 = inlined_call_operand.vmem [shape: f32[128,32], index: 7, kind: input, shape index: {}]
  %s8 = inlined_call_operand.vmem [shape: f32[64,32], index: 8, kind: input, shape index: {}]
  %s9 = inlined_call_operand.vmem [shape: f32[32,16], index: 9, kind: input, shape index: {}]
  %s10 = inlined_call_operand.hbm [shape: f32[16,16,16], index: 10, kind: output, shape index: {}]
  %s11 = sld [smem:[#allocation0]]
  $region91: #{tpu_custom_call.1} parent=0
    _
  %s13 = ssub.s32 1, %s11
  %s14 = scalar_select 0, %s13, %s11
  $region1: #{tpu_custom_call.1} parent=0
    #allocation8 [shape = 'u8[131072]{0}', space=vmem, size = 0x20000, scoped, tag = 'input window, operand 0']
    #allocation9 [shape = 's32[2]{0}', space=sflag, size = 0x8, scoped, tag = 'scoped memory for tpu_custom_call.1']
    #allocation10 [shape = 's32[2]{0}', space=sflag, size = 0x8, scoped, tag = 'scoped memory for tpu_custom_call.1']
    #allocation11 [shape = 'u8[131072]{0}', space=vmem, size = 0x20000, scoped, tag = 'output window, operand 0']
    %15 = vsyncpa [#allocation9], 0
    %s16 = scalar_lea.sflag [#allocation9], 1
    %17 = vsyncpa %s16, 0
    %18 = vsyncpa [#allocation10], 0
    %s19 = scalar_lea.sflag [#allocation10], 1
    %20 = vsyncpa %s19, 0
    loop: start=0, step=1, limit=4
    $region2: #{tpu_custom_call.1} parent=1 // loop_pre_header
      _
    $region3: #{tpu_custom_call.1} parent=1 // loop_header
      %s22 = sphi 0, %s26
      %p23 = scmp.ge.s32.totalorder %s22, 4
      %s32 = sphi 0, %s34
      %s35 = sphi 0, %s32
      %s36 = sphi 0, %s35
      %s52 = sphi 0, %s36
      %s56 = sphi 0, %s56
      %s58 = sphi 0, %s56
      %s59 = sphi 0, %s58
      %s73 = sphi 0, %s59
      %s77 = sphi 0, %s77
      %s79 = sphi 0, %s77
      %s80 = sphi 0, %s79
      %s94 = sphi 0, %s80
      %s98 = sphi 0, %s98
      %s100 = sphi 0, %s98
      %s101 = sphi 0, %s100
      %s115 = sphi 0, %s101
      %s119 = sphi 0, %s119
      %s121 = sphi 0, %s119
      %s122 = sphi 0, %s121
      %s136 = sphi 0, %s122
      %s140 = sphi 0, %s140
      %s142 = sphi 0, %s140
      %s143 = sphi 0, %s142
      %s157 = sphi 0, %s143
      %s161 = sphi 0, %s161
      %s163 = sphi 0, %s161
      %s164 = sphi 0, %s163
      %s178 = sphi 0, %s164
      %s182 = sphi 0, %s182
      %s184 = sphi 0, %s182
      %s185 = sphi 0, %s184
      %s199 = sphi 0, %s185
      %s203 = sphi 0, %s203
      %s205 = sphi 0, %s203
      %s206 = sphi 0, %s205
      %s220 = sphi 0, %s206
      %s224 = sphi 0, %s224
      %s226 = sphi 0, %s224
      %s227 = sphi 0, %s226
      %s241 = sphi 0, %s227
      %s247 = sphi 0, %s249
      %s250 = sphi 0, %s247
      %s251 = sphi 0, %s250
      %s267 = sphi 0, %s251
    $region4: #{tpu_custom_call.1} parent=1 // loop_header_branch
      %25 = sbr.rel (%p23) target = $region8
    $region5: #{tpu_custom_call.1} parent=1 // loop_body
      %s27 = ssub.s32 %s22, 1
      %s28 = ssub.s32 %s22, 2
      %s29 = sadd.s32 %s22, 1
      %s30 = ssub.s32 %s22, %s29
      %p31 = scmp.eq.s32.totalorder %s30, 0
      %s33 = sadd.s32 %s32, 1
      %s34 = scalar_select %p31, %s32, %s33
      %p37 = pneg %p31
      %p38 = scmp.eq.s32.totalorder %s22, 1
      %p39 = por %p37, %p38
      %p40 = scmp.ne.s32.totalorder %s32, %s35
      %p41 = scmp.eq.s32.totalorder %s22, 0
      %p42 = por %p40, %p41
      %p43 = scmp.ne.s32.totalorder %s32, %s35
      %p44 = scmp.eq.s32.totalorder %s27, 1
      %p45 = por %p43, %p44
      %p46 = scmp.ne.s32.totalorder %s35, %s36
      %p47 = scmp.eq.s32.totalorder %s27, 0
      %p48 = por %p46, %p47
      %p49 = scmp.ne.s32.totalorder %s35, %s36
      %p50 = scmp.eq.s32.totalorder %s28, 1
      %p51 = por %p49, %p50
      %p53 = scmp.ne.s32.totalorder %s36, %s52
      %p54 = scmp.eq.s32.totalorder %s28, 0
      %p55 = por %p53, %p54
      %s57 = sadd.s32 %s56, 1
      %p60 = scmp.eq.s32.totalorder %s22, 1
      %p61 = scmp.ne.s32.totalorder %s56, %s58
      %p62 = scmp.eq.s32.totalorder %s22, 0
      %p63 = por %p61, %p62
      %p64 = scmp.ne.s32.totalorder %s56, %s58
      %p65 = scmp.eq.s32.totalorder %s27, 1
      %p66 = por %p64, %p65
      %p67 = scmp.ne.s32.totalorder %s58, %s59
      %p68 = scmp.eq.s32.totalorder %s27, 0
      %p69 = por %p67, %p68
      %p70 = scmp.ne.s32.totalorder %s58, %s59
      %p71 = scmp.eq.s32.totalorder %s28, 1
      %p72 = por %p70, %p71
      %p74 = scmp.ne.s32.totalorder %s59, %s73
      %p75 = scmp.eq.s32.totalorder %s28, 0
      %p76 = por %p74, %p75
      %s78 = sadd.s32 %s77, 1
      %p81 = scmp.eq.s32.totalorder %s22, 1
      %p82 = scmp.ne.s32.totalorder %s77, %s79
      %p83 = scmp.eq.s32.totalorder %s22, 0
      %p84 = por %p82, %p83
      %p85 = scmp.ne.s32.totalorder %s77, %s79
      %p86 = scmp.eq.s32.totalorder %s27, 1
      %p87 = por %p85, %p86
      %p88 = scmp.ne.s32.totalorder %s79, %s80
      %p89 = scmp.eq.s32.totalorder %s27, 0
      %p90 = por %p88, %p89
      %p91 = scmp.ne.s32.totalorder %s79, %s80
      %p92 = scmp.eq.s32.totalorder %s28, 1
      %p93 = por %p91, %p92
      %p95 = scmp.ne.s32.totalorder %s80, %s94
      %p96 = scmp.eq.s32.totalorder %s28, 0
      %p97 = por %p95, %p96
      %s99 = sadd.s32 %s98, 1
      %p102 = scmp.eq.s32.totalorder %s22, 1
      %p103 = scmp.ne.s32.totalorder %s98, %s100
      %p104 = scmp.eq.s32.totalorder %s22, 0
      %p105 = por %p103, %p104
      %p106 = scmp.ne.s32.totalorder %s98, %s100
      %p107 = scmp.eq.s32.totalorder %s27, 1
      %p108 = por %p106, %p107
      %p109 = scmp.ne.s32.totalorder %s100, %s101
      %p110 = scmp.eq.s32.totalorder %s27, 0
      %p111 = por %p109, %p110
      %p112 = scmp.ne.s32.totalorder %s100, %s101
      %p113 = scmp.eq.s32.totalorder %s28, 1
      %p114 = por %p112, %p113
      %p116 = scmp.ne.s32.totalorder %s101, %s115
      %p117 = scmp.eq.s32.totalorder %s28, 0
      %p118 = por %p116, %p117
      %s120 = sadd.s32 %s119, 1
      %p123 = scmp.eq.s32.totalorder %s22, 1
      %p124 = scmp.ne.s32.totalorder %s119, %s121
      %p125 = scmp.eq.s32.totalorder %s22, 0
      %p126 = por %p124, %p125
      %p127 = scmp.ne.s32.totalorder %s119, %s121
      %p128 = scmp.eq.s32.totalorder %s27, 1
      %p129 = por %p127, %p128
      %p130 = scmp.ne.s32.totalorder %s121, %s122
      %p131 = scmp.eq.s32.totalorder %s27, 0
      %p132 = por %p130, %p131
      %p133 = scmp.ne.s32.totalorder %s121, %s122
      %p134 = scmp.eq.s32.totalorder %s28, 1
      %p135 = por %p133, %p134
      %p137 = scmp.ne.s32.totalorder %s122, %s136
      %p138 = scmp.eq.s32.totalorder %s28, 0
      %p139 = por %p137, %p138
      %s141 = sadd.s32 %s140, 1
      %p144 = scmp.eq.s32.totalorder %s22, 1
      %p145 = scmp.ne.s32.totalorder %s140, %s142
      %p146 = scmp.eq.s32.totalorder %s22, 0
      %p147 = por %p145, %p146
      %p148 = scmp.ne.s32.totalorder %s140, %s142
      %p149 = scmp.eq.s32.totalorder %s27, 1
      %p150 = por %p148, %p149
      %p151 = scmp.ne.s32.totalorder %s142, %s143
      %p152 = scmp.eq.s32.totalorder %s27, 0
      %p153 = por %p151, %p152
      %p154 = scmp.ne.s32.totalorder %s142, %s143
      %p155 = scmp.eq.s32.totalorder %s28, 1
      %p156 = por %p154, %p155
      %p158 = scmp.ne.s32.totalorder %s143, %s157
      %p159 = scmp.eq.s32.totalorder %s28, 0
      %p160 = por %p158, %p159
      %s162 = sadd.s32 %s161, 1
      %p165 = scmp.eq.s32.totalorder %s22, 1
      %p166 = scmp.ne.s32.totalorder %s161, %s163
      %p167 = scmp.eq.s32.totalorder %s22, 0
      %p168 = por %p166, %p167
      %p169 = scmp.ne.s32.totalorder %s161, %s163
      %p170 = scmp.eq.s32.totalorder %s27, 1
      %p171 = por %p169, %p170
      %p172 = scmp.ne.s32.totalorder %s163, %s164
      %p173 = scmp.eq.s32.totalorder %s27, 0
      %p174 = por %p172, %p173
      %p175 = scmp.ne.s32.totalorder %s163, %s164
      %p176 = scmp.eq.s32.totalorder %s28, 1
      %p177 = por %p175, %p176
      %p179 = scmp.ne.s32.totalorder %s164, %s178
      %p180 = scmp.eq.s32.totalorder %s28, 0
      %p181 = por %p179, %p180
      %s183 = sadd.s32 %s182, 1
      %p186 = scmp.eq.s32.totalorder %s22, 1
      %p187 = scmp.ne.s32.totalorder %s182, %s184
      %p188 = scmp.eq.s32.totalorder %s22, 0
      %p189 = por %p187, %p188
      %p190 = scmp.ne.s32.totalorder %s182, %s184
      %p191 = scmp.eq.s32.totalorder %s27, 1
      %p192 = por %p190, %p191
      %p193 = scmp.ne.s32.totalorder %s184, %s185
      %p194 = scmp.eq.s32.totalorder %s27, 0
      %p195 = por %p193, %p194
      %p196 = scmp.ne.s32.totalorder %s184, %s185
      %p197 = scmp.eq.s32.totalorder %s28, 1
      %p198 = por %p196, %p197
      %p200 = scmp.ne.s32.totalorder %s185, %s199
      %p201 = scmp.eq.s32.totalorder %s28, 0
      %p202 = por %p200, %p201
      %s204 = sadd.s32 %s203, 1
      %p207 = scmp.eq.s32.totalorder %s22, 1
      %p208 = scmp.ne.s32.totalorder %s203, %s205
      %p209 = scmp.eq.s32.totalorder %s22, 0
      %p210 = por %p208, %p209
      %p211 = scmp.ne.s32.totalorder %s203, %s205
      %p212 = scmp.eq.s32.totalorder %s27, 1
      %p213 = por %p211, %p212
      %p214 = scmp.ne.s32.totalorder %s205, %s206
      %p215 = scmp.eq.s32.totalorder %s27, 0
      %p216 = por %p214, %p215
      %p217 = scmp.ne.s32.totalorder %s205, %s206
      %p218 = scmp.eq.s32.totalorder %s28, 1
      %p219 = por %p217, %p218
      %p221 = scmp.ne.s32.totalorder %s206, %s220
      %p222 = scmp.eq.s32.totalorder %s28, 0
      %p223 = por %p221, %p222
      %s225 = sadd.s32 %s224, 1
      %p228 = scmp.eq.s32.totalorder %s22, 1
      %p229 = scmp.ne.s32.totalorder %s224, %s226
      %p230 = scmp.eq.s32.totalorder %s22, 0
      %p231 = por %p229, %p230
      %p232 = scmp.ne.s32.totalorder %s224, %s226
      %p233 = scmp.eq.s32.totalorder %s27, 1
      %p234 = por %p232, %p233
      %p235 = scmp.ne.s32.totalorder %s226, %s227
      %p236 = scmp.eq.s32.totalorder %s27, 0
      %p237 = por %p235, %p236
      %p238 = scmp.ne.s32.totalorder %s226, %s227
      %p239 = scmp.eq.s32.totalorder %s28, 1
      %p240 = por %p238, %p239
      %p242 = scmp.ne.s32.totalorder %s227, %s241
      %p243 = scmp.eq.s32.totalorder %s28, 0
      %p244 = por %p242, %p243
      %s245 = ssub.s32 %s22, %s29
      %p246 = scmp.eq.s32.totalorder %s245, 0
      %s248 = sadd.s32 %s247, 1
      %s249 = scalar_select %p246, %s247, %s248
      %p252 = pneg %p246
      %p253 = scmp.eq.s32.totalorder %s22, 1
      %p254 = por %p252, %p253
      %p255 = scmp.ne.s32.totalorder %s247, %s250
      %p256 = scmp.eq.s32.totalorder %s22, 0
      %p257 = por %p255, %p256
      %p258 = scmp.ne.s32.totalorder %s247, %s250
      %p259 = scmp.eq.s32.totalorder %s27, 1
      %p260 = por %p258, %p259
      %p261 = scmp.ne.s32.totalorder %s250, %s251
      %p262 = scmp.eq.s32.totalorder %s27, 0
      %p263 = por %p261, %p262
      %p264 = scmp.ne.s32.totalorder %s250, %s251
      %p265 = scmp.eq.s32.totalorder %s28, 1
      %p266 = por %p264, %p265
      %p268 = scmp.ne.s32.totalorder %s251, %s267
      %p269 = scmp.eq.s32.totalorder %s28, 0
      %p270 = por %p268, %p269
      %p271 = scmp.le.s32.totalorder 1, %s22
      %p272 = scmp.lt.s32.totalorder %s22, 3
      %p273 = pnand %p271, %p272
      %p274 = pneg %p273
      // Predicated region
      $region9: #{tpu_custom_call.1} parent=5 // pred_check
        _
      $region10: #{tpu_custom_call.1} parent=5 // pred_check_branch
        %276 = sbr.rel (%p273) target = $region12
      $region11: #{tpu_custom_call.1} parent=5 // pred_region
        %s277 = ssub.s32 %s22, 1
        // Predicated region
        $region13: #{tpu_custom_call.1} parent=11 // pred_check
          %p278 = pneg %p69
        $region14: #{tpu_custom_call.1} parent=11 // pred_check_branch
          %280 = sbr.rel (%p278) target = $region16
        $region15: #{tpu_custom_call.1} parent=11 // pred_region
          _
        $region16: #{tpu_custom_call.1} parent=11 // pred_fallthru
          _
        // Predicated region
        $region17: #{tpu_custom_call.1} parent=11 // pred_check
          %p281 = pneg %p90
        $region18: #{tpu_custom_call.1} parent=11 // pred_check_branch
          %283 = sbr.rel (%p281) target = $region20
        $region19: #{tpu_custom_call.1} parent=11 // pred_region
          _
        $region20: #{tpu_custom_call.1} parent=11 // pred_fallthru
          _
        // Predicated region
        $region21: #{tpu_custom_call.1} parent=11 // pred_check
          %p284 = pneg %p111
        $region22: #{tpu_custom_call.1} parent=11 // pred_check_branch
          %286 = sbr.rel (%p284) target = $region24
        $region23: #{tpu_custom_call.1} parent=11 // pred_region
          _
        $region24: #{tpu_custom_call.1} parent=11 // pred_fallthru
          _
        // Predicated region
        $region25: #{tpu_custom_call.1} parent=11 // pred_check
          %p287 = pneg %p132
        $region26: #{tpu_custom_call.1} parent=11 // pred_check_branch
          %289 = sbr.rel (%p287) target = $region28
        $region27: #{tpu_custom_call.1} parent=11 // pred_region
          _
        $region28: #{tpu_custom_call.1} parent=11 // pred_fallthru
          _
        // Predicated region
        $region29: #{tpu_custom_call.1} parent=11 // pred_check
          %p290 = pneg %p153
        $region30: #{tpu_custom_call.1} parent=11 // pred_check_branch
          %292 = sbr.rel (%p290) target = $region32
        $region31: #{tpu_custom_call.1} parent=11 // pred_region
          _
        $region32: #{tpu_custom_call.1} parent=11 // pred_fallthru
          _
        // Predicated region
        $region33: #{tpu_custom_call.1} parent=11 // pred_check
          %p293 = pneg %p174
        $region34: #{tpu_custom_call.1} parent=11 // pred_check_branch
          %295 = sbr.rel (%p293) target = $region36
        $region35: #{tpu_custom_call.1} parent=11 // pred_region
          _
        $region36: #{tpu_custom_call.1} parent=11 // pred_fallthru
          _
        // Predicated region
        $region37: #{tpu_custom_call.1} parent=11 // pred_check
          %p296 = pneg %p195
        $region38: #{tpu_custom_call.1} parent=11 // pred_check_branch
          %298 = sbr.rel (%p296) target = $region40
        $region39: #{tpu_custom_call.1} parent=11 // pred_region
          _
        $region40: #{tpu_custom_call.1} parent=11 // pred_fallthru
          _
        // Predicated region
        $region41: #{tpu_custom_call.1} parent=11 // pred_check
          %p299 = pneg %p216
        $region42: #{tpu_custom_call.1} parent=11 // pred_check_branch
          %301 = sbr.rel (%p299) target = $region44
        $region43: #{tpu_custom_call.1} parent=11 // pred_region
          _
        $region44: #{tpu_custom_call.1} parent=11 // pred_fallthru
          _
        // Predicated region
        $region45: #{tpu_custom_call.1} parent=11 // pred_check
          %p302 = pneg %p237
        $region46: #{tpu_custom_call.1} parent=11 // pred_check_branch
          %304 = sbr.rel (%p302) target = $region48
        $region47: #{tpu_custom_call.1} parent=11 // pred_region
          _
        $region48: #{tpu_custom_call.1} parent=11 // pred_fallthru
          _
      $region12: #{tpu_custom_call.1} parent=5 // pred_fallthru
        _
      %p305 = scmp.lt.s32.totalorder %s22, 2
      // Predicated region
      $region49: #{tpu_custom_call.1} parent=5 // pred_check
        %p306 = pneg %p305
      $region50: #{tpu_custom_call.1} parent=5 // pred_check_branch
        %308 = sbr.rel (%p306) target = $region52
      $region51: #{tpu_custom_call.1} parent=5 // pred_region
        // Predicated region
        $region53: #{tpu_custom_call.1} parent=51 // pred_check
          %p309 = pneg %p42
        $region54: #{tpu_custom_call.1} parent=51 // pred_check_branch
          %311 = sbr.rel (%p309) target = $region56
        $region55: #{tpu_custom_call.1} parent=51 // pred_region
          %s312 = sand.u32 %s32, 1
          %s313 = scalar_lea.sflag [#allocation9], %s312
          %s314 = sand.u32 %s32, 1
          %s315 = smul.addr %s314, 128
          %s316 = scalar_lea.vmem [#allocation8], %s315
          %318 = vsyncadd %s313, 0
          %s319 = smul.addr %s22, 8
          %s320 = scalar_lea.hbm %s0, %s319
          %s321 = sshll.u32 %s320, 4
          %s322 = int_to_ptr.hbm [resolvable:$true] %s321
          %s323 = sshll.u32 %s316, 4
          %s324 = int_to_ptr.vmem [resolvable:$true] %s323
          %329 = dma.hbm_to_vmem [thread:$0]  %s322, 2048, %s324, %s313, 256, 128, 8
        $region56: #{tpu_custom_call.1} parent=51 // pred_fallthru
          _
      $region52: #{tpu_custom_call.1} parent=5 // pred_fallthru
        _
      %p330 = scmp.le.s32.totalorder 1, %s22
      %p331 = scmp.lt.s32.totalorder %s22, 3
      %p332 = pnand %p330, %p331
      %p333 = pneg %p332
      // Predicated region
      $region57: #{tpu_custom_call.1} parent=5 // pred_check
        _
      $region58: #{tpu_custom_call.1} parent=5 // pred_check_branch
        %335 = sbr.rel (%p332) target = $region60
      $region59: #{tpu_custom_call.1} parent=5 // pred_region
        %s336 = ssub.s32 %s22, 1
        %s337 = sand.u32 %s35, 1
        %s338 = scalar_lea.sflag [#allocation9], %s337
        %s339 = sand.u32 %s35, 1
        %s340 = smul.addr %s339, 128
        %s341 = scalar_lea.vmem [#allocation8], %s340
        // Predicated region
        $region61: #{tpu_custom_call.1} parent=59 // pred_check
          %p342 = pneg %p48
        $region62: #{tpu_custom_call.1} parent=59 // pred_check_branch
          %344 = sbr.rel (%p342) target = $region64
        $region63: #{tpu_custom_call.1} parent=59 // pred_region
          %346 = dma.done %s338, 2048
        $region64: #{tpu_custom_call.1} parent=59 // pred_fallthru
          _
        %s347 = sand.u32 %s35, 1
        %s348 = scalar_lea.sflag [#allocation9], %s347
        %s349 = sand.u32 %s35, 1
        %s350 = smul.addr %s349, 128
        %s351 = scalar_lea.vmem [#allocation8], %s350
        %p352 = pneg %p48
        %p353 = pneg %p45
        %p354 = pneg %p69
        %p355 = pneg %p66
        %p356 = pneg %p90
        %p357 = pneg %p87
        %p358 = pneg %p111
        %p359 = pneg %p108
        %p360 = pneg %p132
        %p361 = pneg %p129
        %p362 = pneg %p153
        %p363 = pneg %p150
        %p364 = pneg %p174
        %p365 = pneg %p171
        %p366 = pneg %p195
        %p367 = pneg %p192
        %p368 = pneg %p216
        %p369 = pneg %p213
        %p370 = pneg %p237
        %p371 = pneg %p234
        %p372 = pneg %p263
        %p373 = pneg %p260
        %s374 = sand.u32 %s250, 1
        %s375 = scalar_lea.sflag [#allocation10], %s374
        %s376 = sand.u32 %s250, 1
        %s377 = smul.addr %s376, 128
        %s378 = scalar_lea.vmem [#allocation11], %s377
        %v379 = vld [vmem:[%s341] sm:$0xff]
        %v380 = vld [vmem:[%s341 + $0x8] sm:$0xff]
        %v381 = vld [vmem:[%s341 + $0x10] sm:$0xff]
        %v382 = vld [vmem:[%s341 + $0x18] sm:$0xff]
        %v383 = vld [vmem:[%s341 + $0x20] sm:$0xff]
        %v384 = vld [vmem:[%s341 + $0x28] sm:$0xff]
        %v385 = vld [vmem:[%s341 + $0x30] sm:$0xff]
        %v386 = vld [vmem:[%s341 + $0x38] sm:$0xff]
        %v387 = vld [vmem:[%s341 + $0x40] sm:$0xff]
        %v388 = vld [vmem:[%s341 + $0x48] sm:$0xff]
        %v389 = vld [vmem:[%s341 + $0x50] sm:$0xff]
        %v390 = vld [vmem:[%s341 + $0x58] sm:$0xff]
        %v391 = vld [vmem:[%s341 + $0x60] sm:$0xff]
        %v392 = vld [vmem:[%s341 + $0x68] sm:$0xff]
        %v393 = vld [vmem:[%s341 + $0x70] sm:$0xff]
        %v394 = vld [vmem:[%s341 + $0x78] sm:$0xff]
        %vm395 = vcmask 130048
        %v396 = vsel %vm395, %v379, 0.0
        %397 = vadd.xlane.f32.xlu0 %v396
        %v398 = vpop.xlane.xlu0 %397
        %v399 = vsel %vm395, %v380, 0.0
        %400 = vadd.xlane.f32.xlu0 %v399
        %v401 = vpop.xlane.xlu0 %400
        %v402 = vsel %vm395, %v381, 0.0
        %403 = vadd.xlane.f32.xlu0 %v402
        %v404 = vpop.xlane.xlu0 %403
        %v405 = vsel %vm395, %v382, 0.0
        %406 = vadd.xlane.f32.xlu0 %v405
        %v407 = vpop.xlane.xlu0 %406
        %v408 = vsel %vm395, %v383, 0.0
        %409 = vadd.xlane.f32.xlu0 %v408
        %v410 = vpop.xlane.xlu0 %409
        %v411 = vsel %vm395, %v384, 0.0
        %412 = vadd.xlane.f32.xlu0 %v411
        %v413 = vpop.xlane.xlu0 %412
        %v414 = vsel %vm395, %v385, 0.0
        %415 = vadd.xlane.f32.xlu0 %v414
        %v416 = vpop.xlane.xlu0 %415
        %v417 = vsel %vm395, %v386, 0.0
        %418 = vadd.xlane.f32.xlu0 %v417
        %v419 = vpop.xlane.xlu0 %418
        %v420 = vsel %vm395, %v387, 0.0
        %421 = vadd.xlane.f32.xlu0 %v420
        %v422 = vpop.xlane.xlu0 %421
        %v423 = vsel %vm395, %v388, 0.0
        %424 = vadd.xlane.f32.xlu0 %v423
        %v425 = vpop.xlane.xlu0 %424
        %v426 = vsel %vm395, %v389, 0.0
        %427 = vadd.xlane.f32.xlu0 %v426
        %v428 = vpop.xlane.xlu0 %427
        %v429 = vsel %vm395, %v390, 0.0
        %430 = vadd.xlane.f32.xlu0 %v429
        %v431 = vpop.xlane.xlu0 %430
        %v432 = vsel %vm395, %v391, 0.0
        %433 = vadd.xlane.f32.xlu0 %v432
        %v434 = vpop.xlane.xlu0 %433
        %v435 = vsel %vm395, %v392, 0.0
        %436 = vadd.xlane.f32.xlu0 %v435
        %v437 = vpop.xlane.xlu0 %436
        %v438 = vsel %vm395, %v393, 0.0
        %439 = vadd.xlane.f32.xlu0 %v438
        %v440 = vpop.xlane.xlu0 %439
        %v441 = vsel %vm395, %v394, 0.0
        %442 = vadd.xlane.f32.xlu0 %v441
        %v443 = vpop.xlane.xlu0 %442
        %v444 = vrcp.pop 16.0
        %v445 = vmul.f32 16.0, %v444
        %v446 = vsub.f32 1.0, %v445
        %v447 = vmul.f32 %v444, %v446
        %v448 = vadd.f32 %v444, %v447
        %vm449 = vweird.f32 %v444
        %v450 = vsel %vm449, %v444, %v448
        %v451 = vmul.f32 %v398, %v450
        %v452 = vmul.f32 %v401, %v450
        %v453 = vmul.f32 %v404, %v450
        %v454 = vmul.f32 %v407, %v450
        %v455 = vmul.f32 %v410, %v450
        %v456 = vmul.f32 %v413, %v450
        %v457 = vmul.f32 %v416, %v450
        %v458 = vmul.f32 %v419, %v450
        %v459 = vmul.f32 %v422, %v450
        %v460 = vmul.f32 %v425, %v450
        %v461 = vmul.f32 %v428, %v450
        %v462 = vmul.f32 %v431, %v450
        %v463 = vmul.f32 %v434, %v450
        %v464 = vmul.f32 %v437, %v450
        %v465 = vmul.f32 %v440, %v450
        %v466 = vmul.f32 %v443, %v450
        %v467 = vsub.f32 %v379, %v451
        %v468 = vsub.f32 %v380, %v452
        %v469 = vsub.f32 %v381, %v453
        %v470 = vsub.f32 %v382, %v454
        %v471 = vsub.f32 %v383, %v455
        %v472 = vsub.f32 %v384, %v456
        %v473 = vsub.f32 %v385, %v457
        %v474 = vsub.f32 %v386, %v458
        %v475 = vsub.f32 %v387, %v459
        %v476 = vsub.f32 %v388, %v460
        %v477 = vsub.f32 %v389, %v461
        %v478 = vsub.f32 %v390, %v462
        %v479 = vsub.f32 %v391, %v463
        %v480 = vsub.f32 %v392, %v464
        %v481 = vsub.f32 %v393, %v465
        %v482 = vsub.f32 %v394, %v466
        %v483 = vmul.f32 %v467, %v467
        %v484 = vmul.f32 %v468, %v468
        %v485 = vmul.f32 %v469, %v469
        %v486 = vmul.f32 %v470, %v470
        %v487 = vmul.f32 %v471, %v471
        %v488 = vmul.f32 %v472, %v472
        %v489 = vmul.f32 %v473, %v473
        %v490 = vmul.f32 %v474, %v474
        %v491 = vmul.f32 %v475, %v475
        %v492 = vmul.f32 %v476, %v476
        %v493 = vmul.f32 %v477, %v477
        %v494 = vmul.f32 %v478, %v478
        %v495 = vmul.f32 %v479, %v479
        %v496 = vmul.f32 %v480, %v480
        %v497 = vmul.f32 %v481, %v481
        %v498 = vmul.f32 %v482, %v482
        %v499 = vsel %vm395, %v483, 0.0
        %500 = vadd.xlane.f32.xlu0 %v499
        %v501 = vpop.xlane.xlu0 %500
        %v502 = vsel %vm395, %v484, 0.0
        %503 = vadd.xlane.f32.xlu0 %v502
        %v504 = vpop.xlane.xlu0 %503
        %v505 = vsel %vm395, %v485, 0.0
        %506 = vadd.xlane.f32.xlu0 %v505
        %v507 = vpop.xlane.xlu0 %506
        %v508 = vsel %vm395, %v486, 0.0
        %509 = vadd.xlane.f32.xlu0 %v508
        %v510 = vpop.xlane.xlu0 %509
        %v511 = vsel %vm395, %v487, 0.0
        %512 = vadd.xlane.f32.xlu0 %v511
        %v513 = vpop.xlane.xlu0 %512
        %v514 = vsel %vm395, %v488, 0.0
        %515 = vadd.xlane.f32.xlu0 %v514
        %v516 = vpop.xlane.xlu0 %515
        %v517 = vsel %vm395, %v489, 0.0
        %518 = vadd.xlane.f32.xlu0 %v517
        %v519 = vpop.xlane.xlu0 %518
        %v520 = vsel %vm395, %v490, 0.0
        %521 = vadd.xlane.f32.xlu0 %v520
        %v522 = vpop.xlane.xlu0 %521
        %v523 = vsel %vm395, %v491, 0.0
        %524 = vadd.xlane.f32.xlu0 %v523
        %v525 = vpop.xlane.xlu0 %524
        %v526 = vsel %vm395, %v492, 0.0
        %527 = vadd.xlane.f32.xlu0 %v526
        %v528 = vpop.xlane.xlu0 %527
        %v529 = vsel %vm395, %v493, 0.0
        %530 = vadd.xlane.f32.xlu0 %v529
        %v531 = vpop.xlane.xlu0 %530
        %v532 = vsel %vm395, %v494, 0.0
        %533 = vadd.xlane.f32.xlu0 %v532
        %v534 = vpop.xlane.xlu0 %533
        %v535 = vsel %vm395, %v495, 0.0
        %536 = vadd.xlane.f32.xlu0 %v535
        %v537 = vpop.xlane.xlu0 %536
        %v538 = vsel %vm395, %v496, 0.0
        %539 = vadd.xlane.f32.xlu0 %v538
        %v540 = vpop.xlane.xlu0 %539
        %v541 = vsel %vm395, %v497, 0.0
        %542 = vadd.xlane.f32.xlu0 %v541
        %v543 = vpop.xlane.xlu0 %542
        %v544 = vsel %vm395, %v498, 0.0
        %545 = vadd.xlane.f32.xlu0 %v544
        %v546 = vpop.xlane.xlu0 %545
        %v547 = vmul.f32 %v501, %v450
        %v548 = vmul.f32 %v504, %v450
        %v549 = vmul.f32 %v507, %v450
        %v550 = vmul.f32 %v510, %v450
        %v551 = vmul.f32 %v513, %v450
        %v552 = vmul.f32 %v516, %v450
        %v553 = vmul.f32 %v519, %v450
        %v554 = vmul.f32 %v522, %v450
        %v555 = vmul.f32 %v525, %v450
        %v556 = vmul.f32 %v528, %v450
        %v557 = vmul.f32 %v531, %v450
        %v558 = vmul.f32 %v534, %v450
        %v559 = vmul.f32 %v537, %v450
        %v560 = vmul.f32 %v540, %v450
        %v561 = vmul.f32 %v543, %v450
        %v562 = vmul.f32 %v546, %v450
        %v563 = vadd.f32 %v547, 1e-05
        %v564 = vadd.f32 %v548, 1e-05
        %v565 = vadd.f32 %v549, 1e-05
        %v566 = vadd.f32 %v550, 1e-05
        %v567 = vadd.f32 %v551, 1e-05
        %v568 = vadd.f32 %v552, 1e-05
        %v569 = vadd.f32 %v553, 1e-05
        %v570 = vadd.f32 %v554, 1e-05
        %v571 = vadd.f32 %v555, 1e-05
        %v572 = vadd.f32 %v556, 1e-05
        %v573 = vadd.f32 %v557, 1e-05
        %v574 = vadd.f32 %v558, 1e-05
        %v575 = vadd.f32 %v559, 1e-05
        %v576 = vadd.f32 %v560, 1e-05
        %v577 = vadd.f32 %v561, 1e-05
        %v578 = vadd.f32 %v562, 1e-05
        %v579 = vrsqrt.pop %v563
        %v580 = vmul.f32 %v579, %v563
        %v581 = vmul.f32 %v580, %v579
        %v582 = vmul.f32 0.5, %v581
        %v583 = vsub.f32 1.5, %v582
        %v584 = vmul.f32 %v579, %v583
        %vm585 = vweird.f32 %v563
        %vm586 = vweird.f32 %v579
        %vm587 = vmor %vm585, %vm586
        %v588 = vsel %vm587, %v579, %v584
        %v589 = vrsqrt.pop %v564
        %v590 = vmul.f32 %v589, %v564
        %v591 = vmul.f32 %v590, %v589
        %v592 = vmul.f32 0.5, %v591
        %v593 = vsub.f32 1.5, %v592
        %v594 = vmul.f32 %v589, %v593
        %vm595 = vweird.f32 %v564
        %vm596 = vweird.f32 %v589
        %vm597 = vmor %vm595, %vm596
        %v598 = vsel %vm597, %v589, %v594
        %v599 = vrsqrt.pop %v565
        %v600 = vmul.f32 %v599, %v565
        %v601 = vmul.f32 %v600, %v599
        %v602 = vmul.f32 0.5, %v601
        %v603 = vsub.f32 1.5, %v602
        %v604 = vmul.f32 %v599, %v603
        %vm605 = vweird.f32 %v565
        %vm606 = vweird.f32 %v599
        %vm607 = vmor %vm605, %vm606
        %v608 = vsel %vm607, %v599, %v604
        %v609 = vrsqrt.pop %v566
        %v610 = vmul.f32 %v609, %v566
        %v611 = vmul.f32 %v610, %v609
        %v612 = vmul.f32 0.5, %v611
        %v613 = vsub.f32 1.5, %v612
        %v614 = vmul.f32 %v609, %v613
        %vm615 = vweird.f32 %v566
        %vm616 = vweird.f32 %v609
        %vm617 = vmor %vm615, %vm616
        %v618 = vsel %vm617, %v609, %v614
        %v619 = vrsqrt.pop %v567
        %v620 = vmul.f32 %v619, %v567
        %v621 = vmul.f32 %v620, %v619
        %v622 = vmul.f32 0.5, %v621
        %v623 = vsub.f32 1.5, %v622
        %v624 = vmul.f32 %v619, %v623
        %vm625 = vweird.f32 %v567
        %vm626 = vweird.f32 %v619
        %vm627 = vmor %vm625, %vm626
        %v628 = vsel %vm627, %v619, %v624
        %v629 = vrsqrt.pop %v568
        %v630 = vmul.f32 %v629, %v568
        %v631 = vmul.f32 %v630, %v629
        %v632 = vmul.f32 0.5, %v631
        %v633 = vsub.f32 1.5, %v632
        %v634 = vmul.f32 %v629, %v633
        %vm635 = vweird.f32 %v568
        %vm636 = vweird.f32 %v629
        %vm637 = vmor %vm635, %vm636
        %v638 = vsel %vm637, %v629, %v634
        %v639 = vrsqrt.pop %v569
        %v640 = vmul.f32 %v639, %v569
        %v641 = vmul.f32 %v640, %v639
        %v642 = vmul.f32 0.5, %v641
        %v643 = vsub.f32 1.5, %v642
        %v644 = vmul.f32 %v639, %v643
        %vm645 = vweird.f32 %v569
        %vm646 = vweird.f32 %v639
        %vm647 = vmor %vm645, %vm646
        %v648 = vsel %vm647, %v639, %v644
        %v649 = vrsqrt.pop %v570
        %v650 = vmul.f32 %v649, %v570
        %v651 = vmul.f32 %v650, %v649
        %v652 = vmul.f32 0.5, %v651
        %v653 = vsub.f32 1.5, %v652
        %v654 = vmul.f32 %v649, %v653
        %vm655 = vweird.f32 %v570
        %vm656 = vweird.f32 %v649
        %vm657 = vmor %vm655, %vm656
        %v658 = vsel %vm657, %v649, %v654
        %v659 = vrsqrt.pop %v571
        %v660 = vmul.f32 %v659, %v571
        %v661 = vmul.f32 %v660, %v659
        %v662 = vmul.f32 0.5, %v661
        %v663 = vsub.f32 1.5, %v662
        %v664 = vmul.f32 %v659, %v663
        %vm665 = vweird.f32 %v571
        %vm666 = vweird.f32 %v659
        %vm667 = vmor %vm665, %vm666
        %v668 = vsel %vm667, %v659, %v664
        %v669 = vrsqrt.pop %v572
        %v670 = vmul.f32 %v669, %v572
        %v671 = vmul.f32 %v670, %v669
        %v672 = vmul.f32 0.5, %v671
        %v673 = vsub.f32 1.5, %v672
        %v674 = vmul.f32 %v669, %v673
        %vm675 = vweird.f32 %v572
        %vm676 = vweird.f32 %v669
        %vm677 = vmor %vm675, %vm676
        %v678 = vsel %vm677, %v669, %v674
        %v679 = vrsqrt.pop %v573
        %v680 = vmul.f32 %v679, %v573
        %v681 = vmul.f32 %v680, %v679
        %v682 = vmul.f32 0.5, %v681
        %v683 = vsub.f32 1.5, %v682
        %v684 = vmul.f32 %v679, %v683
        %vm685 = vweird.f32 %v573
        %vm686 = vweird.f32 %v679
        %vm687 = vmor %vm685, %vm686
        %v688 = vsel %vm687, %v679, %v684
        %v689 = vrsqrt.pop %v574
        %v690 = vmul.f32 %v689, %v574
        %v691 = vmul.f32 %v690, %v689
        %v692 = vmul.f32 0.5, %v691
        %v693 = vsub.f32 1.5, %v692
        %v694 = vmul.f32 %v689, %v693
        %vm695 = vweird.f32 %v574
        %vm696 = vweird.f32 %v689
        %vm697 = vmor %vm695, %vm696
        %v698 = vsel %vm697, %v689, %v694
        %v699 = vrsqrt.pop %v575
        %v700 = vmul.f32 %v699, %v575
        %v701 = vmul.f32 %v700, %v699
        %v702 = vmul.f32 0.5, %v701
        %v703 = vsub.f32 1.5, %v702
        %v704 = vmul.f32 %v699, %v703
        %vm705 = vweird.f32 %v575
        %vm706 = vweird.f32 %v699
        %vm707 = vmor %vm705, %vm706
        %v708 = vsel %vm707, %v699, %v704
        %v709 = vrsqrt.pop %v576
        %v710 = vmul.f32 %v709, %v576
        %v711 = vmul.f32 %v710, %v709
        %v712 = vmul.f32 0.5, %v711
        %v713 = vsub.f32 1.5, %v712
        %v714 = vmul.f32 %v709, %v713
        %vm715 = vweird.f32 %v576
        %vm716 = vweird.f32 %v709
        %vm717 = vmor %vm715, %vm716
        %v718 = vsel %vm717, %v709, %v714
        %v719 = vrsqrt.pop %v577
        %v720 = vmul.f32 %v719, %v577
        %v721 = vmul.f32 %v720, %v719
        %v722 = vmul.f32 0.5, %v721
        %v723 = vsub.f32 1.5, %v722
        %v724 = vmul.f32 %v719, %v723
        %vm725 = vweird.f32 %v577
        %vm726 = vweird.f32 %v719
        %vm727 = vmor %vm725, %vm726
        %v728 = vsel %vm727, %v719, %v724
        %v729 = vrsqrt.pop %v578
        %v730 = vmul.f32 %v729, %v578
        %v731 = vmul.f32 %v730, %v729
        %v732 = vmul.f32 0.5, %v731
        %v733 = vsub.f32 1.5, %v732
        %v734 = vmul.f32 %v729, %v733
        %vm735 = vweird.f32 %v578
        %vm736 = vweird.f32 %v729
        %vm737 = vmor %vm735, %vm736
        %v738 = vsel %vm737, %v729, %v734
        %v739 = vmul.f32 %v467, %v588
        %v740 = vmul.f32 %v468, %v598
        %v741 = vmul.f32 %v469, %v608
        %v742 = vmul.f32 %v470, %v618
        %v743 = vmul.f32 %v471, %v628
        %v744 = vmul.f32 %v472, %v638
        %v745 = vmul.f32 %v473, %v648
        %v746 = vmul.f32 %v474, %v658
        %v747 = vmul.f32 %v475, %v668
        %v748 = vmul.f32 %v476, %v678
        %v749 = vmul.f32 %v477, %v688
        %v750 = vmul.f32 %v478, %v698
        %v751 = vmul.f32 %v479, %v708
        %v752 = vmul.f32 %v480, %v718
        %v753 = vmul.f32 %v481, %v728
        %v754 = vmul.f32 %v482, %v738
        %v755 = vld [vmem:[%s1] sm:$0x1]
        %v756 = vperm.slane %v755, 0
        %v757 = vmul.f32 %v739, %v756
        %v758 = vmul.f32 %v740, %v756
        %v759 = vmul.f32 %v741, %v756
        %v760 = vmul.f32 %v742, %v756
        %v761 = vmul.f32 %v743, %v756
        %v762 = vmul.f32 %v744, %v756
        %v763 = vmul.f32 %v745, %v756
        %v764 = vmul.f32 %v746, %v756
        %v765 = vmul.f32 %v747, %v756
        %v766 = vmul.f32 %v748, %v756
        %v767 = vmul.f32 %v749, %v756
        %v768 = vmul.f32 %v750, %v756
        %v769 = vmul.f32 %v751, %v756
        %v770 = vmul.f32 %v752, %v756
        %v771 = vmul.f32 %v753, %v756
        %v772 = vmul.f32 %v754, %v756
        %v773 = vld [vmem:[%s1 + $0x1] sm:$0x1]
        %v774 = vperm.slane %v773, 0
        %v775 = vadd.f32 %v757, %v774
        %v776 = vadd.f32 %v758, %v774
        %v777 = vadd.f32 %v759, %v774
        %v778 = vadd.f32 %v760, %v774
        %v779 = vadd.f32 %v761, %v774
        %v780 = vadd.f32 %v762, %v774
        %v781 = vadd.f32 %v763, %v774
        %v782 = vadd.f32 %v764, %v774
        %v783 = vadd.f32 %v765, %v774
        %v784 = vadd.f32 %v766, %v774
        %v785 = vadd.f32 %v767, %v774
        %v786 = vadd.f32 %v768, %v774
        %v787 = vadd.f32 %v769, %v774
        %v788 = vadd.f32 %v770, %v774
        %v789 = vadd.f32 %v771, %v774
        %v790 = vadd.f32 %v772, %v774
        %v791 = vld [vmem:[%s2] sm:$0xff]
        %v792 = vld [vmem:[%s2 + $0x8] sm:$0xff]
        %v794 = vsel %vm395, %v775, 0
        %v797 = vsel %vm395, %v776, 0
        %v800 = vsel %vm395, %v777, 0
        %v803 = vsel %vm395, %v778, 0
        %v806 = vsel %vm395, %v779, 0
        %v809 = vsel %vm395, %v780, 0
        %v812 = vsel %vm395, %v781, 0
        %v815 = vsel %vm395, %v782, 0
        %v818 = vsel %vm395, %v783, 0
        %v821 = vsel %vm395, %v784, 0
        %v824 = vsel %vm395, %v785, 0
        %v827 = vsel %vm395, %v786, 0
        %v830 = vsel %vm395, %v787, 0
        %v833 = vsel %vm395, %v788, 0
        %v836 = vsel %vm395, %v789, 0
        %v839 = vsel %vm395, %v790, 0
        %841 = vmatpush.msra.mxu0 0.0
        %842 = vmatpush.msra.mxu0 0.0
        %843 = vmatpush.msra.mxu0 0.0
        %844 = vmatpush.msra.mxu0 0.0
        %845 = vmatpush.msra.mxu0 0.0
        %846 = vmatpush.msra.mxu0 0.0
        %847 = vmatpush.msra.mxu0 0.0
        %848 = vmatpush.msra.mxu0 0.0
        %849 = vmatpush.msra.mxu0 0.0
        %850 = vmatpush.msra.mxu0 0.0
        %851 = vmatpush.msra.mxu0 0.0
        %852 = vmatpush.msra.mxu0 0.0
        %853 = vmatpush.msra.mxu0 0.0
        %854 = vmatpush.msra.mxu0 0.0
        %855 = vmatpush.msra.mxu0 %v792
        %856 = vmatpush.msra.mxu0 %v791
        %857 = vmatmul.f32.gmra.mxu0 %v794
        %v858 = vpop.f32.mrf.mxu0
        %v859 = vadd.f32 0.0, %v858
        %860 = vmatmul.f32.gmra.mxu0 %v797
        %v861 = vpop.f32.mrf.mxu0
        %v862 = vadd.f32 0.0, %v861
        %863 = vmatmul.f32.gmra.mxu0 %v800
        %v864 = vpop.f32.mrf.mxu0
        %v865 = vadd.f32 0.0, %v864
        %866 = vmatmul.f32.gmra.mxu0 %v803
        %v867 = vpop.f32.mrf.mxu0
        %v868 = vadd.f32 0.0, %v867
        %869 = vmatmul.f32.gmra.mxu0 %v806
        %v870 = vpop.f32.mrf.mxu0
        %v871 = vadd.f32 0.0, %v870
        %872 = vmatmul.f32.gmra.mxu0 %v809
        %v873 = vpop.f32.mrf.mxu0
        %v874 = vadd.f32 0.0, %v873
        %875 = vmatmul.f32.gmra.mxu0 %v812
        %v876 = vpop.f32.mrf.mxu0
        %v877 = vadd.f32 0.0, %v876
        %878 = vmatmul.f32.gmra.mxu0 %v815
        %v879 = vpop.f32.mrf.mxu0
        %v880 = vadd.f32 0.0, %v879
        %881 = vmatmul.f32.gmra.mxu0 %v818
        %v882 = vpop.f32.mrf.mxu0
        %v883 = vadd.f32 0.0, %v882
        %884 = vmatmul.f32.gmra.mxu0 %v821
        %v885 = vpop.f32.mrf.mxu0
        %v886 = vadd.f32 0.0, %v885
        %887 = vmatmul.f32.gmra.mxu0 %v824
        %v888 = vpop.f32.mrf.mxu0
        %v889 = vadd.f32 0.0, %v888
        %890 = vmatmul.f32.gmra.mxu0 %v827
        %v891 = vpop.f32.mrf.mxu0
        %v892 = vadd.f32 0.0, %v891
        %893 = vmatmul.f32.gmra.mxu0 %v830
        %v894 = vpop.f32.mrf.mxu0
        %v895 = vadd.f32 0.0, %v894
        %896 = vmatmul.f32.gmra.mxu0 %v833
        %v897 = vpop.f32.mrf.mxu0
        %v898 = vadd.f32 0.0, %v897
        %899 = vmatmul.f32.gmra.mxu0 %v836
        %v900 = vpop.f32.mrf.mxu0
        %v901 = vadd.f32 0.0, %v900
        %902 = vmatmul.f32.gmra.mxu0 %v839
        %v903 = vpop.f32.mrf.mxu0
        %v904 = vadd.f32 0.0, %v903
        %905 = vdwg.mxu0
        %v906 = vld [vmem:[%s3 + $0x3] sm:$0x1]
        %v907 = vperm.slane %v906, 0
        %v908 = vmul.f32 %v859, %v907
        %v909 = vmul.f32 %v862, %v907
        %v910 = vmul.f32 %v865, %v907
        %v911 = vmul.f32 %v868, %v907
        %v912 = vmul.f32 %v871, %v907
        %v913 = vmul.f32 %v874, %v907
        %v914 = vmul.f32 %v877, %v907
        %v915 = vmul.f32 %v880, %v907
        %v916 = vmul.f32 %v883, %v907
        %v917 = vmul.f32 %v886, %v907
        %v918 = vmul.f32 %v889, %v907
        %v919 = vmul.f32 %v892, %v907
        %v920 = vmul.f32 %v895, %v907
        %v921 = vmul.f32 %v898, %v907
        %v922 = vmul.f32 %v901, %v907
        %v923 = vmul.f32 %v904, %v907
        %v924 = vld [vmem:[%s3 + $0x2] sm:$0x1]
        %v925 = vperm.slane %v924, 0
        %v926 = vmul.f32 %v925, 0.0
        %v927 = vmul.f32 %v859, %v925
        %v928 = vmul.f32 %v862, %v925
        %v929 = vmul.f32 %v865, %v925
        %v930 = vmul.f32 %v868, %v925
        %v931 = vmul.f32 %v871, %v925
        %v932 = vmul.f32 %v874, %v925
        %v933 = vmul.f32 %v877, %v925
        %v934 = vmul.f32 %v880, %v925
        %v935 = vmul.f32 %v883, %v925
        %v936 = vmul.f32 %v886, %v925
        %v937 = vmul.f32 %v889, %v925
        %v938 = vmul.f32 %v892, %v925
        %v939 = vmul.f32 %v895, %v925
        %v940 = vmul.f32 %v898, %v925
        %v941 = vmul.f32 %v901, %v925
        %v942 = vadd.f32 %v908, %v926
        %v943 = vadd.f32 %v909, %v927
        %v944 = vadd.f32 %v910, %v928
        %v945 = vadd.f32 %v911, %v929
        %v946 = vadd.f32 %v912, %v930
        %v947 = vadd.f32 %v913, %v931
        %v948 = vadd.f32 %v914, %v932
        %v949 = vadd.f32 %v915, %v933
        %v950 = vadd.f32 %v916, %v934
        %v951 = vadd.f32 %v917, %v935
        %v952 = vadd.f32 %v918, %v936
        %v953 = vadd.f32 %v919, %v937
        %v954 = vadd.f32 %v920, %v938
        %v955 = vadd.f32 %v921, %v939
        %v956 = vadd.f32 %v922, %v940
        %v957 = vadd.f32 %v923, %v941
        %v958 = vld [vmem:[%s3 + $0x1] sm:$0x1]
        %v959 = vperm.slane %v958, 0
        %v960 = vmul.f32 %v959, 0.0
        %v961 = vmul.f32 %v859, %v959
        %v962 = vmul.f32 %v862, %v959
        %v963 = vmul.f32 %v865, %v959
        %v964 = vmul.f32 %v868, %v959
        %v965 = vmul.f32 %v871, %v959
        %v966 = vmul.f32 %v874, %v959
        %v967 = vmul.f32 %v877, %v959
        %v968 = vmul.f32 %v880, %v959
        %v969 = vmul.f32 %v883, %v959
        %v970 = vmul.f32 %v886, %v959
        %v971 = vmul.f32 %v889, %v959
        %v972 = vmul.f32 %v892, %v959
        %v973 = vmul.f32 %v895, %v959
        %v974 = vmul.f32 %v898, %v959
        %v975 = vadd.f32 %v942, %v960
        %v976 = vadd.f32 %v943, %v960
        %v977 = vadd.f32 %v944, %v961
        %v978 = vadd.f32 %v945, %v962
        %v979 = vadd.f32 %v946, %v963
        %v980 = vadd.f32 %v947, %v964
        %v981 = vadd.f32 %v948, %v965
        %v982 = vadd.f32 %v949, %v966
        %v983 = vadd.f32 %v950, %v967
        %v984 = vadd.f32 %v951, %v968
        %v985 = vadd.f32 %v952, %v969
        %v986 = vadd.f32 %v953, %v970
        %v987 = vadd.f32 %v954, %v971
        %v988 = vadd.f32 %v955, %v972
        %v989 = vadd.f32 %v956, %v973
        %v990 = vadd.f32 %v957, %v974
        %v991 = vld [vmem:[%s3] sm:$0x1]
        %v992 = vperm.slane %v991, 0
        %v993 = vmul.f32 %v992, 0.0
        %v994 = vmul.f32 %v859, %v992
        %v995 = vmul.f32 %v862, %v992
        %v996 = vmul.f32 %v865, %v992
        %v997 = vmul.f32 %v868, %v992
        %v998 = vmul.f32 %v871, %v992
        %v999 = vmul.f32 %v874, %v992
        %v1000 = vmul.f32 %v877, %v992
        %v1001 = vmul.f32 %v880, %v992
        %v1002 = vmul.f32 %v883, %v992
        %v1003 = vmul.f32 %v886, %v992
        %v1004 = vmul.f32 %v889, %v992
        %v1005 = vmul.f32 %v892, %v992
        %v1006 = vmul.f32 %v895, %v992
        %v1007 = vadd.f32 %v975, %v993
        %v1008 = vadd.f32 %v976, %v993
        %v1009 = vadd.f32 %v977, %v993
        %v1010 = vadd.f32 %v978, %v994
        %v1011 = vadd.f32 %v979, %v995
        %v1012 = vadd.f32 %v980, %v996
        %v1013 = vadd.f32 %v981, %v997
        %v1014 = vadd.f32 %v982, %v998
        %v1015 = vadd.f32 %v983, %v999
        %v1016 = vadd.f32 %v984, %v1000
        %v1017 = vadd.f32 %v985, %v1001
        %v1018 = vadd.f32 %v986, %v1002
        %v1019 = vadd.f32 %v987, %v1003
        %v1020 = vadd.f32 %v988, %v1004
        %v1021 = vadd.f32 %v989, %v1005
        %v1022 = vadd.f32 %v990, %v1006
        %v1023 = vld [vmem:[%s4] sm:$0x1]
        %v1024 = vperm.slane %v1023, 0
        %v1025 = vadd.f32 %v1007, %v1024
        %v1026 = vadd.f32 %v1008, %v1024
        %v1027 = vadd.f32 %v1009, %v1024
        %v1028 = vadd.f32 %v1010, %v1024
        %v1029 = vadd.f32 %v1011, %v1024
        %v1030 = vadd.f32 %v1012, %v1024
        %v1031 = vadd.f32 %v1013, %v1024
        %v1032 = vadd.f32 %v1014, %v1024
        %v1033 = vadd.f32 %v1015, %v1024
        %v1034 = vadd.f32 %v1016, %v1024
        %v1035 = vadd.f32 %v1017, %v1024
        %v1036 = vadd.f32 %v1018, %v1024
        %v1037 = vadd.f32 %v1019, %v1024
        %v1038 = vadd.f32 %v1020, %v1024
        %v1039 = vadd.f32 %v1021, %v1024
        %v1040 = vadd.f32 %v1022, %v1024
        %v1041 = vxor.u32 %v1025, 2147483648
        %v1042 = vxor.u32 %v1026, 2147483648
        %v1043 = vxor.u32 %v1027, 2147483648
        %v1044 = vxor.u32 %v1028, 2147483648
        %v1045 = vxor.u32 %v1029, 2147483648
        %v1046 = vxor.u32 %v1030, 2147483648
        %v1047 = vxor.u32 %v1031, 2147483648
        %v1048 = vxor.u32 %v1032, 2147483648
        %v1049 = vxor.u32 %v1033, 2147483648
        %v1050 = vxor.u32 %v1034, 2147483648
        %v1051 = vxor.u32 %v1035, 2147483648
        %v1052 = vxor.u32 %v1036, 2147483648
        %v1053 = vxor.u32 %v1037, 2147483648
        %v1054 = vxor.u32 %v1038, 2147483648
        %v1055 = vxor.u32 %v1039, 2147483648
        %v1056 = vxor.u32 %v1040, 2147483648
        %v1057 = vmul.f32 %v1041, 1.442695
        %v1058 = vpow.pop %v1057
        %v1059 = vmul.f32 %v1042, 1.442695
        %v1060 = vpow.pop %v1059
        %v1061 = vmul.f32 %v1043, 1.442695
        %v1062 = vpow.pop %v1061
        %v1063 = vmul.f32 %v1044, 1.442695
        %v1064 = vpow.pop %v1063
        %v1065 = vmul.f32 %v1045, 1.442695
        %v1066 = vpow.pop %v1065
        %v1067 = vmul.f32 %v1046, 1.442695
        %v1068 = vpow.pop %v1067
        %v1069 = vmul.f32 %v1047, 1.442695
        %v1070 = vpow.pop %v1069
        %v1071 = vmul.f32 %v1048, 1.442695
        %v1072 = vpow.pop %v1071
        %v1073 = vmul.f32 %v1049, 1.442695
        %v1074 = vpow.pop %v1073
        %v1075 = vmul.f32 %v1050, 1.442695
        %v1076 = vpow.pop %v1075
        %v1077 = vmul.f32 %v1051, 1.442695
        %v1078 = vpow.pop %v1077
        %v1079 = vmul.f32 %v1052, 1.442695
        %v1080 = vpow.pop %v1079
        %v1081 = vmul.f32 %v1053, 1.442695
        %v1082 = vpow.pop %v1081
        %v1083 = vmul.f32 %v1054, 1.442695
        %v1084 = vpow.pop %v1083
        %v1085 = vmul.f32 %v1055, 1.442695
        %v1086 = vpow.pop %v1085
        %v1087 = vmul.f32 %v1056, 1.442695
        %v1088 = vpow.pop %v1087
        %v1089 = vadd.f32 %v1058, 1.0
        %v1090 = vadd.f32 %v1060, 1.0
        %v1091 = vadd.f32 %v1062, 1.0
        %v1092 = vadd.f32 %v1064, 1.0
        %v1093 = vadd.f32 %v1066, 1.0
        %v1094 = vadd.f32 %v1068, 1.0
        %v1095 = vadd.f32 %v1070, 1.0
        %v1096 = vadd.f32 %v1072, 1.0
        %v1097 = vadd.f32 %v1074, 1.0
        %v1098 = vadd.f32 %v1076, 1.0
        %v1099 = vadd.f32 %v1078, 1.0
        %v1100 = vadd.f32 %v1080, 1.0
        %v1101 = vadd.f32 %v1082, 1.0
        %v1102 = vadd.f32 %v1084, 1.0
        %v1103 = vadd.f32 %v1086, 1.0
        %v1104 = vadd.f32 %v1088, 1.0
        %v1105 = vrcp.pop %v1089
        %v1106 = vmul.f32 %v1089, %v1105
        %v1107 = vsub.f32 1.0, %v1106
        %v1108 = vmul.f32 %v1105, %v1107
        %v1109 = vadd.f32 %v1105, %v1108
        %vm1110 = vweird.f32 %v1089
        %vm1111 = vweird.f32 %v1105
        %vm1112 = vmor %vm1110, %vm1111
        %v1113 = vsel %vm1112, %v1105, %v1109
        %v1114 = vand.u32 2147483647, %v1089
        %vm1115 = vcmp.eq.f32.partialorder %v1114, 8.507059e+37
        %v1116 = vand.u32 %v1089, 2147483648
        %v1117 = vor.u32 1.1754944e-38, %v1116
        %v1118 = vsel %vm1115, %v1117, %v1113
        %v1119 = vmul.f32 1.0, %v1118
        %v1120 = vrcp.pop %v1090
        %v1121 = vmul.f32 %v1090, %v1120
        %v1122 = vsub.f32 1.0, %v1121
        %v1123 = vmul.f32 %v1120, %v1122
        %v1124 = vadd.f32 %v1120, %v1123
        %vm1125 = vweird.f32 %v1090
        %vm1126 = vweird.f32 %v1120
        %vm1127 = vmor %vm1125, %vm1126
        %v1128 = vsel %vm1127, %v1120, %v1124
        %v1129 = vand.u32 2147483647, %v1090
        %vm1130 = vcmp.eq.f32.partialorder %v1129, 8.507059e+37
        %v1131 = vand.u32 %v1090, 2147483648
        %v1132 = vor.u32 1.1754944e-38, %v1131
        %v1133 = vsel %vm1130, %v1132, %v1128
        %v1134 = vmul.f32 1.0, %v1133
        %v1135 = vrcp.pop %v1091
        %v1136 = vmul.f32 %v1091, %v1135
        %v1137 = vsub.f32 1.0, %v1136
        %v1138 = vmul.f32 %v1135, %v1137
        %v1139 = vadd.f32 %v1135, %v1138
        %vm1140 = vweird.f32 %v1091
        %vm1141 = vweird.f32 %v1135
        %vm1142 = vmor %vm1140, %vm1141
        %v1143 = vsel %vm1142, %v1135, %v1139
        %v1144 = vand.u32 2147483647, %v1091
        %vm1145 = vcmp.eq.f32.partialorder %v1144, 8.507059e+37
        %v1146 = vand.u32 %v1091, 2147483648
        %v1147 = vor.u32 1.1754944e-38, %v1146
        %v1148 = vsel %vm1145, %v1147, %v1143
        %v1149 = vmul.f32 1.0, %v1148
        %v1150 = vrcp.pop %v1092
        %v1151 = vmul.f32 %v1092, %v1150
        %v1152 = vsub.f32 1.0, %v1151
        %v1153 = vmul.f32 %v1150, %v1152
        %v1154 = vadd.f32 %v1150, %v1153
        %vm1155 = vweird.f32 %v1092
        %vm1156 = vweird.f32 %v1150
        %vm1157 = vmor %vm1155, %vm1156
        %v1158 = vsel %vm1157, %v1150, %v1154
        %v1159 = vand.u32 2147483647, %v1092
        %vm1160 = vcmp.eq.f32.partialorder %v1159, 8.507059e+37
        %v1161 = vand.u32 %v1092, 2147483648
        %v1162 = vor.u32 1.1754944e-38, %v1161
        %v1163 = vsel %vm1160, %v1162, %v1158
        %v1164 = vmul.f32 1.0, %v1163
        %v1165 = vrcp.pop %v1093
        %v1166 = vmul.f32 %v1093, %v1165
        %v1167 = vsub.f32 1.0, %v1166
        %v1168 = vmul.f32 %v1165, %v1167
        %v1169 = vadd.f32 %v1165, %v1168
        %vm1170 = vweird.f32 %v1093
        %vm1171 = vweird.f32 %v1165
        %vm1172 = vmor %vm1170, %vm1171
        %v1173 = vsel %vm1172, %v1165, %v1169
        %v1174 = vand.u32 2147483647, %v1093
        %vm1175 = vcmp.eq.f32.partialorder %v1174, 8.507059e+37
        %v1176 = vand.u32 %v1093, 2147483648
        %v1177 = vor.u32 1.1754944e-38, %v1176
        %v1178 = vsel %vm1175, %v1177, %v1173
        %v1179 = vmul.f32 1.0, %v1178
        %v1180 = vrcp.pop %v1094
        %v1181 = vmul.f32 %v1094, %v1180
        %v1182 = vsub.f32 1.0, %v1181
        %v1183 = vmul.f32 %v1180, %v1182
        %v1184 = vadd.f32 %v1180, %v1183
        %vm1185 = vweird.f32 %v1094
        %vm1186 = vweird.f32 %v1180
        %vm1187 = vmor %vm1185, %vm1186
        %v1188 = vsel %vm1187, %v1180, %v1184
        %v1189 = vand.u32 2147483647, %v1094
        %vm1190 = vcmp.eq.f32.partialorder %v1189, 8.507059e+37
        %v1191 = vand.u32 %v1094, 2147483648
        %v1192 = vor.u32 1.1754944e-38, %v1191
        %v1193 = vsel %vm1190, %v1192, %v1188
        %v1194 = vmul.f32 1.0, %v1193
        %v1195 = vrcp.pop %v1095
        %v1196 = vmul.f32 %v1095, %v1195
        %v1197 = vsub.f32 1.0, %v1196
        %v1198 = vmul.f32 %v1195, %v1197
        %v1199 = vadd.f32 %v1195, %v1198
        %vm1200 = vweird.f32 %v1095
        %vm1201 = vweird.f32 %v1195
        %vm1202 = vmor %vm1200, %vm1201
        %v1203 = vsel %vm1202, %v1195, %v1199
        %v1204 = vand.u32 2147483647, %v1095
        %vm1205 = vcmp.eq.f32.partialorder %v1204, 8.507059e+37
        %v1206 = vand.u32 %v1095, 2147483648
        %v1207 = vor.u32 1.1754944e-38, %v1206
        %v1208 = vsel %vm1205, %v1207, %v1203
        %v1209 = vmul.f32 1.0, %v1208
        %v1210 = vrcp.pop %v1096
        %v1211 = vmul.f32 %v1096, %v1210
        %v1212 = vsub.f32 1.0, %v1211
        %v1213 = vmul.f32 %v1210, %v1212
        %v1214 = vadd.f32 %v1210, %v1213
        %vm1215 = vweird.f32 %v1096
        %vm1216 = vweird.f32 %v1210
        %vm1217 = vmor %vm1215, %vm1216
        %v1218 = vsel %vm1217, %v1210, %v1214
        %v1219 = vand.u32 2147483647, %v1096
        %vm1220 = vcmp.eq.f32.partialorder %v1219, 8.507059e+37
        %v1221 = vand.u32 %v1096, 2147483648
        %v1222 = vor.u32 1.1754944e-38, %v1221
        %v1223 = vsel %vm1220, %v1222, %v1218
        %v1224 = vmul.f32 1.0, %v1223
        %v1225 = vrcp.pop %v1097
        %v1226 = vmul.f32 %v1097, %v1225
        %v1227 = vsub.f32 1.0, %v1226
        %v1228 = vmul.f32 %v1225, %v1227
        %v1229 = vadd.f32 %v1225, %v1228
        %vm1230 = vweird.f32 %v1097
        %vm1231 = vweird.f32 %v1225
        %vm1232 = vmor %vm1230, %vm1231
        %v1233 = vsel %vm1232, %v1225, %v1229
        %v1234 = vand.u32 2147483647, %v1097
        %vm1235 = vcmp.eq.f32.partialorder %v1234, 8.507059e+37
        %v1236 = vand.u32 %v1097, 2147483648
        %v1237 = vor.u32 1.1754944e-38, %v1236
        %v1238 = vsel %vm1235, %v1237, %v1233
        %v1239 = vmul.f32 1.0, %v1238
        %v1240 = vrcp.pop %v1098
        %v1241 = vmul.f32 %v1098, %v1240
        %v1242 = vsub.f32 1.0, %v1241
        %v1243 = vmul.f32 %v1240, %v1242
        %v1244 = vadd.f32 %v1240, %v1243
        %vm1245 = vweird.f32 %v1098
        %vm1246 = vweird.f32 %v1240
        %vm1247 = vmor %vm1245, %vm1246
        %v1248 = vsel %vm1247, %v1240, %v1244
        %v1249 = vand.u32 2147483647, %v1098
        %vm1250 = vcmp.eq.f32.partialorder %v1249, 8.507059e+37
        %v1251 = vand.u32 %v1098, 2147483648
        %v1252 = vor.u32 1.1754944e-38, %v1251
        %v1253 = vsel %vm1250, %v1252, %v1248
        %v1254 = vmul.f32 1.0, %v1253
        %v1255 = vrcp.pop %v1099
        %v1256 = vmul.f32 %v1099, %v1255
        %v1257 = vsub.f32 1.0, %v1256
        %v1258 = vmul.f32 %v1255, %v1257
        %v1259 = vadd.f32 %v1255, %v1258
        %vm1260 = vweird.f32 %v1099
        %vm1261 = vweird.f32 %v1255
        %vm1262 = vmor %vm1260, %vm1261
        %v1263 = vsel %vm1262, %v1255, %v1259
        %v1264 = vand.u32 2147483647, %v1099
        %vm1265 = vcmp.eq.f32.partialorder %v1264, 8.507059e+37
        %v1266 = vand.u32 %v1099, 2147483648
        %v1267 = vor.u32 1.1754944e-38, %v1266
        %v1268 = vsel %vm1265, %v1267, %v1263
        %v1269 = vmul.f32 1.0, %v1268
        %v1270 = vrcp.pop %v1100
        %v1271 = vmul.f32 %v1100, %v1270
        %v1272 = vsub.f32 1.0, %v1271
        %v1273 = vmul.f32 %v1270, %v1272
        %v1274 = vadd.f32 %v1270, %v1273
        %vm1275 = vweird.f32 %v1100
        %vm1276 = vweird.f32 %v1270
        %vm1277 = vmor %vm1275, %vm1276
        %v1278 = vsel %vm1277, %v1270, %v1274
        %v1279 = vand.u32 2147483647, %v1100
        %vm1280 = vcmp.eq.f32.partialorder %v1279, 8.507059e+37
        %v1281 = vand.u32 %v1100, 2147483648
        %v1282 = vor.u32 1.1754944e-38, %v1281
        %v1283 = vsel %vm1280, %v1282, %v1278
        %v1284 = vmul.f32 1.0, %v1283
        %v1285 = vrcp.pop %v1101
        %v1286 = vmul.f32 %v1101, %v1285
        %v1287 = vsub.f32 1.0, %v1286
        %v1288 = vmul.f32 %v1285, %v1287
        %v1289 = vadd.f32 %v1285, %v1288
        %vm1290 = vweird.f32 %v1101
        %vm1291 = vweird.f32 %v1285
        %vm1292 = vmor %vm1290, %vm1291
        %v1293 = vsel %vm1292, %v1285, %v1289
        %v1294 = vand.u32 2147483647, %v1101
        %vm1295 = vcmp.eq.f32.partialorder %v1294, 8.507059e+37
        %v1296 = vand.u32 %v1101, 2147483648
        %v1297 = vor.u32 1.1754944e-38, %v1296
        %v1298 = vsel %vm1295, %v1297, %v1293
        %v1299 = vmul.f32 1.0, %v1298
        %v1300 = vrcp.pop %v1102
        %v1301 = vmul.f32 %v1102, %v1300
        %v1302 = vsub.f32 1.0, %v1301
        %v1303 = vmul.f32 %v1300, %v1302
        %v1304 = vadd.f32 %v1300, %v1303
        %vm1305 = vweird.f32 %v1102
        %vm1306 = vweird.f32 %v1300
        %vm1307 = vmor %vm1305, %vm1306
        %v1308 = vsel %vm1307, %v1300, %v1304
        %v1309 = vand.u32 2147483647, %v1102
        %vm1310 = vcmp.eq.f32.partialorder %v1309, 8.507059e+37
        %v1311 = vand.u32 %v1102, 2147483648
        %v1312 = vor.u32 1.1754944e-38, %v1311
        %v1313 = vsel %vm1310, %v1312, %v1308
        %v1314 = vmul.f32 1.0, %v1313
        %v1315 = vrcp.pop %v1103
        %v1316 = vmul.f32 %v1103, %v1315
        %v1317 = vsub.f32 1.0, %v1316
        %v1318 = vmul.f32 %v1315, %v1317
        %v1319 = vadd.f32 %v1315, %v1318
        %vm1320 = vweird.f32 %v1103
        %vm1321 = vweird.f32 %v1315
        %vm1322 = vmor %vm1320, %vm1321
        %v1323 = vsel %vm1322, %v1315, %v1319
        %v1324 = vand.u32 2147483647, %v1103
        %vm1325 = vcmp.eq.f32.partialorder %v1324, 8.507059e+37
        %v1326 = vand.u32 %v1103, 2147483648
        %v1327 = vor.u32 1.1754944e-38, %v1326
        %v1328 = vsel %vm1325, %v1327, %v1323
        %v1329 = vmul.f32 1.0, %v1328
        %v1330 = vrcp.pop %v1104
        %v1331 = vmul.f32 %v1104, %v1330
        %v1332 = vsub.f32 1.0, %v1331
        %v1333 = vmul.f32 %v1330, %v1332
        %v1334 = vadd.f32 %v1330, %v1333
        %vm1335 = vweird.f32 %v1104
        %vm1336 = vweird.f32 %v1330
        %vm1337 = vmor %vm1335, %vm1336
        %v1338 = vsel %vm1337, %v1330, %v1334
        %v1339 = vand.u32 2147483647, %v1104
        %vm1340 = vcmp.eq.f32.partialorder %v1339, 8.507059e+37
        %v1341 = vand.u32 %v1104, 2147483648
        %v1342 = vor.u32 1.1754944e-38, %v1341
        %v1343 = vsel %vm1340, %v1342, %v1338
        %v1344 = vmul.f32 1.0, %v1343
        %v1345 = vmul.f32 %v1025, %v1119
        %v1346 = vmul.f32 %v1026, %v1134
        %v1347 = vmul.f32 %v1027, %v1149
        %v1348 = vmul.f32 %v1028, %v1164
        %v1349 = vmul.f32 %v1029, %v1179
        %v1350 = vmul.f32 %v1030, %v1194
        %v1351 = vmul.f32 %v1031, %v1209
        %v1352 = vmul.f32 %v1032, %v1224
        %v1353 = vmul.f32 %v1033, %v1239
        %v1354 = vmul.f32 %v1034, %v1254
        %v1355 = vmul.f32 %v1035, %v1269
        %v1356 = vmul.f32 %v1036, %v1284
        %v1357 = vmul.f32 %v1037, %v1299
        %v1358 = vmul.f32 %v1038, %v1314
        %v1359 = vmul.f32 %v1039, %v1329
        %v1360 = vmul.f32 %v1040, %v1344
        %v1361 = vld [vmem:[%s7] sm:$0xff]
        %v1362 = vld [vmem:[%s7 + $0x8] sm:$0xff]
        %v1363 = vld [vmem:[%s7 + $0x10] sm:$0xff]
        %v1364 = vld [vmem:[%s7 + $0x18] sm:$0xff]
        %v1365 = vld [vmem:[%s7 + $0x20] sm:$0xff]
        %v1366 = vld [vmem:[%s7 + $0x28] sm:$0xff]
        %v1367 = vld [vmem:[%s7 + $0x30] sm:$0xff]
        %v1368 = vld [vmem:[%s7 + $0x38] sm:$0xff]
        %v1369 = vld [vmem:[%s7 + $0x40] sm:$0xff]
        %v1370 = vld [vmem:[%s7 + $0x48] sm:$0xff]
        %v1371 = vld [vmem:[%s7 + $0x50] sm:$0xff]
        %v1372 = vld [vmem:[%s7 + $0x58] sm:$0xff]
        %v1373 = vld [vmem:[%s7 + $0x60] sm:$0xff]
        %v1374 = vld [vmem:[%s7 + $0x68] sm:$0xff]
        %v1375 = vld [vmem:[%s7 + $0x70] sm:$0xff]
        %v1376 = vld [vmem:[%s7 + $0x78] sm:$0xff]
        %vm1377 = vcmask 261120
        %v1379 = vsel %vm1377, %v1361, 0
        %v1382 = vsel %vm1377, %v1362, 0
        %v1385 = vsel %vm1377, %v1363, 0
        %v1388 = vsel %vm1377, %v1364, 0
        %v1391 = vsel %vm1377, %v1365, 0
        %v1394 = vsel %vm1377, %v1366, 0
        %v1397 = vsel %vm1377, %v1367, 0
        %v1400 = vsel %vm1377, %v1368, 0
        %v1403 = vsel %vm1377, %v1369, 0
        %v1406 = vsel %vm1377, %v1370, 0
        %v1409 = vsel %vm1377, %v1371, 0
        %v1412 = vsel %vm1377, %v1372, 0
        %v1415 = vsel %vm1377, %v1373, 0
        %v1418 = vsel %vm1377, %v1374, 0
        %v1421 = vsel %vm1377, %v1375, 0
        %v1424 = vsel %vm1377, %v1376, 0
        %v1427 = vsel %vm1377, %v1345, 0
        %v1430 = vsel %vm1377, %v1346, 0
        %v1433 = vsel %vm1377, %v1347, 0
        %v1436 = vsel %vm1377, %v1348, 0
        %v1439 = vsel %vm1377, %v1349, 0
        %v1442 = vsel %vm1377, %v1350, 0
        %v1445 = vsel %vm1377, %v1351, 0
        %v1448 = vsel %vm1377, %v1352, 0
        %v1451 = vsel %vm1377, %v1353, 0
        %v1454 = vsel %vm1377, %v1354, 0
        %v1457 = vsel %vm1377, %v1355, 0
        %v1460 = vsel %vm1377, %v1356, 0
        %v1463 = vsel %vm1377, %v1357, 0
        %v1466 = vsel %vm1377, %v1358, 0
        %v1469 = vsel %vm1377, %v1359, 0
        %v1472 = vsel %vm1377, %v1360, 0
        %1474 = vmatpush.xpose.msra.mxu0 %v1472
        %1475 = vmatpush.xpose.msra.mxu0 %v1469
        %1476 = vmatpush.xpose.msra.mxu0 %v1466
        %1477 = vmatpush.xpose.msra.mxu0 %v1463
        %1478 = vmatpush.xpose.msra.mxu0 %v1460
        %1479 = vmatpush.xpose.msra.mxu0 %v1457
        %1480 = vmatpush.xpose.msra.mxu0 %v1454
        %1481 = vmatpush.xpose.msra.mxu0 %v1451
        %1482 = vmatpush.xpose.msra.mxu0 %v1448
        %1483 = vmatpush.xpose.msra.mxu0 %v1445
        %1484 = vmatpush.xpose.msra.mxu0 %v1442
        %1485 = vmatpush.xpose.msra.mxu0 %v1439
        %1486 = vmatpush.xpose.msra.mxu0 %v1436
        %1487 = vmatpush.xpose.msra.mxu0 %v1433
        %1488 = vmatpush.xpose.msra.mxu0 %v1430
        %1489 = vmatpush.xpose.msra.mxu0 %v1427
        %1490 = vmatmul.f32.gmra.mxu0 %v1379
        %v1491 = vpop.f32.mrf.mxu0
        %v1492 = vadd.f32 0.0, %v1491
        %1493 = vmatmul.f32.gmra.mxu0 %v1382
        %v1494 = vpop.f32.mrf.mxu0
        %v1495 = vadd.f32 0.0, %v1494
        %1496 = vmatmul.f32.gmra.mxu0 %v1385
        %v1497 = vpop.f32.mrf.mxu0
        %v1498 = vadd.f32 0.0, %v1497
        %1499 = vmatmul.f32.gmra.mxu0 %v1388
        %v1500 = vpop.f32.mrf.mxu0
        %v1501 = vadd.f32 0.0, %v1500
        %1502 = vmatmul.f32.gmra.mxu0 %v1391
        %v1503 = vpop.f32.mrf.mxu0
        %v1504 = vadd.f32 0.0, %v1503
        %1505 = vmatmul.f32.gmra.mxu0 %v1394
        %v1506 = vpop.f32.mrf.mxu0
        %v1507 = vadd.f32 0.0, %v1506
        %1508 = vmatmul.f32.gmra.mxu0 %v1397
        %v1509 = vpop.f32.mrf.mxu0
        %v1510 = vadd.f32 0.0, %v1509
        %1511 = vmatmul.f32.gmra.mxu0 %v1400
        %v1512 = vpop.f32.mrf.mxu0
        %v1513 = vadd.f32 0.0, %v1512
        %1514 = vmatmul.f32.gmra.mxu0 %v1403
        %v1515 = vpop.f32.mrf.mxu0
        %v1516 = vadd.f32 0.0, %v1515
        %1517 = vmatmul.f32.gmra.mxu0 %v1406
        %v1518 = vpop.f32.mrf.mxu0
        %v1519 = vadd.f32 0.0, %v1518
        %1520 = vmatmul.f32.gmra.mxu0 %v1409
        %v1521 = vpop.f32.mrf.mxu0
        %v1522 = vadd.f32 0.0, %v1521
        %1523 = vmatmul.f32.gmra.mxu0 %v1412
        %v1524 = vpop.f32.mrf.mxu0
        %v1525 = vadd.f32 0.0, %v1524
        %1526 = vmatmul.f32.gmra.mxu0 %v1415
        %v1527 = vpop.f32.mrf.mxu0
        %v1528 = vadd.f32 0.0, %v1527
        %1529 = vmatmul.f32.gmra.mxu0 %v1418
        %v1530 = vpop.f32.mrf.mxu0
        %v1531 = vadd.f32 0.0, %v1530
        %1532 = vmatmul.f32.gmra.mxu0 %v1421
        %v1533 = vpop.f32.mrf.mxu0
        %v1534 = vadd.f32 0.0, %v1533
        %1535 = vmatmul.f32.gmra.mxu0 %v1424
        %v1536 = vpop.f32.mrf.mxu0
        %v1537 = vadd.f32 0.0, %v1536
        %1538 = vdwg.mxu0
        %v1539 = vld [vmem:[%s5] sm:$0xff]
        %v1540 = vld [vmem:[%s5 + $0x8] sm:$0xff]
        %v1541 = vld [vmem:[%s5 + $0x10] sm:$0xff]
        %v1542 = vld [vmem:[%s5 + $0x18] sm:$0xff]
        %1543 = vmatpush.msra.mxu0 0.0
        %1544 = vmatpush.msra.mxu0 0.0
        %1545 = vmatpush.msra.mxu0 0.0
        %1546 = vmatpush.msra.mxu0 0.0
        %1547 = vmatpush.msra.mxu0 0.0
        %1548 = vmatpush.msra.mxu0 0.0
        %1549 = vmatpush.msra.mxu0 0.0
        %1550 = vmatpush.msra.mxu0 0.0
        %1551 = vmatpush.msra.mxu0 0.0
        %1552 = vmatpush.msra.mxu0 0.0
        %1553 = vmatpush.msra.mxu0 0.0
        %1554 = vmatpush.msra.mxu0 0.0
        %1555 = vmatpush.msra.mxu0 %v1542
        %1556 = vmatpush.msra.mxu0 %v1541
        %1557 = vmatpush.msra.mxu0 %v1540
        %1558 = vmatpush.msra.mxu0 %v1539
        %1559 = vmatmul.f32.gmra.mxu0 %v1427
        %v1560 = vpop.f32.mrf.mxu0
        %v1561 = vadd.f32 0.0, %v1560
        %1562 = vmatmul.f32.gmra.mxu0 %v1430
        %v1563 = vpop.f32.mrf.mxu0
        %v1564 = vadd.f32 0.0, %v1563
        %1565 = vmatmul.f32.gmra.mxu0 %v1433
        %v1566 = vpop.f32.mrf.mxu0
        %v1567 = vadd.f32 0.0, %v1566
        %1568 = vmatmul.f32.gmra.mxu0 %v1436
        %v1569 = vpop.f32.mrf.mxu0
        %v1570 = vadd.f32 0.0, %v1569
        %1571 = vmatmul.f32.gmra.mxu0 %v1439
        %v1572 = vpop.f32.mrf.mxu0
        %v1573 = vadd.f32 0.0, %v1572
        %1574 = vmatmul.f32.gmra.mxu0 %v1442
        %v1575 = vpop.f32.mrf.mxu0
        %v1576 = vadd.f32 0.0, %v1575
        %1577 = vmatmul.f32.gmra.mxu0 %v1445
        %v1578 = vpop.f32.mrf.mxu0
        %v1579 = vadd.f32 0.0, %v1578
        %1580 = vmatmul.f32.gmra.mxu0 %v1448
        %v1581 = vpop.f32.mrf.mxu0
        %v1582 = vadd.f32 0.0, %v1581
        %1583 = vmatmul.f32.gmra.mxu0 %v1451
        %v1584 = vpop.f32.mrf.mxu0
        %v1585 = vadd.f32 0.0, %v1584
        %1586 = vmatmul.f32.gmra.mxu0 %v1454
        %v1587 = vpop.f32.mrf.mxu0
        %v1588 = vadd.f32 0.0, %v1587
        %1589 = vmatmul.f32.gmra.mxu0 %v1457
        %v1590 = vpop.f32.mrf.mxu0
        %v1591 = vadd.f32 0.0, %v1590
        %1592 = vmatmul.f32.gmra.mxu0 %v1460
        %v1593 = vpop.f32.mrf.mxu0
        %v1594 = vadd.f32 0.0, %v1593
        %1595 = vmatmul.f32.gmra.mxu0 %v1463
        %v1596 = vpop.f32.mrf.mxu0
        %v1597 = vadd.f32 0.0, %v1596
        %1598 = vmatmul.f32.gmra.mxu0 %v1466
        %v1599 = vpop.f32.mrf.mxu0
        %v1600 = vadd.f32 0.0, %v1599
        %1601 = vmatmul.f32.gmra.mxu0 %v1469
        %v1602 = vpop.f32.mrf.mxu0
        %v1603 = vadd.f32 0.0, %v1602
        %1604 = vmatmul.f32.gmra.mxu0 %v1472
        %v1605 = vpop.f32.mrf.mxu0
        %v1606 = vadd.f32 0.0, %v1605
        %1607 = vdwg.mxu0
        %v1608 = vld [vmem:[%s6] sm:$0xff]
        %v1609 = vld [vmem:[%s4 + $0x1] sm:$0x1]
        %v1610 = vperm.slane %v1609, 0
        %vm1611 = vcmask 64512
        %v1613 = vsel %vm1611, %v1561, 0
        %v1616 = vsel %vm1611, %v1564, 0
        %v1619 = vsel %vm1611, %v1567, 0
        %v1622 = vsel %vm1611, %v1570, 0
        %v1625 = vsel %vm1611, %v1573, 0
        %v1628 = vsel %vm1611, %v1576, 0
        %v1631 = vsel %vm1611, %v1579, 0
        %v1634 = vsel %vm1611, %v1582, 0
        %v1637 = vsel %vm1611, %v1585, 0
        %v1640 = vsel %vm1611, %v1588, 0
        %v1643 = vsel %vm1611, %v1591, 0
        %v1646 = vsel %vm1611, %v1594, 0
        %v1649 = vsel %vm1611, %v1597, 0
        %v1652 = vsel %vm1611, %v1600, 0
        %v1655 = vsel %vm1611, %v1603, 0
        %v1658 = vsel %vm1611, %v1606, 0
        %1660 = vmatpush.msra.mxu0 0.0
        %1661 = vmatpush.msra.mxu0 0.0
        %1662 = vmatpush.msra.mxu0 0.0
        %1663 = vmatpush.msra.mxu0 0.0
        %1664 = vmatpush.msra.mxu0 0.0
        %1665 = vmatpush.msra.mxu0 0.0
        %1666 = vmatpush.msra.mxu0 0.0
        %1667 = vmatpush.msra.mxu0 0.0
        %1668 = vmatpush.msra.mxu0 0.0
        %1669 = vmatpush.msra.mxu0 0.0
        %1670 = vmatpush.msra.mxu0 0.0
        %1671 = vmatpush.msra.mxu0 0.0
        %1672 = vmatpush.msra.mxu0 0.0
        %1673 = vmatpush.msra.mxu0 0.0
        %1674 = vmatpush.msra.mxu0 0.0
        %1675 = vmatpush.msra.mxu0 %v1608
        %1676 = vmatmul.f32.gmra.mxu0 %v1613
        %v1677 = vpop.f32.mrf.mxu0
        %v1678 = vadd.f32 %v1610, %v1677
        %1679 = vmatmul.f32.gmra.mxu0 %v1616
        %v1680 = vpop.f32.mrf.mxu0
        %v1681 = vadd.f32 %v1610, %v1680
        %1682 = vmatmul.f32.gmra.mxu0 %v1619
        %v1683 = vpop.f32.mrf.mxu0
        %v1684 = vadd.f32 %v1610, %v1683
        %1685 = vmatmul.f32.gmra.mxu0 %v1622
        %v1686 = vpop.f32.mrf.mxu0
        %v1687 = vadd.f32 %v1610, %v1686
        %1688 = vmatmul.f32.gmra.mxu0 %v1625
        %v1689 = vpop.f32.mrf.mxu0
        %v1690 = vadd.f32 %v1610, %v1689
        %1691 = vmatmul.f32.gmra.mxu0 %v1628
        %v1692 = vpop.f32.mrf.mxu0
        %v1693 = vadd.f32 %v1610, %v1692
        %1694 = vmatmul.f32.gmra.mxu0 %v1631
        %v1695 = vpop.f32.mrf.mxu0
        %v1696 = vadd.f32 %v1610, %v1695
        %1697 = vmatmul.f32.gmra.mxu0 %v1634
        %v1698 = vpop.f32.mrf.mxu0
        %v1699 = vadd.f32 %v1610, %v1698
        %1700 = vmatmul.f32.gmra.mxu0 %v1637
        %v1701 = vpop.f32.mrf.mxu0
        %v1702 = vadd.f32 %v1610, %v1701
        %1703 = vmatmul.f32.gmra.mxu0 %v1640
        %v1704 = vpop.f32.mrf.mxu0
        %v1705 = vadd.f32 %v1610, %v1704
        %1706 = vmatmul.f32.gmra.mxu0 %v1643
        %v1707 = vpop.f32.mrf.mxu0
        %v1708 = vadd.f32 %v1610, %v1707
        %1709 = vmatmul.f32.gmra.mxu0 %v1646
        %v1710 = vpop.f32.mrf.mxu0
        %v1711 = vadd.f32 %v1610, %v1710
        %1712 = vmatmul.f32.gmra.mxu0 %v1649
        %v1713 = vpop.f32.mrf.mxu0
        %v1714 = vadd.f32 %v1610, %v1713
        %1715 = vmatmul.f32.gmra.mxu0 %v1652
        %v1716 = vpop.f32.mrf.mxu0
        %v1717 = vadd.f32 %v1610, %v1716
        %1718 = vmatmul.f32.gmra.mxu0 %v1655
        %v1719 = vpop.f32.mrf.mxu0
        %v1720 = vadd.f32 %v1610, %v1719
        %1721 = vmatmul.f32.gmra.mxu0 %v1658
        %v1722 = vpop.f32.mrf.mxu0
        %v1723 = vadd.f32 %v1610, %v1722
        %1724 = vdwg.mxu0
        %v1725 = vmax.f32 %v1678, 0.0
        %v1726 = vmax.f32 %v1681, 0.0
        %v1727 = vmax.f32 %v1684, 0.0
        %v1728 = vmax.f32 %v1687, 0.0
        %v1729 = vmax.f32 %v1690, 0.0
        %v1730 = vmax.f32 %v1693, 0.0
        %v1731 = vmax.f32 %v1696, 0.0
        %v1732 = vmax.f32 %v1699, 0.0
        %v1733 = vmax.f32 %v1702, 0.0
        %v1734 = vmax.f32 %v1705, 0.0
        %v1735 = vmax.f32 %v1708, 0.0
        %v1736 = vmax.f32 %v1711, 0.0
        %v1737 = vmax.f32 %v1714, 0.0
        %v1738 = vmax.f32 %v1717, 0.0
        %v1739 = vmax.f32 %v1720, 0.0
        %v1740 = vmax.f32 %v1723, 0.0
        %vm1741 = vcmp.ne.f32.partialorder %v1678, %v1678
        %vm1742 = vcmp.ne.f32.partialorder %v1681, %v1681
        %vm1743 = vcmp.ne.f32.partialorder %v1684, %v1684
        %vm1744 = vcmp.ne.f32.partialorder %v1687, %v1687
        %vm1745 = vcmp.ne.f32.partialorder %v1690, %v1690
        %vm1746 = vcmp.ne.f32.partialorder %v1693, %v1693
        %vm1747 = vcmp.ne.f32.partialorder %v1696, %v1696
        %vm1748 = vcmp.ne.f32.partialorder %v1699, %v1699
        %vm1749 = vcmp.ne.f32.partialorder %v1702, %v1702
        %vm1750 = vcmp.ne.f32.partialorder %v1705, %v1705
        %vm1751 = vcmp.ne.f32.partialorder %v1708, %v1708
        %vm1752 = vcmp.ne.f32.partialorder %v1711, %v1711
        %vm1753 = vcmp.ne.f32.partialorder %v1714, %v1714
        %vm1754 = vcmp.ne.f32.partialorder %v1717, %v1717
        %vm1755 = vcmp.ne.f32.partialorder %v1720, %v1720
        %vm1756 = vcmp.ne.f32.partialorder %v1723, %v1723
        %v1757 = vadd.f32 %v1678, 0.0
        %v1758 = vadd.f32 %v1681, 0.0
        %v1759 = vadd.f32 %v1684, 0.0
        %v1760 = vadd.f32 %v1687, 0.0
        %v1761 = vadd.f32 %v1690, 0.0
        %v1762 = vadd.f32 %v1693, 0.0
        %v1763 = vadd.f32 %v1696, 0.0
        %v1764 = vadd.f32 %v1699, 0.0
        %v1765 = vadd.f32 %v1702, 0.0
        %v1766 = vadd.f32 %v1705, 0.0
        %v1767 = vadd.f32 %v1708, 0.0
        %v1768 = vadd.f32 %v1711, 0.0
        %v1769 = vadd.f32 %v1714, 0.0
        %v1770 = vadd.f32 %v1717, 0.0
        %v1771 = vadd.f32 %v1720, 0.0
        %v1772 = vadd.f32 %v1723, 0.0
        %v1773 = vand.u32 2147483647, %v1678
        %v1774 = vand.u32 2147483647, %v1681
        %v1775 = vand.u32 2147483647, %v1684
        %v1776 = vand.u32 2147483647, %v1687
        %v1777 = vand.u32 2147483647, %v1690
        %v1778 = vand.u32 2147483647, %v1693
        %v1779 = vand.u32 2147483647, %v1696
        %v1780 = vand.u32 2147483647, %v1699
        %v1781 = vand.u32 2147483647, %v1702
        %v1782 = vand.u32 2147483647, %v1705
        %v1783 = vand.u32 2147483647, %v1708
        %v1784 = vand.u32 2147483647, %v1711
        %v1785 = vand.u32 2147483647, %v1714
        %v1786 = vand.u32 2147483647, %v1717
        %v1787 = vand.u32 2147483647, %v1720
        %v1788 = vand.u32 2147483647, %v1723
        %v1789 = vsub.f32 0.0, %v1773
        %v1790 = vsub.f32 0.0, %v1774
        %v1791 = vsub.f32 0.0, %v1775
        %v1792 = vsub.f32 0.0, %v1776
        %v1793 = vsub.f32 0.0, %v1777
        %v1794 = vsub.f32 0.0, %v1778
        %v1795 = vsub.f32 0.0, %v1779
        %v1796 = vsub.f32 0.0, %v1780
        %v1797 = vsub.f32 0.0, %v1781
        %v1798 = vsub.f32 0.0, %v1782
        %v1799 = vsub.f32 0.0, %v1783
        %v1800 = vsub.f32 0.0, %v1784
        %v1801 = vsub.f32 0.0, %v1785
        %v1802 = vsub.f32 0.0, %v1786
        %v1803 = vsub.f32 0.0, %v1787
        %v1804 = vsub.f32 0.0, %v1788
        %v1805 = vmul.f32 %v1789, 1.442695
        %v1806 = vpow.pop %v1805
        %v1807 = vmul.f32 %v1790, 1.442695
        %v1808 = vpow.pop %v1807
        %v1809 = vmul.f32 %v1791, 1.442695
        %v1810 = vpow.pop %v1809
        %v1811 = vmul.f32 %v1792, 1.442695
        %v1812 = vpow.pop %v1811
        %v1813 = vmul.f32 %v1793, 1.442695
        %v1814 = vpow.pop %v1813
        %v1815 = vmul.f32 %v1794, 1.442695
        %v1816 = vpow.pop %v1815
        %v1817 = vmul.f32 %v1795, 1.442695
        %v1818 = vpow.pop %v1817
        %v1819 = vmul.f32 %v1796, 1.442695
        %v1820 = vpow.pop %v1819
        %v1821 = vmul.f32 %v1797, 1.442695
        %v1822 = vpow.pop %v1821
        %v1823 = vmul.f32 %v1798, 1.442695
        %v1824 = vpow.pop %v1823
        %v1825 = vmul.f32 %v1799, 1.442695
        %v1826 = vpow.pop %v1825
        %v1827 = vmul.f32 %v1800, 1.442695
        %v1828 = vpow.pop %v1827
        %v1829 = vmul.f32 %v1801, 1.442695
        %v1830 = vpow.pop %v1829
        %v1831 = vmul.f32 %v1802, 1.442695
        %v1832 = vpow.pop %v1831
        %v1833 = vmul.f32 %v1803, 1.442695
        %v1834 = vpow.pop %v1833
        %v1835 = vmul.f32 %v1804, 1.442695
        %v1836 = vpow.pop %v1835
        %v1837 = vadd.f32 %v1806, 1.0
        %v1838 = vlog2.pop %v1837
        %v1839 = vmul.f32 %v1838, 0.6931472
        %v1840 = vmul.f32 -0.5, %v1806
        %v1841 = vadd.f32 %v1840, 1.0
        %v1842 = vmul.f32 %v1841, %v1806
        %v1843 = vand.u32 2147483647, %v1806
        %vm1844 = vcmp.lt.f32.partialorder %v1843, 0.0004427343
        %v1845 = vsel %vm1844, %v1842, %v1839
        %v1846 = vadd.f32 %v1808, 1.0
        %v1847 = vlog2.pop %v1846
        %v1848 = vmul.f32 %v1847, 0.6931472
        %v1849 = vmul.f32 -0.5, %v1808
        %v1850 = vadd.f32 %v1849, 1.0
        %v1851 = vmul.f32 %v1850, %v1808
        %v1852 = vand.u32 2147483647, %v1808
        %vm1853 = vcmp.lt.f32.partialorder %v1852, 0.0004427343
        %v1854 = vsel %vm1853, %v1851, %v1848
        %v1855 = vadd.f32 %v1810, 1.0
        %v1856 = vlog2.pop %v1855
        %v1857 = vmul.f32 %v1856, 0.6931472
        %v1858 = vmul.f32 -0.5, %v1810
        %v1859 = vadd.f32 %v1858, 1.0
        %v1860 = vmul.f32 %v1859, %v1810
        %v1861 = vand.u32 2147483647, %v1810
        %vm1862 = vcmp.lt.f32.partialorder %v1861, 0.0004427343
        %v1863 = vsel %vm1862, %v1860, %v1857
        %v1864 = vadd.f32 %v1812, 1.0
        %v1865 = vlog2.pop %v1864
        %v1866 = vmul.f32 %v1865, 0.6931472
        %v1867 = vmul.f32 -0.5, %v1812
        %v1868 = vadd.f32 %v1867, 1.0
        %v1869 = vmul.f32 %v1868, %v1812
        %v1870 = vand.u32 2147483647, %v1812
        %vm1871 = vcmp.lt.f32.partialorder %v1870, 0.0004427343
        %v1872 = vsel %vm1871, %v1869, %v1866
        %v1873 = vadd.f32 %v1814, 1.0
        %v1874 = vlog2.pop %v1873
        %v1875 = vmul.f32 %v1874, 0.6931472
        %v1876 = vmul.f32 -0.5, %v1814
        %v1877 = vadd.f32 %v1876, 1.0
        %v1878 = vmul.f32 %v1877, %v1814
        %v1879 = vand.u32 2147483647, %v1814
        %vm1880 = vcmp.lt.f32.partialorder %v1879, 0.0004427343
        %v1881 = vsel %vm1880, %v1878, %v1875
        %v1882 = vadd.f32 %v1816, 1.0
        %v1883 = vlog2.pop %v1882
        %v1884 = vmul.f32 %v1883, 0.6931472
        %v1885 = vmul.f32 -0.5, %v1816
        %v1886 = vadd.f32 %v1885, 1.0
        %v1887 = vmul.f32 %v1886, %v1816
        %v1888 = vand.u32 2147483647, %v1816
        %vm1889 = vcmp.lt.f32.partialorder %v1888, 0.0004427343
        %v1890 = vsel %vm1889, %v1887, %v1884
        %v1891 = vadd.f32 %v1818, 1.0
        %v1892 = vlog2.pop %v1891
        %v1893 = vmul.f32 %v1892, 0.6931472
        %v1894 = vmul.f32 -0.5, %v1818
        %v1895 = vadd.f32 %v1894, 1.0
        %v1896 = vmul.f32 %v1895, %v1818
        %v1897 = vand.u32 2147483647, %v1818
        %vm1898 = vcmp.lt.f32.partialorder %v1897, 0.0004427343
        %v1899 = vsel %vm1898, %v1896, %v1893
        %v1900 = vadd.f32 %v1820, 1.0
        %v1901 = vlog2.pop %v1900
        %v1902 = vmul.f32 %v1901, 0.6931472
        %v1903 = vmul.f32 -0.5, %v1820
        %v1904 = vadd.f32 %v1903, 1.0
        %v1905 = vmul.f32 %v1904, %v1820
        %v1906 = vand.u32 2147483647, %v1820
        %vm1907 = vcmp.lt.f32.partialorder %v1906, 0.0004427343
        %v1908 = vsel %vm1907, %v1905, %v1902
        %v1909 = vadd.f32 %v1822, 1.0
        %v1910 = vlog2.pop %v1909
        %v1911 = vmul.f32 %v1910, 0.6931472
        %v1912 = vmul.f32 -0.5, %v1822
        %v1913 = vadd.f32 %v1912, 1.0
        %v1914 = vmul.f32 %v1913, %v1822
        %v1915 = vand.u32 2147483647, %v1822
        %vm1916 = vcmp.lt.f32.partialorder %v1915, 0.0004427343
        %v1917 = vsel %vm1916, %v1914, %v1911
        %v1918 = vadd.f32 %v1824, 1.0
        %v1919 = vlog2.pop %v1918
        %v1920 = vmul.f32 %v1919, 0.6931472
        %v1921 = vmul.f32 -0.5, %v1824
        %v1922 = vadd.f32 %v1921, 1.0
        %v1923 = vmul.f32 %v1922, %v1824
        %v1924 = vand.u32 2147483647, %v1824
        %vm1925 = vcmp.lt.f32.partialorder %v1924, 0.0004427343
        %v1926 = vsel %vm1925, %v1923, %v1920
        %v1927 = vadd.f32 %v1826, 1.0
        %v1928 = vlog2.pop %v1927
        %v1929 = vmul.f32 %v1928, 0.6931472
        %v1930 = vmul.f32 -0.5, %v1826
        %v1931 = vadd.f32 %v1930, 1.0
        %v1932 = vmul.f32 %v1931, %v1826
        %v1933 = vand.u32 2147483647, %v1826
        %vm1934 = vcmp.lt.f32.partialorder %v1933, 0.0004427343
        %v1935 = vsel %vm1934, %v1932, %v1929
        %v1936 = vadd.f32 %v1828, 1.0
        %v1937 = vlog2.pop %v1936
        %v1938 = vmul.f32 %v1937, 0.6931472
        %v1939 = vmul.f32 -0.5, %v1828
        %v1940 = vadd.f32 %v1939, 1.0
        %v1941 = vmul.f32 %v1940, %v1828
        %v1942 = vand.u32 2147483647, %v1828
        %vm1943 = vcmp.lt.f32.partialorder %v1942, 0.0004427343
        %v1944 = vsel %vm1943, %v1941, %v1938
        %v1945 = vadd.f32 %v1830, 1.0
        %v1946 = vlog2.pop %v1945
        %v1947 = vmul.f32 %v1946, 0.6931472
        %v1948 = vmul.f32 -0.5, %v1830
        %v1949 = vadd.f32 %v1948, 1.0
        %v1950 = vmul.f32 %v1949, %v1830
        %v1951 = vand.u32 2147483647, %v1830
        %vm1952 = vcmp.lt.f32.partialorder %v1951, 0.0004427343
        %v1953 = vsel %vm1952, %v1950, %v1947
        %v1954 = vadd.f32 %v1832, 1.0
        %v1955 = vlog2.pop %v1954
        %v1956 = vmul.f32 %v1955, 0.6931472
        %v1957 = vmul.f32 -0.5, %v1832
        %v1958 = vadd.f32 %v1957, 1.0
        %v1959 = vmul.f32 %v1958, %v1832
        %v1960 = vand.u32 2147483647, %v1832
        %vm1961 = vcmp.lt.f32.partialorder %v1960, 0.0004427343
        %v1962 = vsel %vm1961, %v1959, %v1956
        %v1963 = vadd.f32 %v1834, 1.0
        %v1964 = vlog2.pop %v1963
        %v1965 = vmul.f32 %v1964, 0.6931472
        %v1966 = vmul.f32 -0.5, %v1834
        %v1967 = vadd.f32 %v1966, 1.0
        %v1968 = vmul.f32 %v1967, %v1834
        %v1969 = vand.u32 2147483647, %v1834
        %vm1970 = vcmp.lt.f32.partialorder %v1969, 0.0004427343
        %v1971 = vsel %vm1970, %v1968, %v1965
        %v1972 = vadd.f32 %v1836, 1.0
        %v1973 = vlog2.pop %v1972
        %v1974 = vmul.f32 %v1973, 0.6931472
        %v1975 = vmul.f32 -0.5, %v1836
        %v1976 = vadd.f32 %v1975, 1.0
        %v1977 = vmul.f32 %v1976, %v1836
        %v1978 = vand.u32 2147483647, %v1836
        %vm1979 = vcmp.lt.f32.partialorder %v1978, 0.0004427343
        %v1980 = vsel %vm1979, %v1977, %v1974
        %v1981 = vadd.f32 %v1725, %v1845
        %v1982 = vadd.f32 %v1726, %v1854
        %v1983 = vadd.f32 %v1727, %v1863
        %v1984 = vadd.f32 %v1728, %v1872
        %v1985 = vadd.f32 %v1729, %v1881
        %v1986 = vadd.f32 %v1730, %v1890
        %v1987 = vadd.f32 %v1731, %v1899
        %v1988 = vadd.f32 %v1732, %v1908
        %v1989 = vadd.f32 %v1733, %v1917
        %v1990 = vadd.f32 %v1734, %v1926
        %v1991 = vadd.f32 %v1735, %v1935
        %v1992 = vadd.f32 %v1736, %v1944
        %v1993 = vadd.f32 %v1737, %v1953
        %v1994 = vadd.f32 %v1738, %v1962
        %v1995 = vadd.f32 %v1739, %v1971
        %v1996 = vadd.f32 %v1740, %v1980
        %v1997 = vsel %vm1741, %v1757, %v1981
        %v1998 = vsel %vm1742, %v1758, %v1982
        %v1999 = vsel %vm1743, %v1759, %v1983
        %v2000 = vsel %vm1744, %v1760, %v1984
        %v2001 = vsel %vm1745, %v1761, %v1985
        %v2002 = vsel %vm1746, %v1762, %v1986
        %v2003 = vsel %vm1747, %v1763, %v1987
        %v2004 = vsel %vm1748, %v1764, %v1988
        %v2005 = vsel %vm1749, %v1765, %v1989
        %v2006 = vsel %vm1750, %v1766, %v1990
        %v2007 = vsel %vm1751, %v1767, %v1991
        %v2008 = vsel %vm1752, %v1768, %v1992
        %v2009 = vsel %vm1753, %v1769, %v1993
        %v2010 = vsel %vm1754, %v1770, %v1994
        %v2011 = vsel %vm1755, %v1771, %v1995
        %v2012 = vsel %vm1756, %v1772, %v1996
        %v2013 = vmul.f32 %v1997, %v1345
        %v2014 = vmul.f32 %v1998, %v1346
        %v2015 = vmul.f32 %v1999, %v1347
        %v2016 = vmul.f32 %v2000, %v1348
        %v2017 = vmul.f32 %v2001, %v1349
        %v2018 = vmul.f32 %v2002, %v1350
        %v2019 = vmul.f32 %v2003, %v1351
        %v2020 = vmul.f32 %v2004, %v1352
        %v2021 = vmul.f32 %v2005, %v1353
        %v2022 = vmul.f32 %v2006, %v1354
        %v2023 = vmul.f32 %v2007, %v1355
        %v2024 = vmul.f32 %v2008, %v1356
        %v2025 = vmul.f32 %v2009, %v1357
        %v2026 = vmul.f32 %v2010, %v1358
        %v2027 = vmul.f32 %v2011, %v1359
        %v2028 = vmul.f32 %v2012, %v1360
        %2029 = vst.msk [vmem:[#allocation2] sm:$0xff] %vm1377, %v1997
        %2030 = vst.msk [vmem:[#allocation2 + $0x8] sm:$0xff] %vm1377, %v1998
        %2031 = vst.msk [vmem:[#allocation2 + $0x10] sm:$0xff] %vm1377, %v1999
        %2032 = vst.msk [vmem:[#allocation2 + $0x18] sm:$0xff] %vm1377, %v2000
        %2033 = vst.msk [vmem:[#allocation2 + $0x20] sm:$0xff] %vm1377, %v2001
        %2034 = vst.msk [vmem:[#allocation2 + $0x28] sm:$0xff] %vm1377, %v2002
        %2035 = vst.msk [vmem:[#allocation2 + $0x30] sm:$0xff] %vm1377, %v2003
        %2036 = vst.msk [vmem:[#allocation2 + $0x38] sm:$0xff] %vm1377, %v2004
        %2037 = vst.msk [vmem:[#allocation2 + $0x40] sm:$0xff] %vm1377, %v2005
        %2038 = vst.msk [vmem:[#allocation2 + $0x48] sm:$0xff] %vm1377, %v2006
        %2039 = vst.msk [vmem:[#allocation2 + $0x50] sm:$0xff] %vm1377, %v2007
        %2040 = vst.msk [vmem:[#allocation2 + $0x58] sm:$0xff] %vm1377, %v2008
        %2041 = vst.msk [vmem:[#allocation2 + $0x60] sm:$0xff] %vm1377, %v2009
        %2042 = vst.msk [vmem:[#allocation2 + $0x68] sm:$0xff] %vm1377, %v2010
        %2043 = vst.msk [vmem:[#allocation2 + $0x70] sm:$0xff] %vm1377, %v2011
        %2044 = vst.msk [vmem:[#allocation2 + $0x78] sm:$0xff] %vm1377, %v2012
        %2045 = vst.msk [vmem:[#allocation3] sm:$0xff] %vm1377, %v2013
        %2046 = vst.msk [vmem:[#allocation3 + $0x8] sm:$0xff] %vm1377, %v2014
        %2047 = vst.msk [vmem:[#allocation3 + $0x10] sm:$0xff] %vm1377, %v2015
        %2048 = vst.msk [vmem:[#allocation3 + $0x18] sm:$0xff] %vm1377, %v2016
        %2049 = vst.msk [vmem:[#allocation3 + $0x20] sm:$0xff] %vm1377, %v2017
        %2050 = vst.msk [vmem:[#allocation3 + $0x28] sm:$0xff] %vm1377, %v2018
        %2051 = vst.msk [vmem:[#allocation3 + $0x30] sm:$0xff] %vm1377, %v2019
        %2052 = vst.msk [vmem:[#allocation3 + $0x38] sm:$0xff] %vm1377, %v2020
        %2053 = vst.msk [vmem:[#allocation3 + $0x40] sm:$0xff] %vm1377, %v2021
        %2054 = vst.msk [vmem:[#allocation3 + $0x48] sm:$0xff] %vm1377, %v2022
        %2055 = vst.msk [vmem:[#allocation3 + $0x50] sm:$0xff] %vm1377, %v2023
        %2056 = vst.msk [vmem:[#allocation3 + $0x58] sm:$0xff] %vm1377, %v2024
        %2057 = vst.msk [vmem:[#allocation3 + $0x60] sm:$0xff] %vm1377, %v2025
        %2058 = vst.msk [vmem:[#allocation3 + $0x68] sm:$0xff] %vm1377, %v2026
        %2059 = vst.msk [vmem:[#allocation3 + $0x70] sm:$0xff] %vm1377, %v2027
        %2060 = vst.msk [vmem:[#allocation3 + $0x78] sm:$0xff] %vm1377, %v2028
        %2061 = vst.msk [vmem:[#allocation4] sm:$0xff] %vm1611, %v1492
        %2062 = vst.msk [vmem:[#allocation4 + $0x8] sm:$0xff] %vm1611, %v1495
        %2063 = vst.msk [vmem:[#allocation4 + $0x10] sm:$0xff] %vm1611, %v1498
        %2064 = vst.msk [vmem:[#allocation4 + $0x18] sm:$0xff] %vm1611, %v1501
        %2065 = vst.msk [vmem:[#allocation4 + $0x20] sm:$0xff] %vm1611, %v1504
        %2066 = vst.msk [vmem:[#allocation4 + $0x28] sm:$0xff] %vm1611, %v1507
        %2067 = vst.msk [vmem:[#allocation4 + $0x30] sm:$0xff] %vm1611, %v1510
        %2068 = vst.msk [vmem:[#allocation4 + $0x38] sm:$0xff] %vm1611, %v1513
        %2069 = vst.msk [vmem:[#allocation4 + $0x40] sm:$0xff] %vm1611, %v1516
        %2070 = vst.msk [vmem:[#allocation4 + $0x48] sm:$0xff] %vm1611, %v1519
        %2071 = vst.msk [vmem:[#allocation4 + $0x50] sm:$0xff] %vm1611, %v1522
        %2072 = vst.msk [vmem:[#allocation4 + $0x58] sm:$0xff] %vm1611, %v1525
        %2073 = vst.msk [vmem:[#allocation4 + $0x60] sm:$0xff] %vm1611, %v1528
        %2074 = vst.msk [vmem:[#allocation4 + $0x68] sm:$0xff] %vm1611, %v1531
        %2075 = vst.msk [vmem:[#allocation4 + $0x70] sm:$0xff] %vm1611, %v1534
        %2076 = vst.msk [vmem:[#allocation4 + $0x78] sm:$0xff] %vm1611, %v1537
        %2093 = vrot.lane.b32.xlu0 %v1492, 120
        %v2094 = vpop.permute.xlu0 %2093
        %2095 = vrot.lane.b32.xlu0 %v1495, 120
        %v2096 = vpop.permute.xlu0 %2095
        %2097 = vrot.lane.b32.xlu0 %v1498, 120
        %v2098 = vpop.permute.xlu0 %2097
        %2099 = vrot.lane.b32.xlu0 %v1501, 120
        %v2100 = vpop.permute.xlu0 %2099
        %2101 = vrot.lane.b32.xlu0 %v1504, 120
        %v2102 = vpop.permute.xlu0 %2101
        %2103 = vrot.lane.b32.xlu0 %v1507, 120
        %v2104 = vpop.permute.xlu0 %2103
        %2105 = vrot.lane.b32.xlu0 %v1510, 120
        %v2106 = vpop.permute.xlu0 %2105
        %2107 = vrot.lane.b32.xlu0 %v1513, 120
        %v2108 = vpop.permute.xlu0 %2107
        %2109 = vrot.lane.b32.xlu0 %v1516, 120
        %v2110 = vpop.permute.xlu0 %2109
        %2111 = vrot.lane.b32.xlu0 %v1519, 120
        %v2112 = vpop.permute.xlu0 %2111
        %2113 = vrot.lane.b32.xlu0 %v1522, 120
        %v2114 = vpop.permute.xlu0 %2113
        %2115 = vrot.lane.b32.xlu0 %v1525, 120
        %v2116 = vpop.permute.xlu0 %2115
        %2117 = vrot.lane.b32.xlu0 %v1528, 120
        %v2118 = vpop.permute.xlu0 %2117
        %2119 = vrot.lane.b32.xlu0 %v1531, 120
        %v2120 = vpop.permute.xlu0 %2119
        %2121 = vrot.lane.b32.xlu0 %v1534, 120
        %v2122 = vpop.permute.xlu0 %2121
        %2123 = vrot.lane.b32.xlu0 %v1537, 120
        %v2124 = vpop.permute.xlu0 %2123
        %s2141 = scalar_lea.vmem [#allocation4], 128
        %2142 = vst.msk [vmem:[%s2141] sm:$0xff] %vm1611, %v2094
        %2143 = vst.msk [vmem:[%s2141 + $0x8] sm:$0xff] %vm1611, %v2096
        %2144 = vst.msk [vmem:[%s2141 + $0x10] sm:$0xff] %vm1611, %v2098
        %2145 = vst.msk [vmem:[%s2141 + $0x18] sm:$0xff] %vm1611, %v2100
        %2146 = vst.msk [vmem:[%s2141 + $0x20] sm:$0xff] %vm1611, %v2102
        %2147 = vst.msk [vmem:[%s2141 + $0x28] sm:$0xff] %vm1611, %v2104
        %2148 = vst.msk [vmem:[%s2141 + $0x30] sm:$0xff] %vm1611, %v2106
        %2149 = vst.msk [vmem:[%s2141 + $0x38] sm:$0xff] %vm1611, %v2108
        %2150 = vst.msk [vmem:[%s2141 + $0x40] sm:$0xff] %vm1611, %v2110
        %2151 = vst.msk [vmem:[%s2141 + $0x48] sm:$0xff] %vm1611, %v2112
        %2152 = vst.msk [vmem:[%s2141 + $0x50] sm:$0xff] %vm1611, %v2114
        %2153 = vst.msk [vmem:[%s2141 + $0x58] sm:$0xff] %vm1611, %v2116
        %2154 = vst.msk [vmem:[%s2141 + $0x60] sm:$0xff] %vm1611, %v2118
        %2155 = vst.msk [vmem:[%s2141 + $0x68] sm:$0xff] %vm1611, %v2120
        %2156 = vst.msk [vmem:[%s2141 + $0x70] sm:$0xff] %vm1611, %v2122
        %2157 = vst.msk [vmem:[%s2141 + $0x78] sm:$0xff] %vm1611, %v2124
        %2158 = vrot.lane.b32.xlu0 %v1492, 112
        %v2159 = vpop.permute.xlu0 %2158
        %2160 = vrot.lane.b32.xlu0 %v1495, 112
        %v2161 = vpop.permute.xlu0 %2160
        %2162 = vrot.lane.b32.xlu0 %v1498, 112
        %v2163 = vpop.permute.xlu0 %2162
        %2164 = vrot.lane.b32.xlu0 %v1501, 112
        %v2165 = vpop.permute.xlu0 %2164
        %2166 = vrot.lane.b32.xlu0 %v1504, 112
        %v2167 = vpop.permute.xlu0 %2166
        %2168 = vrot.lane.b32.xlu0 %v1507, 112
        %v2169 = vpop.permute.xlu0 %2168
        %2170 = vrot.lane.b32.xlu0 %v1510, 112
        %v2171 = vpop.permute.xlu0 %2170
        %2172 = vrot.lane.b32.xlu0 %v1513, 112
        %v2173 = vpop.permute.xlu0 %2172
        %2174 = vrot.lane.b32.xlu0 %v1516, 112
        %v2175 = vpop.permute.xlu0 %2174
        %2176 = vrot.lane.b32.xlu0 %v1519, 112
        %v2177 = vpop.permute.xlu0 %2176
        %2178 = vrot.lane.b32.xlu0 %v1522, 112
        %v2179 = vpop.permute.xlu0 %2178
        %2180 = vrot.lane.b32.xlu0 %v1525, 112
        %v2181 = vpop.permute.xlu0 %2180
        %2182 = vrot.lane.b32.xlu0 %v1528, 112
        %v2183 = vpop.permute.xlu0 %2182
        %2184 = vrot.lane.b32.xlu0 %v1531, 112
        %v2185 = vpop.permute.xlu0 %2184
        %2186 = vrot.lane.b32.xlu0 %v1534, 112
        %v2187 = vpop.permute.xlu0 %2186
        %2188 = vrot.lane.b32.xlu0 %v1537, 112
        %v2189 = vpop.permute.xlu0 %2188
        %s2206 = scalar_lea.vmem [#allocation4], 256
        %2207 = vst.msk [vmem:[%s2206] sm:$0xff] %vm1611, %v2159
        %2208 = vst.msk [vmem:[%s2206 + $0x8] sm:$0xff] %vm1611, %v2161
        %2209 = vst.msk [vmem:[%s2206 + $0x10] sm:$0xff] %vm1611, %v2163
        %2210 = vst.msk [vmem:[%s2206 + $0x18] sm:$0xff] %vm1611, %v2165
        %2211 = vst.msk [vmem:[%s2206 + $0x20] sm:$0xff] %vm1611, %v2167
        %2212 = vst.msk [vmem:[%s2206 + $0x28] sm:$0xff] %vm1611, %v2169
        %2213 = vst.msk [vmem:[%s2206 + $0x30] sm:$0xff] %vm1611, %v2171
        %2214 = vst.msk [vmem:[%s2206 + $0x38] sm:$0xff] %vm1611, %v2173
        %2215 = vst.msk [vmem:[%s2206 + $0x40] sm:$0xff] %vm1611, %v2175
        %2216 = vst.msk [vmem:[%s2206 + $0x48] sm:$0xff] %vm1611, %v2177
        %2217 = vst.msk [vmem:[%s2206 + $0x50] sm:$0xff] %vm1611, %v2179
        %2218 = vst.msk [vmem:[%s2206 + $0x58] sm:$0xff] %vm1611, %v2181
        %2219 = vst.msk [vmem:[%s2206 + $0x60] sm:$0xff] %vm1611, %v2183
        %2220 = vst.msk [vmem:[%s2206 + $0x68] sm:$0xff] %vm1611, %v2185
        %2221 = vst.msk [vmem:[%s2206 + $0x70] sm:$0xff] %vm1611, %v2187
        %2222 = vst.msk [vmem:[%s2206 + $0x78] sm:$0xff] %vm1611, %v2189
        %2223 = vrot.lane.b32.xlu0 %v1492, 104
        %v2224 = vpop.permute.xlu0 %2223
        %2225 = vrot.lane.b32.xlu0 %v1495, 104
        %v2226 = vpop.permute.xlu0 %2225
        %2227 = vrot.lane.b32.xlu0 %v1498, 104
        %v2228 = vpop.permute.xlu0 %2227
        %2229 = vrot.lane.b32.xlu0 %v1501, 104
        %v2230 = vpop.permute.xlu0 %2229
        %2231 = vrot.lane.b32.xlu0 %v1504, 104
        %v2232 = vpop.permute.xlu0 %2231
        %2233 = vrot.lane.b32.xlu0 %v1507, 104
        %v2234 = vpop.permute.xlu0 %2233
        %2235 = vrot.lane.b32.xlu0 %v1510, 104
        %v2236 = vpop.permute.xlu0 %2235
        %2237 = vrot.lane.b32.xlu0 %v1513, 104
        %v2238 = vpop.permute.xlu0 %2237
        %2239 = vrot.lane.b32.xlu0 %v1516, 104
        %v2240 = vpop.permute.xlu0 %2239
        %2241 = vrot.lane.b32.xlu0 %v1519, 104
        %v2242 = vpop.permute.xlu0 %2241
        %2243 = vrot.lane.b32.xlu0 %v1522, 104
        %v2244 = vpop.permute.xlu0 %2243
        %2245 = vrot.lane.b32.xlu0 %v1525, 104
        %v2246 = vpop.permute.xlu0 %2245
        %2247 = vrot.lane.b32.xlu0 %v1528, 104
        %v2248 = vpop.permute.xlu0 %2247
        %2249 = vrot.lane.b32.xlu0 %v1531, 104
        %v2250 = vpop.permute.xlu0 %2249
        %2251 = vrot.lane.b32.xlu0 %v1534, 104
        %v2252 = vpop.permute.xlu0 %2251
        %2253 = vrot.lane.b32.xlu0 %v1537, 104
        %v2254 = vpop.permute.xlu0 %2253
        %s2271 = scalar_lea.vmem [#allocation4], 384
        %2272 = vst.msk [vmem:[%s2271] sm:$0xff] %vm1611, %v2224
        %2273 = vst.msk [vmem:[%s2271 + $0x8] sm:$0xff] %vm1611, %v2226
        %2274 = vst.msk [vmem:[%s2271 + $0x10] sm:$0xff] %vm1611, %v2228
        %2275 = vst.msk [vmem:[%s2271 + $0x18] sm:$0xff] %vm1611, %v2230
        %2276 = vst.msk [vmem:[%s2271 + $0x20] sm:$0xff] %vm1611, %v2232
        %2277 = vst.msk [vmem:[%s2271 + $0x28] sm:$0xff] %vm1611, %v2234
        %2278 = vst.msk [vmem:[%s2271 + $0x30] sm:$0xff] %vm1611, %v2236
        %2279 = vst.msk [vmem:[%s2271 + $0x38] sm:$0xff] %vm1611, %v2238
        %2280 = vst.msk [vmem:[%s2271 + $0x40] sm:$0xff] %vm1611, %v2240
        %2281 = vst.msk [vmem:[%s2271 + $0x48] sm:$0xff] %vm1611, %v2242
        %2282 = vst.msk [vmem:[%s2271 + $0x50] sm:$0xff] %vm1611, %v2244
        %2283 = vst.msk [vmem:[%s2271 + $0x58] sm:$0xff] %vm1611, %v2246
        %2284 = vst.msk [vmem:[%s2271 + $0x60] sm:$0xff] %vm1611, %v2248
        %2285 = vst.msk [vmem:[%s2271 + $0x68] sm:$0xff] %vm1611, %v2250
        %2286 = vst.msk [vmem:[%s2271 + $0x70] sm:$0xff] %vm1611, %v2252
        %2287 = vst.msk [vmem:[%s2271 + $0x78] sm:$0xff] %vm1611, %v2254
        %2288 = vrot.lane.b32.xlu0 %v1492, 96
        %v2289 = vpop.permute.xlu0 %2288
        %2290 = vrot.lane.b32.xlu0 %v1495, 96
        %v2291 = vpop.permute.xlu0 %2290
        %2292 = vrot.lane.b32.xlu0 %v1498, 96
        %v2293 = vpop.permute.xlu0 %2292
        %2294 = vrot.lane.b32.xlu0 %v1501, 96
        %v2295 = vpop.permute.xlu0 %2294
        %2296 = vrot.lane.b32.xlu0 %v1504, 96
        %v2297 = vpop.permute.xlu0 %2296
        %2298 = vrot.lane.b32.xlu0 %v1507, 96
        %v2299 = vpop.permute.xlu0 %2298
        %2300 = vrot.lane.b32.xlu0 %v1510, 96
        %v2301 = vpop.permute.xlu0 %2300
        %2302 = vrot.lane.b32.xlu0 %v1513, 96
        %v2303 = vpop.permute.xlu0 %2302
        %2304 = vrot.lane.b32.xlu0 %v1516, 96
        %v2305 = vpop.permute.xlu0 %2304
        %2306 = vrot.lane.b32.xlu0 %v1519, 96
        %v2307 = vpop.permute.xlu0 %2306
        %2308 = vrot.lane.b32.xlu0 %v1522, 96
        %v2309 = vpop.permute.xlu0 %2308
        %2310 = vrot.lane.b32.xlu0 %v1525, 96
        %v2311 = vpop.permute.xlu0 %2310
        %2312 = vrot.lane.b32.xlu0 %v1528, 96
        %v2313 = vpop.permute.xlu0 %2312
        %2314 = vrot.lane.b32.xlu0 %v1531, 96
        %v2315 = vpop.permute.xlu0 %2314
        %2316 = vrot.lane.b32.xlu0 %v1534, 96
        %v2317 = vpop.permute.xlu0 %2316
        %2318 = vrot.lane.b32.xlu0 %v1537, 96
        %v2319 = vpop.permute.xlu0 %2318
        %s2336 = scalar_lea.vmem [#allocation4], 512
        %2337 = vst.msk [vmem:[%s2336] sm:$0xff] %vm1611, %v2289
        %2338 = vst.msk [vmem:[%s2336 + $0x8] sm:$0xff] %vm1611, %v2291
        %2339 = vst.msk [vmem:[%s2336 + $0x10] sm:$0xff] %vm1611, %v2293
        %2340 = vst.msk [vmem:[%s2336 + $0x18] sm:$0xff] %vm1611, %v2295
        %2341 = vst.msk [vmem:[%s2336 + $0x20] sm:$0xff] %vm1611, %v2297
        %2342 = vst.msk [vmem:[%s2336 + $0x28] sm:$0xff] %vm1611, %v2299
        %2343 = vst.msk [vmem:[%s2336 + $0x30] sm:$0xff] %vm1611, %v2301
        %2344 = vst.msk [vmem:[%s2336 + $0x38] sm:$0xff] %vm1611, %v2303
        %2345 = vst.msk [vmem:[%s2336 + $0x40] sm:$0xff] %vm1611, %v2305
        %2346 = vst.msk [vmem:[%s2336 + $0x48] sm:$0xff] %vm1611, %v2307
        %2347 = vst.msk [vmem:[%s2336 + $0x50] sm:$0xff] %vm1611, %v2309
        %2348 = vst.msk [vmem:[%s2336 + $0x58] sm:$0xff] %vm1611, %v2311
        %2349 = vst.msk [vmem:[%s2336 + $0x60] sm:$0xff] %vm1611, %v2313
        %2350 = vst.msk [vmem:[%s2336 + $0x68] sm:$0xff] %vm1611, %v2315
        %2351 = vst.msk [vmem:[%s2336 + $0x70] sm:$0xff] %vm1611, %v2317
        %2352 = vst.msk [vmem:[%s2336 + $0x78] sm:$0xff] %vm1611, %v2319
        %2353 = vrot.lane.b32.xlu0 %v1492, 88
        %v2354 = vpop.permute.xlu0 %2353
        %2355 = vrot.lane.b32.xlu0 %v1495, 88
        %v2356 = vpop.permute.xlu0 %2355
        %2357 = vrot.lane.b32.xlu0 %v1498, 88
        %v2358 = vpop.permute.xlu0 %2357
        %2359 = vrot.lane.b32.xlu0 %v1501, 88
        %v2360 = vpop.permute.xlu0 %2359
        %2361 = vrot.lane.b32.xlu0 %v1504, 88
        %v2362 = vpop.permute.xlu0 %2361
        %2363 = vrot.lane.b32.xlu0 %v1507, 88
        %v2364 = vpop.permute.xlu0 %2363
        %2365 = vrot.lane.b32.xlu0 %v1510, 88
        %v2366 = vpop.permute.xlu0 %2365
        %2367 = vrot.lane.b32.xlu0 %v1513, 88
        %v2368 = vpop.permute.xlu0 %2367
        %2369 = vrot.lane.b32.xlu0 %v1516, 88
        %v2370 = vpop.permute.xlu0 %2369
        %2371 = vrot.lane.b32.xlu0 %v1519, 88
        %v2372 = vpop.permute.xlu0 %2371
        %2373 = vrot.lane.b32.xlu0 %v1522, 88
        %v2374 = vpop.permute.xlu0 %2373
        %2375 = vrot.lane.b32.xlu0 %v1525, 88
        %v2376 = vpop.permute.xlu0 %2375
        %2377 = vrot.lane.b32.xlu0 %v1528, 88
        %v2378 = vpop.permute.xlu0 %2377
        %2379 = vrot.lane.b32.xlu0 %v1531, 88
        %v2380 = vpop.permute.xlu0 %2379
        %2381 = vrot.lane.b32.xlu0 %v1534, 88
        %v2382 = vpop.permute.xlu0 %2381
        %2383 = vrot.lane.b32.xlu0 %v1537, 88
        %v2384 = vpop.permute.xlu0 %2383
        %s2401 = scalar_lea.vmem [#allocation4], 640
        %2402 = vst.msk [vmem:[%s2401] sm:$0xff] %vm1611, %v2354
        %2403 = vst.msk [vmem:[%s2401 + $0x8] sm:$0xff] %vm1611, %v2356
        %2404 = vst.msk [vmem:[%s2401 + $0x10] sm:$0xff] %vm1611, %v2358
        %2405 = vst.msk [vmem:[%s2401 + $0x18] sm:$0xff] %vm1611, %v2360
        %2406 = vst.msk [vmem:[%s2401 + $0x20] sm:$0xff] %vm1611, %v2362
        %2407 = vst.msk [vmem:[%s2401 + $0x28] sm:$0xff] %vm1611, %v2364
        %2408 = vst.msk [vmem:[%s2401 + $0x30] sm:$0xff] %vm1611, %v2366
        %2409 = vst.msk [vmem:[%s2401 + $0x38] sm:$0xff] %vm1611, %v2368
        %2410 = vst.msk [vmem:[%s2401 + $0x40] sm:$0xff] %vm1611, %v2370
        %2411 = vst.msk [vmem:[%s2401 + $0x48] sm:$0xff] %vm1611, %v2372
        %2412 = vst.msk [vmem:[%s2401 + $0x50] sm:$0xff] %vm1611, %v2374
        %2413 = vst.msk [vmem:[%s2401 + $0x58] sm:$0xff] %vm1611, %v2376
        %2414 = vst.msk [vmem:[%s2401 + $0x60] sm:$0xff] %vm1611, %v2378
        %2415 = vst.msk [vmem:[%s2401 + $0x68] sm:$0xff] %vm1611, %v2380
        %2416 = vst.msk [vmem:[%s2401 + $0x70] sm:$0xff] %vm1611, %v2382
        %2417 = vst.msk [vmem:[%s2401 + $0x78] sm:$0xff] %vm1611, %v2384
        %2418 = vrot.lane.b32.xlu0 %v1492, 80
        %v2419 = vpop.permute.xlu0 %2418
        %2420 = vrot.lane.b32.xlu0 %v1495, 80
        %v2421 = vpop.permute.xlu0 %2420
        %2422 = vrot.lane.b32.xlu0 %v1498, 80
        %v2423 = vpop.permute.xlu0 %2422
        %2424 = vrot.lane.b32.xlu0 %v1501, 80
        %v2425 = vpop.permute.xlu0 %2424
        %2426 = vrot.lane.b32.xlu0 %v1504, 80
        %v2427 = vpop.permute.xlu0 %2426
        %2428 = vrot.lane.b32.xlu0 %v1507, 80
        %v2429 = vpop.permute.xlu0 %2428
        %2430 = vrot.lane.b32.xlu0 %v1510, 80
        %v2431 = vpop.permute.xlu0 %2430
        %2432 = vrot.lane.b32.xlu0 %v1513, 80
        %v2433 = vpop.permute.xlu0 %2432
        %2434 = vrot.lane.b32.xlu0 %v1516, 80
        %v2435 = vpop.permute.xlu0 %2434
        %2436 = vrot.lane.b32.xlu0 %v1519, 80
        %v2437 = vpop.permute.xlu0 %2436
        %2438 = vrot.lane.b32.xlu0 %v1522, 80
        %v2439 = vpop.permute.xlu0 %2438
        %2440 = vrot.lane.b32.xlu0 %v1525, 80
        %v2441 = vpop.permute.xlu0 %2440
        %2442 = vrot.lane.b32.xlu0 %v1528, 80
        %v2443 = vpop.permute.xlu0 %2442
        %2444 = vrot.lane.b32.xlu0 %v1531, 80
        %v2445 = vpop.permute.xlu0 %2444
        %2446 = vrot.lane.b32.xlu0 %v1534, 80
        %v2447 = vpop.permute.xlu0 %2446
        %2448 = vrot.lane.b32.xlu0 %v1537, 80
        %v2449 = vpop.permute.xlu0 %2448
        %s2466 = scalar_lea.vmem [#allocation4], 768
        %2467 = vst.msk [vmem:[%s2466] sm:$0xff] %vm1611, %v2419
        %2468 = vst.msk [vmem:[%s2466 + $0x8] sm:$0xff] %vm1611, %v2421
        %2469 = vst.msk [vmem:[%s2466 + $0x10] sm:$0xff] %vm1611, %v2423
        %2470 = vst.msk [vmem:[%s2466 + $0x18] sm:$0xff] %vm1611, %v2425
        %2471 = vst.msk [vmem:[%s2466 + $0x20] sm:$0xff] %vm1611, %v2427
        %2472 = vst.msk [vmem:[%s2466 + $0x28] sm:$0xff] %vm1611, %v2429
        %2473 = vst.msk [vmem:[%s2466 + $0x30] sm:$0xff] %vm1611, %v2431
        %2474 = vst.msk [vmem:[%s2466 + $0x38] sm:$0xff] %vm1611, %v2433
        %2475 = vst.msk [vmem:[%s2466 + $0x40] sm:$0xff] %vm1611, %v2435
        %2476 = vst.msk [vmem:[%s2466 + $0x48] sm:$0xff] %vm1611, %v2437
        %2477 = vst.msk [vmem:[%s2466 + $0x50] sm:$0xff] %vm1611, %v2439
        %2478 = vst.msk [vmem:[%s2466 + $0x58] sm:$0xff] %vm1611, %v2441
        %2479 = vst.msk [vmem:[%s2466 + $0x60] sm:$0xff] %vm1611, %v2443
        %2480 = vst.msk [vmem:[%s2466 + $0x68] sm:$0xff] %vm1611, %v2445
        %2481 = vst.msk [vmem:[%s2466 + $0x70] sm:$0xff] %vm1611, %v2447
        %2482 = vst.msk [vmem:[%s2466 + $0x78] sm:$0xff] %vm1611, %v2449
        %2483 = vrot.lane.b32.xlu0 %v1492, 72
        %v2484 = vpop.permute.xlu0 %2483
        %2485 = vrot.lane.b32.xlu0 %v1495, 72
        %v2486 = vpop.permute.xlu0 %2485
        %2487 = vrot.lane.b32.xlu0 %v1498, 72
        %v2488 = vpop.permute.xlu0 %2487
        %2489 = vrot.lane.b32.xlu0 %v1501, 72
        %v2490 = vpop.permute.xlu0 %2489
        %2491 = vrot.lane.b32.xlu0 %v1504, 72
        %v2492 = vpop.permute.xlu0 %2491
        %2493 = vrot.lane.b32.xlu0 %v1507, 72
        %v2494 = vpop.permute.xlu0 %2493
        %2495 = vrot.lane.b32.xlu0 %v1510, 72
        %v2496 = vpop.permute.xlu0 %2495
        %2497 = vrot.lane.b32.xlu0 %v1513, 72
        %v2498 = vpop.permute.xlu0 %2497
        %2499 = vrot.lane.b32.xlu0 %v1516, 72
        %v2500 = vpop.permute.xlu0 %2499
        %2501 = vrot.lane.b32.xlu0 %v1519, 72
        %v2502 = vpop.permute.xlu0 %2501
        %2503 = vrot.lane.b32.xlu0 %v1522, 72
        %v2504 = vpop.permute.xlu0 %2503
        %2505 = vrot.lane.b32.xlu0 %v1525, 72
        %v2506 = vpop.permute.xlu0 %2505
        %2507 = vrot.lane.b32.xlu0 %v1528, 72
        %v2508 = vpop.permute.xlu0 %2507
        %2509 = vrot.lane.b32.xlu0 %v1531, 72
        %v2510 = vpop.permute.xlu0 %2509
        %2511 = vrot.lane.b32.xlu0 %v1534, 72
        %v2512 = vpop.permute.xlu0 %2511
        %2513 = vrot.lane.b32.xlu0 %v1537, 72
        %v2514 = vpop.permute.xlu0 %2513
        %s2531 = scalar_lea.vmem [#allocation4], 896
        %2532 = vst.msk [vmem:[%s2531] sm:$0xff] %vm1611, %v2484
        %2533 = vst.msk [vmem:[%s2531 + $0x8] sm:$0xff] %vm1611, %v2486
        %2534 = vst.msk [vmem:[%s2531 + $0x10] sm:$0xff] %vm1611, %v2488
        %2535 = vst.msk [vmem:[%s2531 + $0x18] sm:$0xff] %vm1611, %v2490
        %2536 = vst.msk [vmem:[%s2531 + $0x20] sm:$0xff] %vm1611, %v2492
        %2537 = vst.msk [vmem:[%s2531 + $0x28] sm:$0xff] %vm1611, %v2494
        %2538 = vst.msk [vmem:[%s2531 + $0x30] sm:$0xff] %vm1611, %v2496
        %2539 = vst.msk [vmem:[%s2531 + $0x38] sm:$0xff] %vm1611, %v2498
        %2540 = vst.msk [vmem:[%s2531 + $0x40] sm:$0xff] %vm1611, %v2500
        %2541 = vst.msk [vmem:[%s2531 + $0x48] sm:$0xff] %vm1611, %v2502
        %2542 = vst.msk [vmem:[%s2531 + $0x50] sm:$0xff] %vm1611, %v2504
        %2543 = vst.msk [vmem:[%s2531 + $0x58] sm:$0xff] %vm1611, %v2506
        %2544 = vst.msk [vmem:[%s2531 + $0x60] sm:$0xff] %vm1611, %v2508
        %2545 = vst.msk [vmem:[%s2531 + $0x68] sm:$0xff] %vm1611, %v2510
        %2546 = vst.msk [vmem:[%s2531 + $0x70] sm:$0xff] %vm1611, %v2512
        %2547 = vst.msk [vmem:[%s2531 + $0x78] sm:$0xff] %vm1611, %v2514
        %2548 = vrot.lane.b32.xlu0 %v1492, 64
        %v2549 = vpop.permute.xlu0 %2548
        %2550 = vrot.lane.b32.xlu0 %v1495, 64
        %v2551 = vpop.permute.xlu0 %2550
        %2552 = vrot.lane.b32.xlu0 %v1498, 64
        %v2553 = vpop.permute.xlu0 %2552
        %2554 = vrot.lane.b32.xlu0 %v1501, 64
        %v2555 = vpop.permute.xlu0 %2554
        %2556 = vrot.lane.b32.xlu0 %v1504, 64
        %v2557 = vpop.permute.xlu0 %2556
        %2558 = vrot.lane.b32.xlu0 %v1507, 64
        %v2559 = vpop.permute.xlu0 %2558
        %2560 = vrot.lane.b32.xlu0 %v1510, 64
        %v2561 = vpop.permute.xlu0 %2560
        %2562 = vrot.lane.b32.xlu0 %v1513, 64
        %v2563 = vpop.permute.xlu0 %2562
        %2564 = vrot.lane.b32.xlu0 %v1516, 64
        %v2565 = vpop.permute.xlu0 %2564
        %2566 = vrot.lane.b32.xlu0 %v1519, 64
        %v2567 = vpop.permute.xlu0 %2566
        %2568 = vrot.lane.b32.xlu0 %v1522, 64
        %v2569 = vpop.permute.xlu0 %2568
        %2570 = vrot.lane.b32.xlu0 %v1525, 64
        %v2571 = vpop.permute.xlu0 %2570
        %2572 = vrot.lane.b32.xlu0 %v1528, 64
        %v2573 = vpop.permute.xlu0 %2572
        %2574 = vrot.lane.b32.xlu0 %v1531, 64
        %v2575 = vpop.permute.xlu0 %2574
        %2576 = vrot.lane.b32.xlu0 %v1534, 64
        %v2577 = vpop.permute.xlu0 %2576
        %2578 = vrot.lane.b32.xlu0 %v1537, 64
        %v2579 = vpop.permute.xlu0 %2578
        %s2596 = scalar_lea.vmem [#allocation4], 1024
        %2597 = vst.msk [vmem:[%s2596] sm:$0xff] %vm1611, %v2549
        %2598 = vst.msk [vmem:[%s2596 + $0x8] sm:$0xff] %vm1611, %v2551
        %2599 = vst.msk [vmem:[%s2596 + $0x10] sm:$0xff] %vm1611, %v2553
        %2600 = vst.msk [vmem:[%s2596 + $0x18] sm:$0xff] %vm1611, %v2555
        %2601 = vst.msk [vmem:[%s2596 + $0x20] sm:$0xff] %vm1611, %v2557
        %2602 = vst.msk [vmem:[%s2596 + $0x28] sm:$0xff] %vm1611, %v2559
        %2603 = vst.msk [vmem:[%s2596 + $0x30] sm:$0xff] %vm1611, %v2561
        %2604 = vst.msk [vmem:[%s2596 + $0x38] sm:$0xff] %vm1611, %v2563
        %2605 = vst.msk [vmem:[%s2596 + $0x40] sm:$0xff] %vm1611, %v2565
        %2606 = vst.msk [vmem:[%s2596 + $0x48] sm:$0xff] %vm1611, %v2567
        %2607 = vst.msk [vmem:[%s2596 + $0x50] sm:$0xff] %vm1611, %v2569
        %2608 = vst.msk [vmem:[%s2596 + $0x58] sm:$0xff] %vm1611, %v2571
        %2609 = vst.msk [vmem:[%s2596 + $0x60] sm:$0xff] %vm1611, %v2573
        %2610 = vst.msk [vmem:[%s2596 + $0x68] sm:$0xff] %vm1611, %v2575
        %2611 = vst.msk [vmem:[%s2596 + $0x70] sm:$0xff] %vm1611, %v2577
        %2612 = vst.msk [vmem:[%s2596 + $0x78] sm:$0xff] %vm1611, %v2579
        %2613 = vrot.lane.b32.xlu0 %v1492, 56
        %v2614 = vpop.permute.xlu0 %2613
        %2615 = vrot.lane.b32.xlu0 %v1495, 56
        %v2616 = vpop.permute.xlu0 %2615
        %2617 = vrot.lane.b32.xlu0 %v1498, 56
        %v2618 = vpop.permute.xlu0 %2617
        %2619 = vrot.lane.b32.xlu0 %v1501, 56
        %v2620 = vpop.permute.xlu0 %2619
        %2621 = vrot.lane.b32.xlu0 %v1504, 56
        %v2622 = vpop.permute.xlu0 %2621
        %2623 = vrot.lane.b32.xlu0 %v1507, 56
        %v2624 = vpop.permute.xlu0 %2623
        %2625 = vrot.lane.b32.xlu0 %v1510, 56
        %v2626 = vpop.permute.xlu0 %2625
        %2627 = vrot.lane.b32.xlu0 %v1513, 56
        %v2628 = vpop.permute.xlu0 %2627
        %2629 = vrot.lane.b32.xlu0 %v1516, 56
        %v2630 = vpop.permute.xlu0 %2629
        %2631 = vrot.lane.b32.xlu0 %v1519, 56
        %v2632 = vpop.permute.xlu0 %2631
        %2633 = vrot.lane.b32.xlu0 %v1522, 56
        %v2634 = vpop.permute.xlu0 %2633
        %2635 = vrot.lane.b32.xlu0 %v1525, 56
        %v2636 = vpop.permute.xlu0 %2635
        %2637 = vrot.lane.b32.xlu0 %v1528, 56
        %v2638 = vpop.permute.xlu0 %2637
        %2639 = vrot.lane.b32.xlu0 %v1531, 56
        %v2640 = vpop.permute.xlu0 %2639
        %2641 = vrot.lane.b32.xlu0 %v1534, 56
        %v2642 = vpop.permute.xlu0 %2641
        %2643 = vrot.lane.b32.xlu0 %v1537, 56
        %v2644 = vpop.permute.xlu0 %2643
        %s2661 = scalar_lea.vmem [#allocation4], 1152
        %2662 = vst.msk [vmem:[%s2661] sm:$0xff] %vm1611, %v2614
        %2663 = vst.msk [vmem:[%s2661 + $0x8] sm:$0xff] %vm1611, %v2616
        %2664 = vst.msk [vmem:[%s2661 + $0x10] sm:$0xff] %vm1611, %v2618
        %2665 = vst.msk [vmem:[%s2661 + $0x18] sm:$0xff] %vm1611, %v2620
        %2666 = vst.msk [vmem:[%s2661 + $0x20] sm:$0xff] %vm1611, %v2622
        %2667 = vst.msk [vmem:[%s2661 + $0x28] sm:$0xff] %vm1611, %v2624
        %2668 = vst.msk [vmem:[%s2661 + $0x30] sm:$0xff] %vm1611, %v2626
        %2669 = vst.msk [vmem:[%s2661 + $0x38] sm:$0xff] %vm1611, %v2628
        %2670 = vst.msk [vmem:[%s2661 + $0x40] sm:$0xff] %vm1611, %v2630
        %2671 = vst.msk [vmem:[%s2661 + $0x48] sm:$0xff] %vm1611, %v2632
        %2672 = vst.msk [vmem:[%s2661 + $0x50] sm:$0xff] %vm1611, %v2634
        %2673 = vst.msk [vmem:[%s2661 + $0x58] sm:$0xff] %vm1611, %v2636
        %2674 = vst.msk [vmem:[%s2661 + $0x60] sm:$0xff] %vm1611, %v2638
        %2675 = vst.msk [vmem:[%s2661 + $0x68] sm:$0xff] %vm1611, %v2640
        %2676 = vst.msk [vmem:[%s2661 + $0x70] sm:$0xff] %vm1611, %v2642
        %2677 = vst.msk [vmem:[%s2661 + $0x78] sm:$0xff] %vm1611, %v2644
        %2678 = vrot.lane.b32.xlu0 %v1492, 48
        %v2679 = vpop.permute.xlu0 %2678
        %2680 = vrot.lane.b32.xlu0 %v1495, 48
        %v2681 = vpop.permute.xlu0 %2680
        %2682 = vrot.lane.b32.xlu0 %v1498, 48
        %v2683 = vpop.permute.xlu0 %2682
        %2684 = vrot.lane.b32.xlu0 %v1501, 48
        %v2685 = vpop.permute.xlu0 %2684
        %2686 = vrot.lane.b32.xlu0 %v1504, 48
        %v2687 = vpop.permute.xlu0 %2686
        %2688 = vrot.lane.b32.xlu0 %v1507, 48
        %v2689 = vpop.permute.xlu0 %2688
        %2690 = vrot.lane.b32.xlu0 %v1510, 48
        %v2691 = vpop.permute.xlu0 %2690
        %2692 = vrot.lane.b32.xlu0 %v1513, 48
        %v2693 = vpop.permute.xlu0 %2692
        %2694 = vrot.lane.b32.xlu0 %v1516, 48
        %v2695 = vpop.permute.xlu0 %2694
        %2696 = vrot.lane.b32.xlu0 %v1519, 48
        %v2697 = vpop.permute.xlu0 %2696
        %2698 = vrot.lane.b32.xlu0 %v1522, 48
        %v2699 = vpop.permute.xlu0 %2698
        %2700 = vrot.lane.b32.xlu0 %v1525, 48
        %v2701 = vpop.permute.xlu0 %2700
        %2702 = vrot.lane.b32.xlu0 %v1528, 48
        %v2703 = vpop.permute.xlu0 %2702
        %2704 = vrot.lane.b32.xlu0 %v1531, 48
        %v2705 = vpop.permute.xlu0 %2704
        %2706 = vrot.lane.b32.xlu0 %v1534, 48
        %v2707 = vpop.permute.xlu0 %2706
        %2708 = vrot.lane.b32.xlu0 %v1537, 48
        %v2709 = vpop.permute.xlu0 %2708
        %s2726 = scalar_lea.vmem [#allocation4], 1280
        %2727 = vst.msk [vmem:[%s2726] sm:$0xff] %vm1611, %v2679
        %2728 = vst.msk [vmem:[%s2726 + $0x8] sm:$0xff] %vm1611, %v2681
        %2729 = vst.msk [vmem:[%s2726 + $0x10] sm:$0xff] %vm1611, %v2683
        %2730 = vst.msk [vmem:[%s2726 + $0x18] sm:$0xff] %vm1611, %v2685
        %2731 = vst.msk [vmem:[%s2726 + $0x20] sm:$0xff] %vm1611, %v2687
        %2732 = vst.msk [vmem:[%s2726 + $0x28] sm:$0xff] %vm1611, %v2689
        %2733 = vst.msk [vmem:[%s2726 + $0x30] sm:$0xff] %vm1611, %v2691
        %2734 = vst.msk [vmem:[%s2726 + $0x38] sm:$0xff] %vm1611, %v2693
        %2735 = vst.msk [vmem:[%s2726 + $0x40] sm:$0xff] %vm1611, %v2695
        %2736 = vst.msk [vmem:[%s2726 + $0x48] sm:$0xff] %vm1611, %v2697
        %2737 = vst.msk [vmem:[%s2726 + $0x50] sm:$0xff] %vm1611, %v2699
        %2738 = vst.msk [vmem:[%s2726 + $0x58] sm:$0xff] %vm1611, %v2701
        %2739 = vst.msk [vmem:[%s2726 + $0x60] sm:$0xff] %vm1611, %v2703
        %2740 = vst.msk [vmem:[%s2726 + $0x68] sm:$0xff] %vm1611, %v2705
        %2741 = vst.msk [vmem:[%s2726 + $0x70] sm:$0xff] %vm1611, %v2707
        %2742 = vst.msk [vmem:[%s2726 + $0x78] sm:$0xff] %vm1611, %v2709
        %2743 = vrot.lane.b32.xlu0 %v1492, 40
        %v2744 = vpop.permute.xlu0 %2743
        %2745 = vrot.lane.b32.xlu0 %v1495, 40
        %v2746 = vpop.permute.xlu0 %2745
        %2747 = vrot.lane.b32.xlu0 %v1498, 40
        %v2748 = vpop.permute.xlu0 %2747
        %2749 = vrot.lane.b32.xlu0 %v1501, 40
        %v2750 = vpop.permute.xlu0 %2749
        %2751 = vrot.lane.b32.xlu0 %v1504, 40
        %v2752 = vpop.permute.xlu0 %2751
        %2753 = vrot.lane.b32.xlu0 %v1507, 40
        %v2754 = vpop.permute.xlu0 %2753
        %2755 = vrot.lane.b32.xlu0 %v1510, 40
        %v2756 = vpop.permute.xlu0 %2755
        %2757 = vrot.lane.b32.xlu0 %v1513, 40
        %v2758 = vpop.permute.xlu0 %2757
        %2759 = vrot.lane.b32.xlu0 %v1516, 40
        %v2760 = vpop.permute.xlu0 %2759
        %2761 = vrot.lane.b32.xlu0 %v1519, 40
        %v2762 = vpop.permute.xlu0 %2761
        %2763 = vrot.lane.b32.xlu0 %v1522, 40
        %v2764 = vpop.permute.xlu0 %2763
        %2765 = vrot.lane.b32.xlu0 %v1525, 40
        %v2766 = vpop.permute.xlu0 %2765
        %2767 = vrot.lane.b32.xlu0 %v1528, 40
        %v2768 = vpop.permute.xlu0 %2767
        %2769 = vrot.lane.b32.xlu0 %v1531, 40
        %v2770 = vpop.permute.xlu0 %2769
        %2771 = vrot.lane.b32.xlu0 %v1534, 40
        %v2772 = vpop.permute.xlu0 %2771
        %2773 = vrot.lane.b32.xlu0 %v1537, 40
        %v2774 = vpop.permute.xlu0 %2773
        %s2791 = scalar_lea.vmem [#allocation4], 1408
        %2792 = vst.msk [vmem:[%s2791] sm:$0xff] %vm1611, %v2744
        %2793 = vst.msk [vmem:[%s2791 + $0x8] sm:$0xff] %vm1611, %v2746
        %2794 = vst.msk [vmem:[%s2791 + $0x10] sm:$0xff] %vm1611, %v2748
        %2795 = vst.msk [vmem:[%s2791 + $0x18] sm:$0xff] %vm1611, %v2750
        %2796 = vst.msk [vmem:[%s2791 + $0x20] sm:$0xff] %vm1611, %v2752
        %2797 = vst.msk [vmem:[%s2791 + $0x28] sm:$0xff] %vm1611, %v2754
        %2798 = vst.msk [vmem:[%s2791 + $0x30] sm:$0xff] %vm1611, %v2756
        %2799 = vst.msk [vmem:[%s2791 + $0x38] sm:$0xff] %vm1611, %v2758
        %2800 = vst.msk [vmem:[%s2791 + $0x40] sm:$0xff] %vm1611, %v2760
        %2801 = vst.msk [vmem:[%s2791 + $0x48] sm:$0xff] %vm1611, %v2762
        %2802 = vst.msk [vmem:[%s2791 + $0x50] sm:$0xff] %vm1611, %v2764
        %2803 = vst.msk [vmem:[%s2791 + $0x58] sm:$0xff] %vm1611, %v2766
        %2804 = vst.msk [vmem:[%s2791 + $0x60] sm:$0xff] %vm1611, %v2768
        %2805 = vst.msk [vmem:[%s2791 + $0x68] sm:$0xff] %vm1611, %v2770
        %2806 = vst.msk [vmem:[%s2791 + $0x70] sm:$0xff] %vm1611, %v2772
        %2807 = vst.msk [vmem:[%s2791 + $0x78] sm:$0xff] %vm1611, %v2774
        %2808 = vrot.lane.b32.xlu0 %v1492, 32
        %v2809 = vpop.permute.xlu0 %2808
        %2810 = vrot.lane.b32.xlu0 %v1495, 32
        %v2811 = vpop.permute.xlu0 %2810
        %2812 = vrot.lane.b32.xlu0 %v1498, 32
        %v2813 = vpop.permute.xlu0 %2812
        %2814 = vrot.lane.b32.xlu0 %v1501, 32
        %v2815 = vpop.permute.xlu0 %2814
        %2816 = vrot.lane.b32.xlu0 %v1504, 32
        %v2817 = vpop.permute.xlu0 %2816
        %2818 = vrot.lane.b32.xlu0 %v1507, 32
        %v2819 = vpop.permute.xlu0 %2818
        %2820 = vrot.lane.b32.xlu0 %v1510, 32
        %v2821 = vpop.permute.xlu0 %2820
        %2822 = vrot.lane.b32.xlu0 %v1513, 32
        %v2823 = vpop.permute.xlu0 %2822
        %2824 = vrot.lane.b32.xlu0 %v1516, 32
        %v2825 = vpop.permute.xlu0 %2824
        %2826 = vrot.lane.b32.xlu0 %v1519, 32
        %v2827 = vpop.permute.xlu0 %2826
        %2828 = vrot.lane.b32.xlu0 %v1522, 32
        %v2829 = vpop.permute.xlu0 %2828
        %2830 = vrot.lane.b32.xlu0 %v1525, 32
        %v2831 = vpop.permute.xlu0 %2830
        %2832 = vrot.lane.b32.xlu0 %v1528, 32
        %v2833 = vpop.permute.xlu0 %2832
        %2834 = vrot.lane.b32.xlu0 %v1531, 32
        %v2835 = vpop.permute.xlu0 %2834
        %2836 = vrot.lane.b32.xlu0 %v1534, 32
        %v2837 = vpop.permute.xlu0 %2836
        %2838 = vrot.lane.b32.xlu0 %v1537, 32
        %v2839 = vpop.permute.xlu0 %2838
        %s2856 = scalar_lea.vmem [#allocation4], 1536
        %2857 = vst.msk [vmem:[%s2856] sm:$0xff] %vm1611, %v2809
        %2858 = vst.msk [vmem:[%s2856 + $0x8] sm:$0xff] %vm1611, %v2811
        %2859 = vst.msk [vmem:[%s2856 + $0x10] sm:$0xff] %vm1611, %v2813
        %2860 = vst.msk [vmem:[%s2856 + $0x18] sm:$0xff] %vm1611, %v2815
        %2861 = vst.msk [vmem:[%s2856 + $0x20] sm:$0xff] %vm1611, %v2817
        %2862 = vst.msk [vmem:[%s2856 + $0x28] sm:$0xff] %vm1611, %v2819
        %2863 = vst.msk [vmem:[%s2856 + $0x30] sm:$0xff] %vm1611, %v2821
        %2864 = vst.msk [vmem:[%s2856 + $0x38] sm:$0xff] %vm1611, %v2823
        %2865 = vst.msk [vmem:[%s2856 + $0x40] sm:$0xff] %vm1611, %v2825
        %2866 = vst.msk [vmem:[%s2856 + $0x48] sm:$0xff] %vm1611, %v2827
        %2867 = vst.msk [vmem:[%s2856 + $0x50] sm:$0xff] %vm1611, %v2829
        %2868 = vst.msk [vmem:[%s2856 + $0x58] sm:$0xff] %vm1611, %v2831
        %2869 = vst.msk [vmem:[%s2856 + $0x60] sm:$0xff] %vm1611, %v2833
        %2870 = vst.msk [vmem:[%s2856 + $0x68] sm:$0xff] %vm1611, %v2835
        %2871 = vst.msk [vmem:[%s2856 + $0x70] sm:$0xff] %vm1611, %v2837
        %2872 = vst.msk [vmem:[%s2856 + $0x78] sm:$0xff] %vm1611, %v2839
        %2873 = vrot.lane.b32.xlu0 %v1492, 24
        %v2874 = vpop.permute.xlu0 %2873
        %2875 = vrot.lane.b32.xlu0 %v1495, 24
        %v2876 = vpop.permute.xlu0 %2875
        %2877 = vrot.lane.b32.xlu0 %v1498, 24
        %v2878 = vpop.permute.xlu0 %2877
        %2879 = vrot.lane.b32.xlu0 %v1501, 24
        %v2880 = vpop.permute.xlu0 %2879
        %2881 = vrot.lane.b32.xlu0 %v1504, 24
        %v2882 = vpop.permute.xlu0 %2881
        %2883 = vrot.lane.b32.xlu0 %v1507, 24
        %v2884 = vpop.permute.xlu0 %2883
        %2885 = vrot.lane.b32.xlu0 %v1510, 24
        %v2886 = vpop.permute.xlu0 %2885
        %2887 = vrot.lane.b32.xlu0 %v1513, 24
        %v2888 = vpop.permute.xlu0 %2887
        %2889 = vrot.lane.b32.xlu0 %v1516, 24
        %v2890 = vpop.permute.xlu0 %2889
        %2891 = vrot.lane.b32.xlu0 %v1519, 24
        %v2892 = vpop.permute.xlu0 %2891
        %2893 = vrot.lane.b32.xlu0 %v1522, 24
        %v2894 = vpop.permute.xlu0 %2893
        %2895 = vrot.lane.b32.xlu0 %v1525, 24
        %v2896 = vpop.permute.xlu0 %2895
        %2897 = vrot.lane.b32.xlu0 %v1528, 24
        %v2898 = vpop.permute.xlu0 %2897
        %2899 = vrot.lane.b32.xlu0 %v1531, 24
        %v2900 = vpop.permute.xlu0 %2899
        %2901 = vrot.lane.b32.xlu0 %v1534, 24
        %v2902 = vpop.permute.xlu0 %2901
        %2903 = vrot.lane.b32.xlu0 %v1537, 24
        %v2904 = vpop.permute.xlu0 %2903
        %s2921 = scalar_lea.vmem [#allocation4], 1664
        %2922 = vst.msk [vmem:[%s2921] sm:$0xff] %vm1611, %v2874
        %2923 = vst.msk [vmem:[%s2921 + $0x8] sm:$0xff] %vm1611, %v2876
        %2924 = vst.msk [vmem:[%s2921 + $0x10] sm:$0xff] %vm1611, %v2878
        %2925 = vst.msk [vmem:[%s2921 + $0x18] sm:$0xff] %vm1611, %v2880
        %2926 = vst.msk [vmem:[%s2921 + $0x20] sm:$0xff] %vm1611, %v2882
        %2927 = vst.msk [vmem:[%s2921 + $0x28] sm:$0xff] %vm1611, %v2884
        %2928 = vst.msk [vmem:[%s2921 + $0x30] sm:$0xff] %vm1611, %v2886
        %2929 = vst.msk [vmem:[%s2921 + $0x38] sm:$0xff] %vm1611, %v2888
        %2930 = vst.msk [vmem:[%s2921 + $0x40] sm:$0xff] %vm1611, %v2890
        %2931 = vst.msk [vmem:[%s2921 + $0x48] sm:$0xff] %vm1611, %v2892
        %2932 = vst.msk [vmem:[%s2921 + $0x50] sm:$0xff] %vm1611, %v2894
        %2933 = vst.msk [vmem:[%s2921 + $0x58] sm:$0xff] %vm1611, %v2896
        %2934 = vst.msk [vmem:[%s2921 + $0x60] sm:$0xff] %vm1611, %v2898
        %2935 = vst.msk [vmem:[%s2921 + $0x68] sm:$0xff] %vm1611, %v2900
        %2936 = vst.msk [vmem:[%s2921 + $0x70] sm:$0xff] %vm1611, %v2902
        %2937 = vst.msk [vmem:[%s2921 + $0x78] sm:$0xff] %vm1611, %v2904
        %2938 = vrot.lane.b32.xlu0 %v1492, 16
        %v2939 = vpop.permute.xlu0 %2938
        %2940 = vrot.lane.b32.xlu0 %v1495, 16
        %v2941 = vpop.permute.xlu0 %2940
        %2942 = vrot.lane.b32.xlu0 %v1498, 16
        %v2943 = vpop.permute.xlu0 %2942
        %2944 = vrot.lane.b32.xlu0 %v1501, 16
        %v2945 = vpop.permute.xlu0 %2944
        %2946 = vrot.lane.b32.xlu0 %v1504, 16
        %v2947 = vpop.permute.xlu0 %2946
        %2948 = vrot.lane.b32.xlu0 %v1507, 16
        %v2949 = vpop.permute.xlu0 %2948
        %2950 = vrot.lane.b32.xlu0 %v1510, 16
        %v2951 = vpop.permute.xlu0 %2950
        %2952 = vrot.lane.b32.xlu0 %v1513, 16
        %v2953 = vpop.permute.xlu0 %2952
        %2954 = vrot.lane.b32.xlu0 %v1516, 16
        %v2955 = vpop.permute.xlu0 %2954
        %2956 = vrot.lane.b32.xlu0 %v1519, 16
        %v2957 = vpop.permute.xlu0 %2956
        %2958 = vrot.lane.b32.xlu0 %v1522, 16
        %v2959 = vpop.permute.xlu0 %2958
        %2960 = vrot.lane.b32.xlu0 %v1525, 16
        %v2961 = vpop.permute.xlu0 %2960
        %2962 = vrot.lane.b32.xlu0 %v1528, 16
        %v2963 = vpop.permute.xlu0 %2962
        %2964 = vrot.lane.b32.xlu0 %v1531, 16
        %v2965 = vpop.permute.xlu0 %2964
        %2966 = vrot.lane.b32.xlu0 %v1534, 16
        %v2967 = vpop.permute.xlu0 %2966
        %2968 = vrot.lane.b32.xlu0 %v1537, 16
        %v2969 = vpop.permute.xlu0 %2968
        %s2986 = scalar_lea.vmem [#allocation4], 1792
        %2987 = vst.msk [vmem:[%s2986] sm:$0xff] %vm1611, %v2939
        %2988 = vst.msk [vmem:[%s2986 + $0x8] sm:$0xff] %vm1611, %v2941
        %2989 = vst.msk [vmem:[%s2986 + $0x10] sm:$0xff] %vm1611, %v2943
        %2990 = vst.msk [vmem:[%s2986 + $0x18] sm:$0xff] %vm1611, %v2945
        %2991 = vst.msk [vmem:[%s2986 + $0x20] sm:$0xff] %vm1611, %v2947
        %2992 = vst.msk [vmem:[%s2986 + $0x28] sm:$0xff] %vm1611, %v2949
        %2993 = vst.msk [vmem:[%s2986 + $0x30] sm:$0xff] %vm1611, %v2951
        %2994 = vst.msk [vmem:[%s2986 + $0x38] sm:$0xff] %vm1611, %v2953
        %2995 = vst.msk [vmem:[%s2986 + $0x40] sm:$0xff] %vm1611, %v2955
        %2996 = vst.msk [vmem:[%s2986 + $0x48] sm:$0xff] %vm1611, %v2957
        %2997 = vst.msk [vmem:[%s2986 + $0x50] sm:$0xff] %vm1611, %v2959
        %2998 = vst.msk [vmem:[%s2986 + $0x58] sm:$0xff] %vm1611, %v2961
        %2999 = vst.msk [vmem:[%s2986 + $0x60] sm:$0xff] %vm1611, %v2963
        %3000 = vst.msk [vmem:[%s2986 + $0x68] sm:$0xff] %vm1611, %v2965
        %3001 = vst.msk [vmem:[%s2986 + $0x70] sm:$0xff] %vm1611, %v2967
        %3002 = vst.msk [vmem:[%s2986 + $0x78] sm:$0xff] %vm1611, %v2969
        %3003 = vrot.lane.b32.xlu0 %v1492, 8
        %v3004 = vpop.permute.xlu0 %3003
        %3005 = vrot.lane.b32.xlu0 %v1495, 8
        %v3006 = vpop.permute.xlu0 %3005
        %3007 = vrot.lane.b32.xlu0 %v1498, 8
        %v3008 = vpop.permute.xlu0 %3007
        %3009 = vrot.lane.b32.xlu0 %v1501, 8
        %v3010 = vpop.permute.xlu0 %3009
        %3011 = vrot.lane.b32.xlu0 %v1504, 8
        %v3012 = vpop.permute.xlu0 %3011
        %3013 = vrot.lane.b32.xlu0 %v1507, 8
        %v3014 = vpop.permute.xlu0 %3013
        %3015 = vrot.lane.b32.xlu0 %v1510, 8
        %v3016 = vpop.permute.xlu0 %3015
        %3017 = vrot.lane.b32.xlu0 %v1513, 8
        %v3018 = vpop.permute.xlu0 %3017
        %3019 = vrot.lane.b32.xlu0 %v1516, 8
        %v3020 = vpop.permute.xlu0 %3019
        %3021 = vrot.lane.b32.xlu0 %v1519, 8
        %v3022 = vpop.permute.xlu0 %3021
        %3023 = vrot.lane.b32.xlu0 %v1522, 8
        %v3024 = vpop.permute.xlu0 %3023
        %3025 = vrot.lane.b32.xlu0 %v1525, 8
        %v3026 = vpop.permute.xlu0 %3025
        %3027 = vrot.lane.b32.xlu0 %v1528, 8
        %v3028 = vpop.permute.xlu0 %3027
        %3029 = vrot.lane.b32.xlu0 %v1531, 8
        %v3030 = vpop.permute.xlu0 %3029
        %3031 = vrot.lane.b32.xlu0 %v1534, 8
        %v3032 = vpop.permute.xlu0 %3031
        %3033 = vrot.lane.b32.xlu0 %v1537, 8
        %v3034 = vpop.permute.xlu0 %3033
        %s3051 = scalar_lea.vmem [#allocation4], 1920
        %3052 = vst.msk [vmem:[%s3051] sm:$0xff] %vm1611, %v3004
        %3053 = vst.msk [vmem:[%s3051 + $0x8] sm:$0xff] %vm1611, %v3006
        %3054 = vst.msk [vmem:[%s3051 + $0x10] sm:$0xff] %vm1611, %v3008
        %3055 = vst.msk [vmem:[%s3051 + $0x18] sm:$0xff] %vm1611, %v3010
        %3056 = vst.msk [vmem:[%s3051 + $0x20] sm:$0xff] %vm1611, %v3012
        %3057 = vst.msk [vmem:[%s3051 + $0x28] sm:$0xff] %vm1611, %v3014
        %3058 = vst.msk [vmem:[%s3051 + $0x30] sm:$0xff] %vm1611, %v3016
        %3059 = vst.msk [vmem:[%s3051 + $0x38] sm:$0xff] %vm1611, %v3018
        %3060 = vst.msk [vmem:[%s3051 + $0x40] sm:$0xff] %vm1611, %v3020
        %3061 = vst.msk [vmem:[%s3051 + $0x48] sm:$0xff] %vm1611, %v3022
        %3062 = vst.msk [vmem:[%s3051 + $0x50] sm:$0xff] %vm1611, %v3024
        %3063 = vst.msk [vmem:[%s3051 + $0x58] sm:$0xff] %vm1611, %v3026
        %3064 = vst.msk [vmem:[%s3051 + $0x60] sm:$0xff] %vm1611, %v3028
        %3065 = vst.msk [vmem:[%s3051 + $0x68] sm:$0xff] %vm1611, %v3030
        %3066 = vst.msk [vmem:[%s3051 + $0x70] sm:$0xff] %vm1611, %v3032
        %3067 = vst.msk [vmem:[%s3051 + $0x78] sm:$0xff] %vm1611, %v3034
        %v3068 = vld [vmem:[%s8] sm:$0xff]
        %v3069 = vld [vmem:[%s8 + $0x8] sm:$0xff]
        %v3070 = vld [vmem:[%s8 + $0x10] sm:$0xff]
        %v3071 = vld [vmem:[%s8 + $0x18] sm:$0xff]
        %v3072 = vld [vmem:[%s8 + $0x20] sm:$0xff]
        %v3073 = vld [vmem:[%s8 + $0x28] sm:$0xff]
        %v3074 = vld [vmem:[%s8 + $0x30] sm:$0xff]
        %v3075 = vld [vmem:[%s8 + $0x38] sm:$0xff]
        %v3076 = vmul.f32 %v3068, 1.442695
        %v3077 = vpow.pop %v3076
        %v3078 = vmul.f32 %v3069, 1.442695
        %v3079 = vpow.pop %v3078
        %v3080 = vmul.f32 %v3070, 1.442695
        %v3081 = vpow.pop %v3080
        %v3082 = vmul.f32 %v3071, 1.442695
        %v3083 = vpow.pop %v3082
        %v3084 = vmul.f32 %v3072, 1.442695
        %v3085 = vpow.pop %v3084
        %v3086 = vmul.f32 %v3073, 1.442695
        %v3087 = vpow.pop %v3086
        %v3088 = vmul.f32 %v3074, 1.442695
        %v3089 = vpow.pop %v3088
        %v3090 = vmul.f32 %v3075, 1.442695
        %v3091 = vpow.pop %v3090
        %v3092 = vsub.f32 0.0, %v3077
        %v3093 = vsub.f32 0.0, %v3079
        %v3094 = vsub.f32 0.0, %v3081
        %v3095 = vsub.f32 0.0, %v3083
        %v3096 = vsub.f32 0.0, %v3085
        %v3097 = vsub.f32 0.0, %v3087
        %v3098 = vsub.f32 0.0, %v3089
        %v3099 = vsub.f32 0.0, %v3091
        loop: start=0, step=1, limit=16
        $region65: #{tpu_custom_call.1} parent=59 // loop_pre_header
          _
        $region66: #{tpu_custom_call.1} parent=59 // loop_header
          %s3101 = sphi 0, %s3105
          %p3102 = scmp.ge.s32.totalorder %s3101, 16
        $region67: #{tpu_custom_call.1} parent=59 // loop_header_branch
          %3104 = sbr.rel (%p3102) target = $region71
        $region68: #{tpu_custom_call.1} parent=59 // loop_body
          %s3106 = smul.u32 %s3101, 8
          %s3107 = scalar_lea.vmem [#allocation2], %s3106
          %v3108 = vld [vmem:[%s3107] sm:$0x1]
          %v3109 = vperm.slane %v3108, 0
          %v3110 = vmul.f32 %v3092, %v3109
          %v3111 = vmul.f32 %v3093, %v3109
          %v3112 = vmul.f32 %v3094, %v3109
          %v3113 = vmul.f32 %v3095, %v3109
          %v3114 = vmul.f32 %v3096, %v3109
          %v3115 = vmul.f32 %v3097, %v3109
          %v3116 = vmul.f32 %v3098, %v3109
          %v3117 = vmul.f32 %v3099, %v3109
          %v3118 = vmul.f32 %v3110, 1.442695
          %v3119 = vpow.pop %v3118
          %v3120 = vmul.f32 %v3111, 1.442695
          %v3121 = vpow.pop %v3120
          %v3122 = vmul.f32 %v3112, 1.442695
          %v3123 = vpow.pop %v3122
          %v3124 = vmul.f32 %v3113, 1.442695
          %v3125 = vpow.pop %v3124
          %v3126 = vmul.f32 %v3114, 1.442695
          %v3127 = vpow.pop %v3126
          %v3128 = vmul.f32 %v3115, 1.442695
          %v3129 = vpow.pop %v3128
          %v3130 = vmul.f32 %v3116, 1.442695
          %v3131 = vpow.pop %v3130
          %v3132 = vmul.f32 %v3117, 1.442695
          %v3133 = vpow.pop %v3132
          %s3134 = smul.u32 %s3106, 64
          %s3135 = scalar_lea.vmem [#allocation5], %s3134
          %3136 = vst.msk [vmem:[%s3135] sm:$0xff] %vm1377, %v3119
          %3137 = vst.msk [vmem:[%s3135 + $0x8] sm:$0xff] %vm1377, %v3121
          %3138 = vst.msk [vmem:[%s3135 + $0x10] sm:$0xff] %vm1377, %v3123
          %3139 = vst.msk [vmem:[%s3135 + $0x18] sm:$0xff] %vm1377, %v3125
          %3140 = vst.msk [vmem:[%s3135 + $0x20] sm:$0xff] %vm1377, %v3127
          %3141 = vst.msk [vmem:[%s3135 + $0x28] sm:$0xff] %vm1377, %v3129
          %3142 = vst.msk [vmem:[%s3135 + $0x30] sm:$0xff] %vm1377, %v3131
          %3143 = vst.msk [vmem:[%s3135 + $0x38] sm:$0xff] %vm1377, %v3133
          %s3144 = sadd.s32 %s3106, 1
          %s3145 = scalar_lea.vmem [#allocation2], %s3144
          %v3146 = vld [vmem:[%s3145] sm:$0x1]
          %v3147 = vperm.slane %v3146, 0
          %v3148 = vmul.f32 %v3092, %v3147
          %v3149 = vmul.f32 %v3093, %v3147
          %v3150 = vmul.f32 %v3094, %v3147
          %v3151 = vmul.f32 %v3095, %v3147
          %v3152 = vmul.f32 %v3096, %v3147
          %v3153 = vmul.f32 %v3097, %v3147
          %v3154 = vmul.f32 %v3098, %v3147
          %v3155 = vmul.f32 %v3099, %v3147
          %v3156 = vmul.f32 %v3148, 1.442695
          %v3157 = vpow.pop %v3156
          %v3158 = vmul.f32 %v3149, 1.442695
          %v3159 = vpow.pop %v3158
          %v3160 = vmul.f32 %v3150, 1.442695
          %v3161 = vpow.pop %v3160
          %v3162 = vmul.f32 %v3151, 1.442695
          %v3163 = vpow.pop %v3162
          %v3164 = vmul.f32 %v3152, 1.442695
          %v3165 = vpow.pop %v3164
          %v3166 = vmul.f32 %v3153, 1.442695
          %v3167 = vpow.pop %v3166
          %v3168 = vmul.f32 %v3154, 1.442695
          %v3169 = vpow.pop %v3168
          %v3170 = vmul.f32 %v3155, 1.442695
          %v3171 = vpow.pop %v3170
          %s3172 = smul.u32 %s3144, 64
          %s3173 = scalar_lea.vmem [#allocation5], %s3172
          %3174 = vst.msk [vmem:[%s3173] sm:$0xff] %vm1377, %v3157
          %3175 = vst.msk [vmem:[%s3173 + $0x8] sm:$0xff] %vm1377, %v3159
          %3176 = vst.msk [vmem:[%s3173 + $0x10] sm:$0xff] %vm1377, %v3161
          %3177 = vst.msk [vmem:[%s3173 + $0x18] sm:$0xff] %vm1377, %v3163
          %3178 = vst.msk [vmem:[%s3173 + $0x20] sm:$0xff] %vm1377, %v3165
          %3179 = vst.msk [vmem:[%s3173 + $0x28] sm:$0xff] %vm1377, %v3167
          %3180 = vst.msk [vmem:[%s3173 + $0x30] sm:$0xff] %vm1377, %v3169
          %3181 = vst.msk [vmem:[%s3173 + $0x38] sm:$0xff] %vm1377, %v3171
          %s3182 = sadd.s32 %s3106, 2
          %s3183 = scalar_lea.vmem [#allocation2], %s3182
          %v3184 = vld [vmem:[%s3183] sm:$0x1]
          %v3185 = vperm.slane %v3184, 0
          %v3186 = vmul.f32 %v3092, %v3185
          %v3187 = vmul.f32 %v3093, %v3185
          %v3188 = vmul.f32 %v3094, %v3185
          %v3189 = vmul.f32 %v3095, %v3185
          %v3190 = vmul.f32 %v3096, %v3185
          %v3191 = vmul.f32 %v3097, %v3185
          %v3192 = vmul.f32 %v3098, %v3185
          %v3193 = vmul.f32 %v3099, %v3185
          %v3194 = vmul.f32 %v3186, 1.442695
          %v3195 = vpow.pop %v3194
          %v3196 = vmul.f32 %v3187, 1.442695
          %v3197 = vpow.pop %v3196
          %v3198 = vmul.f32 %v3188, 1.442695
          %v3199 = vpow.pop %v3198
          %v3200 = vmul.f32 %v3189, 1.442695
          %v3201 = vpow.pop %v3200
          %v3202 = vmul.f32 %v3190, 1.442695
          %v3203 = vpow.pop %v3202
          %v3204 = vmul.f32 %v3191, 1.442695
          %v3205 = vpow.pop %v3204
          %v3206 = vmul.f32 %v3192, 1.442695
          %v3207 = vpow.pop %v3206
          %v3208 = vmul.f32 %v3193, 1.442695
          %v3209 = vpow.pop %v3208
          %s3210 = smul.u32 %s3182, 64
          %s3211 = scalar_lea.vmem [#allocation5], %s3210
          %3212 = vst.msk [vmem:[%s3211] sm:$0xff] %vm1377, %v3195
          %3213 = vst.msk [vmem:[%s3211 + $0x8] sm:$0xff] %vm1377, %v3197
          %3214 = vst.msk [vmem:[%s3211 + $0x10] sm:$0xff] %vm1377, %v3199
          %3215 = vst.msk [vmem:[%s3211 + $0x18] sm:$0xff] %vm1377, %v3201
          %3216 = vst.msk [vmem:[%s3211 + $0x20] sm:$0xff] %vm1377, %v3203
          %3217 = vst.msk [vmem:[%s3211 + $0x28] sm:$0xff] %vm1377, %v3205
          %3218 = vst.msk [vmem:[%s3211 + $0x30] sm:$0xff] %vm1377, %v3207
          %3219 = vst.msk [vmem:[%s3211 + $0x38] sm:$0xff] %vm1377, %v3209
          %s3220 = sadd.s32 %s3106, 3
          %s3221 = scalar_lea.vmem [#allocation2], %s3220
          %v3222 = vld [vmem:[%s3221] sm:$0x1]
          %v3223 = vperm.slane %v3222, 0
          %v3224 = vmul.f32 %v3092, %v3223
          %v3225 = vmul.f32 %v3093, %v3223
          %v3226 = vmul.f32 %v3094, %v3223
          %v3227 = vmul.f32 %v3095, %v3223
          %v3228 = vmul.f32 %v3096, %v3223
          %v3229 = vmul.f32 %v3097, %v3223
          %v3230 = vmul.f32 %v3098, %v3223
          %v3231 = vmul.f32 %v3099, %v3223
          %v3232 = vmul.f32 %v3224, 1.442695
          %v3233 = vpow.pop %v3232
          %v3234 = vmul.f32 %v3225, 1.442695
          %v3235 = vpow.pop %v3234
          %v3236 = vmul.f32 %v3226, 1.442695
          %v3237 = vpow.pop %v3236
          %v3238 = vmul.f32 %v3227, 1.442695
          %v3239 = vpow.pop %v3238
          %v3240 = vmul.f32 %v3228, 1.442695
          %v3241 = vpow.pop %v3240
          %v3242 = vmul.f32 %v3229, 1.442695
          %v3243 = vpow.pop %v3242
          %v3244 = vmul.f32 %v3230, 1.442695
          %v3245 = vpow.pop %v3244
          %v3246 = vmul.f32 %v3231, 1.442695
          %v3247 = vpow.pop %v3246
          %s3248 = smul.u32 %s3220, 64
          %s3249 = scalar_lea.vmem [#allocation5], %s3248
          %3250 = vst.msk [vmem:[%s3249] sm:$0xff] %vm1377, %v3233
          %3251 = vst.msk [vmem:[%s3249 + $0x8] sm:$0xff] %vm1377, %v3235
          %3252 = vst.msk [vmem:[%s3249 + $0x10] sm:$0xff] %vm1377, %v3237
          %3253 = vst.msk [vmem:[%s3249 + $0x18] sm:$0xff] %vm1377, %v3239
          %3254 = vst.msk [vmem:[%s3249 + $0x20] sm:$0xff] %vm1377, %v3241
          %3255 = vst.msk [vmem:[%s3249 + $0x28] sm:$0xff] %vm1377, %v3243
          %3256 = vst.msk [vmem:[%s3249 + $0x30] sm:$0xff] %vm1377, %v3245
          %3257 = vst.msk [vmem:[%s3249 + $0x38] sm:$0xff] %vm1377, %v3247
          %s3258 = sadd.s32 %s3106, 4
          %s3259 = scalar_lea.vmem [#allocation2], %s3258
          %v3260 = vld [vmem:[%s3259] sm:$0x1]
          %v3261 = vperm.slane %v3260, 0
          %v3262 = vmul.f32 %v3092, %v3261
          %v3263 = vmul.f32 %v3093, %v3261
          %v3264 = vmul.f32 %v3094, %v3261
          %v3265 = vmul.f32 %v3095, %v3261
          %v3266 = vmul.f32 %v3096, %v3261
          %v3267 = vmul.f32 %v3097, %v3261
          %v3268 = vmul.f32 %v3098, %v3261
          %v3269 = vmul.f32 %v3099, %v3261
          %v3270 = vmul.f32 %v3262, 1.442695
          %v3271 = vpow.pop %v3270
          %v3272 = vmul.f32 %v3263, 1.442695
          %v3273 = vpow.pop %v3272
          %v3274 = vmul.f32 %v3264, 1.442695
          %v3275 = vpow.pop %v3274
          %v3276 = vmul.f32 %v3265, 1.442695
          %v3277 = vpow.pop %v3276
          %v3278 = vmul.f32 %v3266, 1.442695
          %v3279 = vpow.pop %v3278
          %v3280 = vmul.f32 %v3267, 1.442695
          %v3281 = vpow.pop %v3280
          %v3282 = vmul.f32 %v3268, 1.442695
          %v3283 = vpow.pop %v3282
          %v3284 = vmul.f32 %v3269, 1.442695
          %v3285 = vpow.pop %v3284
          %s3286 = smul.u32 %s3258, 64
          %s3287 = scalar_lea.vmem [#allocation5], %s3286
          %3288 = vst.msk [vmem:[%s3287] sm:$0xff] %vm1377, %v3271
          %3289 = vst.msk [vmem:[%s3287 + $0x8] sm:$0xff] %vm1377, %v3273
          %3290 = vst.msk [vmem:[%s3287 + $0x10] sm:$0xff] %vm1377, %v3275
          %3291 = vst.msk [vmem:[%s3287 + $0x18] sm:$0xff] %vm1377, %v3277
          %3292 = vst.msk [vmem:[%s3287 + $0x20] sm:$0xff] %vm1377, %v3279
          %3293 = vst.msk [vmem:[%s3287 + $0x28] sm:$0xff] %vm1377, %v3281
          %3294 = vst.msk [vmem:[%s3287 + $0x30] sm:$0xff] %vm1377, %v3283
          %3295 = vst.msk [vmem:[%s3287 + $0x38] sm:$0xff] %vm1377, %v3285
          %s3296 = sadd.s32 %s3106, 5
          %s3297 = scalar_lea.vmem [#allocation2], %s3296
          %v3298 = vld [vmem:[%s3297] sm:$0x1]
          %v3299 = vperm.slane %v3298, 0
          %v3300 = vmul.f32 %v3092, %v3299
          %v3301 = vmul.f32 %v3093, %v3299
          %v3302 = vmul.f32 %v3094, %v3299
          %v3303 = vmul.f32 %v3095, %v3299
          %v3304 = vmul.f32 %v3096, %v3299
          %v3305 = vmul.f32 %v3097, %v3299
          %v3306 = vmul.f32 %v3098, %v3299
          %v3307 = vmul.f32 %v3099, %v3299
          %v3308 = vmul.f32 %v3300, 1.442695
          %v3309 = vpow.pop %v3308
          %v3310 = vmul.f32 %v3301, 1.442695
          %v3311 = vpow.pop %v3310
          %v3312 = vmul.f32 %v3302, 1.442695
          %v3313 = vpow.pop %v3312
          %v3314 = vmul.f32 %v3303, 1.442695
          %v3315 = vpow.pop %v3314
          %v3316 = vmul.f32 %v3304, 1.442695
          %v3317 = vpow.pop %v3316
          %v3318 = vmul.f32 %v3305, 1.442695
          %v3319 = vpow.pop %v3318
          %v3320 = vmul.f32 %v3306, 1.442695
          %v3321 = vpow.pop %v3320
          %v3322 = vmul.f32 %v3307, 1.442695
          %v3323 = vpow.pop %v3322
          %s3324 = smul.u32 %s3296, 64
          %s3325 = scalar_lea.vmem [#allocation5], %s3324
          %3326 = vst.msk [vmem:[%s3325] sm:$0xff] %vm1377, %v3309
          %3327 = vst.msk [vmem:[%s3325 + $0x8] sm:$0xff] %vm1377, %v3311
          %3328 = vst.msk [vmem:[%s3325 + $0x10] sm:$0xff] %vm1377, %v3313
          %3329 = vst.msk [vmem:[%s3325 + $0x18] sm:$0xff] %vm1377, %v3315
          %3330 = vst.msk [vmem:[%s3325 + $0x20] sm:$0xff] %vm1377, %v3317
          %3331 = vst.msk [vmem:[%s3325 + $0x28] sm:$0xff] %vm1377, %v3319
          %3332 = vst.msk [vmem:[%s3325 + $0x30] sm:$0xff] %vm1377, %v3321
          %3333 = vst.msk [vmem:[%s3325 + $0x38] sm:$0xff] %vm1377, %v3323
          %s3334 = sadd.s32 %s3106, 6
          %s3335 = scalar_lea.vmem [#allocation2], %s3334
          %v3336 = vld [vmem:[%s3335] sm:$0x1]
          %v3337 = vperm.slane %v3336, 0
          %v3338 = vmul.f32 %v3092, %v3337
          %v3339 = vmul.f32 %v3093, %v3337
          %v3340 = vmul.f32 %v3094, %v3337
          %v3341 = vmul.f32 %v3095, %v3337
          %v3342 = vmul.f32 %v3096, %v3337
          %v3343 = vmul.f32 %v3097, %v3337
          %v3344 = vmul.f32 %v3098, %v3337
          %v3345 = vmul.f32 %v3099, %v3337
          %v3346 = vmul.f32 %v3338, 1.442695
          %v3347 = vpow.pop %v3346
          %v3348 = vmul.f32 %v3339, 1.442695
          %v3349 = vpow.pop %v3348
          %v3350 = vmul.f32 %v3340, 1.442695
          %v3351 = vpow.pop %v3350
          %v3352 = vmul.f32 %v3341, 1.442695
          %v3353 = vpow.pop %v3352
          %v3354 = vmul.f32 %v3342, 1.442695
          %v3355 = vpow.pop %v3354
          %v3356 = vmul.f32 %v3343, 1.442695
          %v3357 = vpow.pop %v3356
          %v3358 = vmul.f32 %v3344, 1.442695
          %v3359 = vpow.pop %v3358
          %v3360 = vmul.f32 %v3345, 1.442695
          %v3361 = vpow.pop %v3360
          %s3362 = smul.u32 %s3334, 64
          %s3363 = scalar_lea.vmem [#allocation5], %s3362
          %3364 = vst.msk [vmem:[%s3363] sm:$0xff] %vm1377, %v3347
          %3365 = vst.msk [vmem:[%s3363 + $0x8] sm:$0xff] %vm1377, %v3349
          %3366 = vst.msk [vmem:[%s3363 + $0x10] sm:$0xff] %vm1377, %v3351
          %3367 = vst.msk [vmem:[%s3363 + $0x18] sm:$0xff] %vm1377, %v3353
          %3368 = vst.msk [vmem:[%s3363 + $0x20] sm:$0xff] %vm1377, %v3355
          %3369 = vst.msk [vmem:[%s3363 + $0x28] sm:$0xff] %vm1377, %v3357
          %3370 = vst.msk [vmem:[%s3363 + $0x30] sm:$0xff] %vm1377, %v3359
          %3371 = vst.msk [vmem:[%s3363 + $0x38] sm:$0xff] %vm1377, %v3361
          %s3372 = sadd.s32 %s3106, 7
          %s3373 = scalar_lea.vmem [#allocation2], %s3372
          %v3374 = vld [vmem:[%s3373] sm:$0x1]
          %v3375 = vperm.slane %v3374, 0
          %v3376 = vmul.f32 %v3092, %v3375
          %v3377 = vmul.f32 %v3093, %v3375
          %v3378 = vmul.f32 %v3094, %v3375
          %v3379 = vmul.f32 %v3095, %v3375
          %v3380 = vmul.f32 %v3096, %v3375
          %v3381 = vmul.f32 %v3097, %v3375
          %v3382 = vmul.f32 %v3098, %v3375
          %v3383 = vmul.f32 %v3099, %v3375
          %v3384 = vmul.f32 %v3376, 1.442695
          %v3385 = vpow.pop %v3384
          %v3386 = vmul.f32 %v3377, 1.442695
          %v3387 = vpow.pop %v3386
          %v3388 = vmul.f32 %v3378, 1.442695
          %v3389 = vpow.pop %v3388
          %v3390 = vmul.f32 %v3379, 1.442695
          %v3391 = vpow.pop %v3390
          %v3392 = vmul.f32 %v3380, 1.442695
          %v3393 = vpow.pop %v3392
          %v3394 = vmul.f32 %v3381, 1.442695
          %v3395 = vpow.pop %v3394
          %v3396 = vmul.f32 %v3382, 1.442695
          %v3397 = vpow.pop %v3396
          %v3398 = vmul.f32 %v3383, 1.442695
          %v3399 = vpow.pop %v3398
          %s3400 = smul.u32 %s3372, 64
          %s3401 = scalar_lea.vmem [#allocation5], %s3400
          %3402 = vst.msk [vmem:[%s3401] sm:$0xff] %vm1377, %v3385
          %3403 = vst.msk [vmem:[%s3401 + $0x8] sm:$0xff] %vm1377, %v3387
          %3404 = vst.msk [vmem:[%s3401 + $0x10] sm:$0xff] %vm1377, %v3389
          %3405 = vst.msk [vmem:[%s3401 + $0x18] sm:$0xff] %vm1377, %v3391
          %3406 = vst.msk [vmem:[%s3401 + $0x20] sm:$0xff] %vm1377, %v3393
          %3407 = vst.msk [vmem:[%s3401 + $0x28] sm:$0xff] %vm1377, %v3395
          %3408 = vst.msk [vmem:[%s3401 + $0x30] sm:$0xff] %vm1377, %v3397
          %3409 = vst.msk [vmem:[%s3401 + $0x38] sm:$0xff] %vm1377, %v3399
        $region69: #{tpu_custom_call.1} parent=59 // loop_footer
          %s3105 = sadd.s32 1, %s3101
        $region70: #{tpu_custom_call.1} parent=59 // loop_footer_branch
          %3100 = sbr.rel target = $region66
        $region71: #{tpu_custom_call.1} parent=59 // loop_exit
          _
        %3410 = vst.msk [vmem:[#allocation6] sm:$0xff] %vm1377, 0.0
        %3411 = vst.msk [vmem:[#allocation6 + $0x8] sm:$0xff] %vm1377, 0.0
        %3412 = vst.msk [vmem:[#allocation6 + $0x10] sm:$0xff] %vm1377, 0.0
        %3413 = vst.msk [vmem:[#allocation6 + $0x18] sm:$0xff] %vm1377, 0.0
        %3414 = vst.msk [vmem:[#allocation6 + $0x20] sm:$0xff] %vm1377, 0.0
        %3415 = vst.msk [vmem:[#allocation6 + $0x28] sm:$0xff] %vm1377, 0.0
        %3416 = vst.msk [vmem:[#allocation6 + $0x30] sm:$0xff] %vm1377, 0.0
        %3417 = vst.msk [vmem:[#allocation6 + $0x38] sm:$0xff] %vm1377, 0.0
        %3418 = vst.msk [vmem:[#allocation6 + $0x40] sm:$0xff] %vm1377, 0.0
        %3419 = vst.msk [vmem:[#allocation6 + $0x48] sm:$0xff] %vm1377, 0.0
        %3420 = vst.msk [vmem:[#allocation6 + $0x50] sm:$0xff] %vm1377, 0.0
        %3421 = vst.msk [vmem:[#allocation6 + $0x58] sm:$0xff] %vm1377, 0.0
        %3422 = vst.msk [vmem:[#allocation6 + $0x60] sm:$0xff] %vm1377, 0.0
        %3423 = vst.msk [vmem:[#allocation6 + $0x68] sm:$0xff] %vm1377, 0.0
        %3424 = vst.msk [vmem:[#allocation6 + $0x70] sm:$0xff] %vm1377, 0.0
        %3425 = vst.msk [vmem:[#allocation6 + $0x78] sm:$0xff] %vm1377, 0.0
        %3426 = vst.msk [vmem:[#allocation6 + $0x80] sm:$0xff] %vm1377, 0.0
        %3427 = vst.msk [vmem:[#allocation6 + $0x88] sm:$0xff] %vm1377, 0.0
        %3428 = vst.msk [vmem:[#allocation6 + $0x90] sm:$0xff] %vm1377, 0.0
        %3429 = vst.msk [vmem:[#allocation6 + $0x98] sm:$0xff] %vm1377, 0.0
        %3430 = vst.msk [vmem:[#allocation6 + $0xa0] sm:$0xff] %vm1377, 0.0
        %3431 = vst.msk [vmem:[#allocation6 + $0xa8] sm:$0xff] %vm1377, 0.0
        %3432 = vst.msk [vmem:[#allocation6 + $0xb0] sm:$0xff] %vm1377, 0.0
        %3433 = vst.msk [vmem:[#allocation6 + $0xb8] sm:$0xff] %vm1377, 0.0
        %3434 = vst.msk [vmem:[#allocation6 + $0xc0] sm:$0xff] %vm1377, 0.0
        %3435 = vst.msk [vmem:[#allocation6 + $0xc8] sm:$0xff] %vm1377, 0.0
        %3436 = vst.msk [vmem:[#allocation6 + $0xd0] sm:$0xff] %vm1377, 0.0
        %3437 = vst.msk [vmem:[#allocation6 + $0xd8] sm:$0xff] %vm1377, 0.0
        %3438 = vst.msk [vmem:[#allocation6 + $0xe0] sm:$0xff] %vm1377, 0.0
        %3439 = vst.msk [vmem:[#allocation6 + $0xe8] sm:$0xff] %vm1377, 0.0
        %3440 = vst.msk [vmem:[#allocation6 + $0xf0] sm:$0xff] %vm1377, 0.0
        %3441 = vst.msk [vmem:[#allocation6 + $0xf8] sm:$0xff] %vm1377, 0.0
        %3442 = vst.msk [vmem:[#allocation6 + $0x100] sm:$0xff] %vm1377, 0.0
        %3443 = vst.msk [vmem:[#allocation6 + $0x108] sm:$0xff] %vm1377, 0.0
        %3444 = vst.msk [vmem:[#allocation6 + $0x110] sm:$0xff] %vm1377, 0.0
        %3445 = vst.msk [vmem:[#allocation6 + $0x118] sm:$0xff] %vm1377, 0.0
        %3446 = vst.msk [vmem:[#allocation6 + $0x120] sm:$0xff] %vm1377, 0.0
        %3447 = vst.msk [vmem:[#allocation6 + $0x128] sm:$0xff] %vm1377, 0.0
        %3448 = vst.msk [vmem:[#allocation6 + $0x130] sm:$0xff] %vm1377, 0.0
        %3449 = vst.msk [vmem:[#allocation6 + $0x138] sm:$0xff] %vm1377, 0.0
        %3450 = vst.msk [vmem:[#allocation6 + $0x140] sm:$0xff] %vm1377, 0.0
        %3451 = vst.msk [vmem:[#allocation6 + $0x148] sm:$0xff] %vm1377, 0.0
        %3452 = vst.msk [vmem:[#allocation6 + $0x150] sm:$0xff] %vm1377, 0.0
        %3453 = vst.msk [vmem:[#allocation6 + $0x158] sm:$0xff] %vm1377, 0.0
        %3454 = vst.msk [vmem:[#allocation6 + $0x160] sm:$0xff] %vm1377, 0.0
        %3455 = vst.msk [vmem:[#allocation6 + $0x168] sm:$0xff] %vm1377, 0.0
        %3456 = vst.msk [vmem:[#allocation6 + $0x170] sm:$0xff] %vm1377, 0.0
        %3457 = vst.msk [vmem:[#allocation6 + $0x178] sm:$0xff] %vm1377, 0.0
        %3458 = vst.msk [vmem:[#allocation6 + $0x180] sm:$0xff] %vm1377, 0.0
        %3459 = vst.msk [vmem:[#allocation6 + $0x188] sm:$0xff] %vm1377, 0.0
        %3460 = vst.msk [vmem:[#allocation6 + $0x190] sm:$0xff] %vm1377, 0.0
        %3461 = vst.msk [vmem:[#allocation6 + $0x198] sm:$0xff] %vm1377, 0.0
        %3462 = vst.msk [vmem:[#allocation6 + $0x1a0] sm:$0xff] %vm1377, 0.0
        %3463 = vst.msk [vmem:[#allocation6 + $0x1a8] sm:$0xff] %vm1377, 0.0
        %3464 = vst.msk [vmem:[#allocation6 + $0x1b0] sm:$0xff] %vm1377, 0.0
        %3465 = vst.msk [vmem:[#allocation6 + $0x1b8] sm:$0xff] %vm1377, 0.0
        %3466 = vst.msk [vmem:[#allocation6 + $0x1c0] sm:$0xff] %vm1377, 0.0
        %3467 = vst.msk [vmem:[#allocation6 + $0x1c8] sm:$0xff] %vm1377, 0.0
        %3468 = vst.msk [vmem:[#allocation6 + $0x1d0] sm:$0xff] %vm1377, 0.0
        %3469 = vst.msk [vmem:[#allocation6 + $0x1d8] sm:$0xff] %vm1377, 0.0
        %3470 = vst.msk [vmem:[#allocation6 + $0x1e0] sm:$0xff] %vm1377, 0.0
        %3471 = vst.msk [vmem:[#allocation6 + $0x1e8] sm:$0xff] %vm1377, 0.0
        %3472 = vst.msk [vmem:[#allocation6 + $0x1f0] sm:$0xff] %vm1377, 0.0
        %3473 = vst.msk [vmem:[#allocation6 + $0x1f8] sm:$0xff] %vm1377, 0.0
        loop: start=0, step=1, limit=16
        $region72: #{tpu_custom_call.1} parent=59 // loop_pre_header
          _
        $region73: #{tpu_custom_call.1} parent=59 // loop_header
          %s3475 = sphi 0, %s3479
          %p3476 = scmp.ge.s32.totalorder %s3475, 16
        $region74: #{tpu_custom_call.1} parent=59 // loop_header_branch
          %3478 = sbr.rel (%p3476) target = $region78
        $region75: #{tpu_custom_call.1} parent=59 // loop_body
          %s3480 = smul.u32 %s3475, 128
          %s3481 = scalar_lea.vmem [#allocation4], %s3480
          %v3482 = vld [vmem:[%s3481] sm:$0xff]
          %v3483 = vld [vmem:[%s3481 + $0x8] sm:$0xff]
          %v3484 = vld [vmem:[%s3481 + $0x10] sm:$0xff]
          %v3485 = vld [vmem:[%s3481 + $0x18] sm:$0xff]
          %v3486 = vld [vmem:[%s3481 + $0x20] sm:$0xff]
          %v3487 = vld [vmem:[%s3481 + $0x28] sm:$0xff]
          %v3488 = vld [vmem:[%s3481 + $0x30] sm:$0xff]
          %v3489 = vld [vmem:[%s3481 + $0x38] sm:$0xff]
          %v3490 = vld [vmem:[%s3481 + $0x40] sm:$0xff]
          %v3491 = vld [vmem:[%s3481 + $0x48] sm:$0xff]
          %v3492 = vld [vmem:[%s3481 + $0x50] sm:$0xff]
          %v3493 = vld [vmem:[%s3481 + $0x58] sm:$0xff]
          %v3494 = vld [vmem:[%s3481 + $0x60] sm:$0xff]
          %v3495 = vld [vmem:[%s3481 + $0x68] sm:$0xff]
          %v3496 = vld [vmem:[%s3481 + $0x70] sm:$0xff]
          %v3497 = vld [vmem:[%s3481 + $0x78] sm:$0xff]
          %s3498 = smul.u32 %s3475, 8
          %s3499 = scalar_lea.vmem [#allocation3], %s3498
          %v3500 = vld [vmem:[%s3499] sm:$0x1]
          %s3501 = smul.u32 %s3498, 64
          %s3502 = scalar_lea.vmem [#allocation5], %s3501
          %v3503 = vld [vmem:[%s3502] sm:$0xff]
          %v3504 = vld [vmem:[%s3502 + $0x8] sm:$0xff]
          %v3505 = vld [vmem:[%s3502 + $0x10] sm:$0xff]
          %v3506 = vld [vmem:[%s3502 + $0x18] sm:$0xff]
          %v3507 = vld [vmem:[%s3502 + $0x20] sm:$0xff]
          %v3508 = vld [vmem:[%s3502 + $0x28] sm:$0xff]
          %v3509 = vld [vmem:[%s3502 + $0x30] sm:$0xff]
          %v3510 = vld [vmem:[%s3502 + $0x38] sm:$0xff]
          %v3511 = vld [vmem:[#allocation6] sm:$0xff]
          %v3512 = vld [vmem:[#allocation6 + $0x8] sm:$0xff]
          %v3513 = vld [vmem:[#allocation6 + $0x10] sm:$0xff]
          %v3514 = vld [vmem:[#allocation6 + $0x18] sm:$0xff]
          %v3515 = vld [vmem:[#allocation6 + $0x20] sm:$0xff]
          %v3516 = vld [vmem:[#allocation6 + $0x28] sm:$0xff]
          %v3517 = vld [vmem:[#allocation6 + $0x30] sm:$0xff]
          %v3518 = vld [vmem:[#allocation6 + $0x38] sm:$0xff]
          %v3519 = vmul.f32 %v3503, %v3511
          %v3520 = vmul.f32 %v3504, %v3512
          %v3521 = vmul.f32 %v3505, %v3513
          %v3522 = vmul.f32 %v3506, %v3514
          %v3523 = vmul.f32 %v3507, %v3515
          %v3524 = vmul.f32 %v3508, %v3516
          %v3525 = vmul.f32 %v3509, %v3517
          %v3526 = vmul.f32 %v3510, %v3518
          %3528 = vset.pattern.permute.xlu0 0
          %3529 = vperm.xlu0 %3528, %v3482
          %v3530 = vpop.permute.xlu0 %3529
          %3533 = vset.pattern.permute.xlu0 0
          %3534 = vperm.xlu0 %3533, %v3483
          %v3535 = vpop.permute.xlu0 %3534
          %3538 = vset.pattern.permute.xlu0 0
          %3539 = vperm.xlu0 %3538, %v3484
          %v3540 = vpop.permute.xlu0 %3539
          %3543 = vset.pattern.permute.xlu0 0
          %3544 = vperm.xlu0 %3543, %v3485
          %v3545 = vpop.permute.xlu0 %3544
          %3548 = vset.pattern.permute.xlu0 0
          %3549 = vperm.xlu0 %3548, %v3486
          %v3550 = vpop.permute.xlu0 %3549
          %3553 = vset.pattern.permute.xlu0 0
          %3554 = vperm.xlu0 %3553, %v3487
          %v3555 = vpop.permute.xlu0 %3554
          %3558 = vset.pattern.permute.xlu0 0
          %3559 = vperm.xlu0 %3558, %v3488
          %v3560 = vpop.permute.xlu0 %3559
          %3563 = vset.pattern.permute.xlu0 0
          %3564 = vperm.xlu0 %3563, %v3489
          %v3565 = vpop.permute.xlu0 %3564
          %v3567 = vperm.slane %v3500, 0
          %v3568 = vmul.f32 %v3530, %v3567
          %v3569 = vmul.f32 %v3535, %v3567
          %v3570 = vmul.f32 %v3540, %v3567
          %v3571 = vmul.f32 %v3545, %v3567
          %v3572 = vmul.f32 %v3550, %v3567
          %v3573 = vmul.f32 %v3555, %v3567
          %v3574 = vmul.f32 %v3560, %v3567
          %v3575 = vmul.f32 %v3565, %v3567
          %v3576 = vadd.f32 %v3519, %v3568
          %v3577 = vadd.f32 %v3520, %v3569
          %v3578 = vadd.f32 %v3521, %v3570
          %v3579 = vadd.f32 %v3522, %v3571
          %v3580 = vadd.f32 %v3523, %v3572
          %v3581 = vadd.f32 %v3524, %v3573
          %v3582 = vadd.f32 %v3525, %v3574
          %v3583 = vadd.f32 %v3526, %v3575
          %3584 = vst.msk [vmem:[#allocation6] sm:$0xff] %vm1377, %v3576
          %3585 = vst.msk [vmem:[#allocation6 + $0x8] sm:$0xff] %vm1377, %v3577
          %3586 = vst.msk [vmem:[#allocation6 + $0x10] sm:$0xff] %vm1377, %v3578
          %3587 = vst.msk [vmem:[#allocation6 + $0x18] sm:$0xff] %vm1377, %v3579
          %3588 = vst.msk [vmem:[#allocation6 + $0x20] sm:$0xff] %vm1377, %v3580
          %3589 = vst.msk [vmem:[#allocation6 + $0x28] sm:$0xff] %vm1377, %v3581
          %3590 = vst.msk [vmem:[#allocation6 + $0x30] sm:$0xff] %vm1377, %v3582
          %3591 = vst.msk [vmem:[#allocation6 + $0x38] sm:$0xff] %vm1377, %v3583
          %3593 = vset.pattern.permute.xlu0 0
          %3594 = vperm.xlu0 %3593, %v3490
          %v3595 = vpop.permute.xlu0 %3594
          %3598 = vset.pattern.permute.xlu0 0
          %3599 = vperm.xlu0 %3598, %v3491
          %v3600 = vpop.permute.xlu0 %3599
          %3603 = vset.pattern.permute.xlu0 0
          %3604 = vperm.xlu0 %3603, %v3492
          %v3605 = vpop.permute.xlu0 %3604
          %3608 = vset.pattern.permute.xlu0 0
          %3609 = vperm.xlu0 %3608, %v3493
          %v3610 = vpop.permute.xlu0 %3609
          %3613 = vset.pattern.permute.xlu0 0
          %3614 = vperm.xlu0 %3613, %v3494
          %v3615 = vpop.permute.xlu0 %3614
          %3618 = vset.pattern.permute.xlu0 0
          %3619 = vperm.xlu0 %3618, %v3495
          %v3620 = vpop.permute.xlu0 %3619
          %3623 = vset.pattern.permute.xlu0 0
          %3624 = vperm.xlu0 %3623, %v3496
          %v3625 = vpop.permute.xlu0 %3624
          %3628 = vset.pattern.permute.xlu0 0
          %3629 = vperm.xlu0 %3628, %v3497
          %v3630 = vpop.permute.xlu0 %3629
          %v3632 = vmul.f32 %v3576, %v3595
          %v3633 = vmul.f32 %v3577, %v3600
          %v3634 = vmul.f32 %v3578, %v3605
          %v3635 = vmul.f32 %v3579, %v3610
          %v3636 = vmul.f32 %v3580, %v3615
          %v3637 = vmul.f32 %v3581, %v3620
          %v3638 = vmul.f32 %v3582, %v3625
          %v3639 = vmul.f32 %v3583, %v3630
          %v3640 = vsel %vm1377, %v3632, 0.0
          %v3641 = vsel %vm1377, %v3633, 0.0
          %v3642 = vadd.f32 %v3640, %v3641
          %v3643 = vsel %vm1377, %v3634, 0.0
          %v3644 = vadd.f32 %v3642, %v3643
          %v3645 = vsel %vm1377, %v3635, 0.0
          %v3646 = vadd.f32 %v3644, %v3645
          %v3647 = vsel %vm1377, %v3636, 0.0
          %v3648 = vadd.f32 %v3646, %v3647
          %v3649 = vsel %vm1377, %v3637, 0.0
          %v3650 = vadd.f32 %v3648, %v3649
          %v3651 = vsel %vm1377, %v3638, 0.0
          %v3652 = vadd.f32 %v3650, %v3651
          %v3653 = vsel %vm1377, %v3639, 0.0
          %v3654 = vadd.f32 %v3652, %v3653
          %v3655 = vrot.slane %v3654, 4
          %v3656 = vadd.f32 %v3654, %v3655
          %v3657 = vrot.slane %v3656, 2
          %v3658 = vadd.f32 %v3656, %v3657
          %v3659 = vrot.slane %v3658, 1
          %v3660 = vadd.f32 %v3658, %v3659
          %s3661 = sadd.s32 %s3498, 1
          %s3662 = scalar_lea.vmem [#allocation3], %s3661
          %v3663 = vld [vmem:[%s3662] sm:$0x1]
          %s3664 = smul.u32 %s3661, 64
          %s3665 = scalar_lea.vmem [#allocation5], %s3664
          %v3666 = vld [vmem:[%s3665] sm:$0xff]
          %v3667 = vld [vmem:[%s3665 + $0x8] sm:$0xff]
          %v3668 = vld [vmem:[%s3665 + $0x10] sm:$0xff]
          %v3669 = vld [vmem:[%s3665 + $0x18] sm:$0xff]
          %v3670 = vld [vmem:[%s3665 + $0x20] sm:$0xff]
          %v3671 = vld [vmem:[%s3665 + $0x28] sm:$0xff]
          %v3672 = vld [vmem:[%s3665 + $0x30] sm:$0xff]
          %v3673 = vld [vmem:[%s3665 + $0x38] sm:$0xff]
          %s3674 = scalar_lea.vmem [#allocation6], 64
          %v3675 = vld [vmem:[%s3674] sm:$0xff]
          %v3676 = vld [vmem:[%s3674 + $0x8] sm:$0xff]
          %v3677 = vld [vmem:[%s3674 + $0x10] sm:$0xff]
          %v3678 = vld [vmem:[%s3674 + $0x18] sm:$0xff]
          %v3679 = vld [vmem:[%s3674 + $0x20] sm:$0xff]
          %v3680 = vld [vmem:[%s3674 + $0x28] sm:$0xff]
          %v3681 = vld [vmem:[%s3674 + $0x30] sm:$0xff]
          %v3682 = vld [vmem:[%s3674 + $0x38] sm:$0xff]
          %v3683 = vmul.f32 %v3666, %v3675
          %v3684 = vmul.f32 %v3667, %v3676
          %v3685 = vmul.f32 %v3668, %v3677
          %v3686 = vmul.f32 %v3669, %v3678
          %v3687 = vmul.f32 %v3670, %v3679
          %v3688 = vmul.f32 %v3671, %v3680
          %v3689 = vmul.f32 %v3672, %v3681
          %v3690 = vmul.f32 %v3673, %v3682
          %3691 = vset.pattern.permute.xlu0 1
          %3692 = vperm.xlu0 %3691, %v3482
          %v3693 = vpop.permute.xlu0 %3692
          %3695 = vset.pattern.permute.xlu0 1
          %3696 = vperm.xlu0 %3695, %v3483
          %v3697 = vpop.permute.xlu0 %3696
          %3699 = vset.pattern.permute.xlu0 1
          %3700 = vperm.xlu0 %3699, %v3484
          %v3701 = vpop.permute.xlu0 %3700
          %3703 = vset.pattern.permute.xlu0 1
          %3704 = vperm.xlu0 %3703, %v3485
          %v3705 = vpop.permute.xlu0 %3704
          %3707 = vset.pattern.permute.xlu0 1
          %3708 = vperm.xlu0 %3707, %v3486
          %v3709 = vpop.permute.xlu0 %3708
          %3711 = vset.pattern.permute.xlu0 1
          %3712 = vperm.xlu0 %3711, %v3487
          %v3713 = vpop.permute.xlu0 %3712
          %3715 = vset.pattern.permute.xlu0 1
          %3716 = vperm.xlu0 %3715, %v3488
          %v3717 = vpop.permute.xlu0 %3716
          %3719 = vset.pattern.permute.xlu0 1
          %3720 = vperm.xlu0 %3719, %v3489
          %v3721 = vpop.permute.xlu0 %3720
          %v3723 = vperm.slane %v3663, 0
          %v3724 = vmul.f32 %v3693, %v3723
          %v3725 = vmul.f32 %v3697, %v3723
          %v3726 = vmul.f32 %v3701, %v3723
          %v3727 = vmul.f32 %v3705, %v3723
          %v3728 = vmul.f32 %v3709, %v3723
          %v3729 = vmul.f32 %v3713, %v3723
          %v3730 = vmul.f32 %v3717, %v3723
          %v3731 = vmul.f32 %v3721, %v3723
          %v3732 = vadd.f32 %v3683, %v3724
          %v3733 = vadd.f32 %v3684, %v3725
          %v3734 = vadd.f32 %v3685, %v3726
          %v3735 = vadd.f32 %v3686, %v3727
          %v3736 = vadd.f32 %v3687, %v3728
          %v3737 = vadd.f32 %v3688, %v3729
          %v3738 = vadd.f32 %v3689, %v3730
          %v3739 = vadd.f32 %v3690, %v3731
          %3740 = vst.msk [vmem:[%s3674] sm:$0xff] %vm1377, %v3732
          %3741 = vst.msk [vmem:[%s3674 + $0x8] sm:$0xff] %vm1377, %v3733
          %3742 = vst.msk [vmem:[%s3674 + $0x10] sm:$0xff] %vm1377, %v3734
          %3743 = vst.msk [vmem:[%s3674 + $0x18] sm:$0xff] %vm1377, %v3735
          %3744 = vst.msk [vmem:[%s3674 + $0x20] sm:$0xff] %vm1377, %v3736
          %3745 = vst.msk [vmem:[%s3674 + $0x28] sm:$0xff] %vm1377, %v3737
          %3746 = vst.msk [vmem:[%s3674 + $0x30] sm:$0xff] %vm1377, %v3738
          %3747 = vst.msk [vmem:[%s3674 + $0x38] sm:$0xff] %vm1377, %v3739
          %3748 = vset.pattern.permute.xlu0 1
          %3749 = vperm.xlu0 %3748, %v3490
          %v3750 = vpop.permute.xlu0 %3749
          %3752 = vset.pattern.permute.xlu0 1
          %3753 = vperm.xlu0 %3752, %v3491
          %v3754 = vpop.permute.xlu0 %3753
          %3756 = vset.pattern.permute.xlu0 1
          %3757 = vperm.xlu0 %3756, %v3492
          %v3758 = vpop.permute.xlu0 %3757
          %3760 = vset.pattern.permute.xlu0 1
          %3761 = vperm.xlu0 %3760, %v3493
          %v3762 = vpop.permute.xlu0 %3761
          %3764 = vset.pattern.permute.xlu0 1
          %3765 = vperm.xlu0 %3764, %v3494
          %v3766 = vpop.permute.xlu0 %3765
          %3768 = vset.pattern.permute.xlu0 1
          %3769 = vperm.xlu0 %3768, %v3495
          %v3770 = vpop.permute.xlu0 %3769
          %3772 = vset.pattern.permute.xlu0 1
          %3773 = vperm.xlu0 %3772, %v3496
          %v3774 = vpop.permute.xlu0 %3773
          %3776 = vset.pattern.permute.xlu0 1
          %3777 = vperm.xlu0 %3776, %v3497
          %v3778 = vpop.permute.xlu0 %3777
          %v3780 = vmul.f32 %v3732, %v3750
          %v3781 = vmul.f32 %v3733, %v3754
          %v3782 = vmul.f32 %v3734, %v3758
          %v3783 = vmul.f32 %v3735, %v3762
          %v3784 = vmul.f32 %v3736, %v3766
          %v3785 = vmul.f32 %v3737, %v3770
          %v3786 = vmul.f32 %v3738, %v3774
          %v3787 = vmul.f32 %v3739, %v3778
          %v3788 = vsel %vm1377, %v3780, 0.0
          %v3789 = vsel %vm1377, %v3781, 0.0
          %v3790 = vadd.f32 %v3788, %v3789
          %v3791 = vsel %vm1377, %v3782, 0.0
          %v3792 = vadd.f32 %v3790, %v3791
          %v3793 = vsel %vm1377, %v3783, 0.0
          %v3794 = vadd.f32 %v3792, %v3793
          %v3795 = vsel %vm1377, %v3784, 0.0
          %v3796 = vadd.f32 %v3794, %v3795
          %v3797 = vsel %vm1377, %v3785, 0.0
          %v3798 = vadd.f32 %v3796, %v3797
          %v3799 = vsel %vm1377, %v3786, 0.0
          %v3800 = vadd.f32 %v3798, %v3799
          %v3801 = vsel %vm1377, %v3787, 0.0
          %v3802 = vadd.f32 %v3800, %v3801
          %v3803 = vrot.slane %v3802, 4
          %v3804 = vadd.f32 %v3802, %v3803
          %v3805 = vrot.slane %v3804, 2
          %v3806 = vadd.f32 %v3804, %v3805
          %v3807 = vrot.slane %v3806, 1
          %v3808 = vadd.f32 %v3806, %v3807
          %s3809 = sadd.s32 %s3498, 2
          %s3810 = scalar_lea.vmem [#allocation3], %s3809
          %v3811 = vld [vmem:[%s3810] sm:$0x1]
          %s3812 = smul.u32 %s3809, 64
          %s3813 = scalar_lea.vmem [#allocation5], %s3812
          %v3814 = vld [vmem:[%s3813] sm:$0xff]
          %v3815 = vld [vmem:[%s3813 + $0x8] sm:$0xff]
          %v3816 = vld [vmem:[%s3813 + $0x10] sm:$0xff]
          %v3817 = vld [vmem:[%s3813 + $0x18] sm:$0xff]
          %v3818 = vld [vmem:[%s3813 + $0x20] sm:$0xff]
          %v3819 = vld [vmem:[%s3813 + $0x28] sm:$0xff]
          %v3820 = vld [vmem:[%s3813 + $0x30] sm:$0xff]
          %v3821 = vld [vmem:[%s3813 + $0x38] sm:$0xff]
          %s3822 = scalar_lea.vmem [#allocation6], 128
          %v3823 = vld [vmem:[%s3822] sm:$0xff]
          %v3824 = vld [vmem:[%s3822 + $0x8] sm:$0xff]
          %v3825 = vld [vmem:[%s3822 + $0x10] sm:$0xff]
          %v3826 = vld [vmem:[%s3822 + $0x18] sm:$0xff]
          %v3827 = vld [vmem:[%s3822 + $0x20] sm:$0xff]
          %v3828 = vld [vmem:[%s3822 + $0x28] sm:$0xff]
          %v3829 = vld [vmem:[%s3822 + $0x30] sm:$0xff]
          %v3830 = vld [vmem:[%s3822 + $0x38] sm:$0xff]
          %v3831 = vmul.f32 %v3814, %v3823
          %v3832 = vmul.f32 %v3815, %v3824
          %v3833 = vmul.f32 %v3816, %v3825
          %v3834 = vmul.f32 %v3817, %v3826
          %v3835 = vmul.f32 %v3818, %v3827
          %v3836 = vmul.f32 %v3819, %v3828
          %v3837 = vmul.f32 %v3820, %v3829
          %v3838 = vmul.f32 %v3821, %v3830
          %3839 = vset.pattern.permute.xlu0 2
          %3840 = vperm.xlu0 %3839, %v3482
          %v3841 = vpop.permute.xlu0 %3840
          %3843 = vset.pattern.permute.xlu0 2
          %3844 = vperm.xlu0 %3843, %v3483
          %v3845 = vpop.permute.xlu0 %3844
          %3847 = vset.pattern.permute.xlu0 2
          %3848 = vperm.xlu0 %3847, %v3484
          %v3849 = vpop.permute.xlu0 %3848
          %3851 = vset.pattern.permute.xlu0 2
          %3852 = vperm.xlu0 %3851, %v3485
          %v3853 = vpop.permute.xlu0 %3852
          %3855 = vset.pattern.permute.xlu0 2
          %3856 = vperm.xlu0 %3855, %v3486
          %v3857 = vpop.permute.xlu0 %3856
          %3859 = vset.pattern.permute.xlu0 2
          %3860 = vperm.xlu0 %3859, %v3487
          %v3861 = vpop.permute.xlu0 %3860
          %3863 = vset.pattern.permute.xlu0 2
          %3864 = vperm.xlu0 %3863, %v3488
          %v3865 = vpop.permute.xlu0 %3864
          %3867 = vset.pattern.permute.xlu0 2
          %3868 = vperm.xlu0 %3867, %v3489
          %v3869 = vpop.permute.xlu0 %3868
          %v3871 = vperm.slane %v3811, 0
          %v3872 = vmul.f32 %v3841, %v3871
          %v3873 = vmul.f32 %v3845, %v3871
          %v3874 = vmul.f32 %v3849, %v3871
          %v3875 = vmul.f32 %v3853, %v3871
          %v3876 = vmul.f32 %v3857, %v3871
          %v3877 = vmul.f32 %v3861, %v3871
          %v3878 = vmul.f32 %v3865, %v3871
          %v3879 = vmul.f32 %v3869, %v3871
          %v3880 = vadd.f32 %v3831, %v3872
          %v3881 = vadd.f32 %v3832, %v3873
          %v3882 = vadd.f32 %v3833, %v3874
          %v3883 = vadd.f32 %v3834, %v3875
          %v3884 = vadd.f32 %v3835, %v3876
          %v3885 = vadd.f32 %v3836, %v3877
          %v3886 = vadd.f32 %v3837, %v3878
          %v3887 = vadd.f32 %v3838, %v3879
          %3888 = vst.msk [vmem:[%s3822] sm:$0xff] %vm1377, %v3880
          %3889 = vst.msk [vmem:[%s3822 + $0x8] sm:$0xff] %vm1377, %v3881
          %3890 = vst.msk [vmem:[%s3822 + $0x10] sm:$0xff] %vm1377, %v3882
          %3891 = vst.msk [vmem:[%s3822 + $0x18] sm:$0xff] %vm1377, %v3883
          %3892 = vst.msk [vmem:[%s3822 + $0x20] sm:$0xff] %vm1377, %v3884
          %3893 = vst.msk [vmem:[%s3822 + $0x28] sm:$0xff] %vm1377, %v3885
          %3894 = vst.msk [vmem:[%s3822 + $0x30] sm:$0xff] %vm1377, %v3886
          %3895 = vst.msk [vmem:[%s3822 + $0x38] sm:$0xff] %vm1377, %v3887
          %3896 = vset.pattern.permute.xlu0 2
          %3897 = vperm.xlu0 %3896, %v3490
          %v3898 = vpop.permute.xlu0 %3897
          %3900 = vset.pattern.permute.xlu0 2
          %3901 = vperm.xlu0 %3900, %v3491
          %v3902 = vpop.permute.xlu0 %3901
          %3904 = vset.pattern.permute.xlu0 2
          %3905 = vperm.xlu0 %3904, %v3492
          %v3906 = vpop.permute.xlu0 %3905
          %3908 = vset.pattern.permute.xlu0 2
          %3909 = vperm.xlu0 %3908, %v3493
          %v3910 = vpop.permute.xlu0 %3909
          %3912 = vset.pattern.permute.xlu0 2
          %3913 = vperm.xlu0 %3912, %v3494
          %v3914 = vpop.permute.xlu0 %3913
          %3916 = vset.pattern.permute.xlu0 2
          %3917 = vperm.xlu0 %3916, %v3495
          %v3918 = vpop.permute.xlu0 %3917
          %3920 = vset.pattern.permute.xlu0 2
          %3921 = vperm.xlu0 %3920, %v3496
          %v3922 = vpop.permute.xlu0 %3921
          %3924 = vset.pattern.permute.xlu0 2
          %3925 = vperm.xlu0 %3924, %v3497
          %v3926 = vpop.permute.xlu0 %3925
          %v3928 = vmul.f32 %v3880, %v3898
          %v3929 = vmul.f32 %v3881, %v3902
          %v3930 = vmul.f32 %v3882, %v3906
          %v3931 = vmul.f32 %v3883, %v3910
          %v3932 = vmul.f32 %v3884, %v3914
          %v3933 = vmul.f32 %v3885, %v3918
          %v3934 = vmul.f32 %v3886, %v3922
          %v3935 = vmul.f32 %v3887, %v3926
          %v3936 = vsel %vm1377, %v3928, 0.0
          %v3937 = vsel %vm1377, %v3929, 0.0
          %v3938 = vadd.f32 %v3936, %v3937
          %v3939 = vsel %vm1377, %v3930, 0.0
          %v3940 = vadd.f32 %v3938, %v3939
          %v3941 = vsel %vm1377, %v3931, 0.0
          %v3942 = vadd.f32 %v3940, %v3941
          %v3943 = vsel %vm1377, %v3932, 0.0
          %v3944 = vadd.f32 %v3942, %v3943
          %v3945 = vsel %vm1377, %v3933, 0.0
          %v3946 = vadd.f32 %v3944, %v3945
          %v3947 = vsel %vm1377, %v3934, 0.0
          %v3948 = vadd.f32 %v3946, %v3947
          %v3949 = vsel %vm1377, %v3935, 0.0
          %v3950 = vadd.f32 %v3948, %v3949
          %v3951 = vrot.slane %v3950, 4
          %v3952 = vadd.f32 %v3950, %v3951
          %v3953 = vrot.slane %v3952, 2
          %v3954 = vadd.f32 %v3952, %v3953
          %v3955 = vrot.slane %v3954, 1
          %v3956 = vadd.f32 %v3954, %v3955
          %s3957 = sadd.s32 %s3498, 3
          %s3958 = scalar_lea.vmem [#allocation3], %s3957
          %v3959 = vld [vmem:[%s3958] sm:$0x1]
          %s3960 = smul.u32 %s3957, 64
          %s3961 = scalar_lea.vmem [#allocation5], %s3960
          %v3962 = vld [vmem:[%s3961] sm:$0xff]
          %v3963 = vld [vmem:[%s3961 + $0x8] sm:$0xff]
          %v3964 = vld [vmem:[%s3961 + $0x10] sm:$0xff]
          %v3965 = vld [vmem:[%s3961 + $0x18] sm:$0xff]
          %v3966 = vld [vmem:[%s3961 + $0x20] sm:$0xff]
          %v3967 = vld [vmem:[%s3961 + $0x28] sm:$0xff]
          %v3968 = vld [vmem:[%s3961 + $0x30] sm:$0xff]
          %v3969 = vld [vmem:[%s3961 + $0x38] sm:$0xff]
          %s3970 = scalar_lea.vmem [#allocation6], 192
          %v3971 = vld [vmem:[%s3970] sm:$0xff]
          %v3972 = vld [vmem:[%s3970 + $0x8] sm:$0xff]
          %v3973 = vld [vmem:[%s3970 + $0x10] sm:$0xff]
          %v3974 = vld [vmem:[%s3970 + $0x18] sm:$0xff]
          %v3975 = vld [vmem:[%s3970 + $0x20] sm:$0xff]
          %v3976 = vld [vmem:[%s3970 + $0x28] sm:$0xff]
          %v3977 = vld [vmem:[%s3970 + $0x30] sm:$0xff]
          %v3978 = vld [vmem:[%s3970 + $0x38] sm:$0xff]
          %v3979 = vmul.f32 %v3962, %v3971
          %v3980 = vmul.f32 %v3963, %v3972
          %v3981 = vmul.f32 %v3964, %v3973
          %v3982 = vmul.f32 %v3965, %v3974
          %v3983 = vmul.f32 %v3966, %v3975
          %v3984 = vmul.f32 %v3967, %v3976
          %v3985 = vmul.f32 %v3968, %v3977
          %v3986 = vmul.f32 %v3969, %v3978
          %3987 = vset.pattern.permute.xlu0 3
          %3988 = vperm.xlu0 %3987, %v3482
          %v3989 = vpop.permute.xlu0 %3988
          %3991 = vset.pattern.permute.xlu0 3
          %3992 = vperm.xlu0 %3991, %v3483
          %v3993 = vpop.permute.xlu0 %3992
          %3995 = vset.pattern.permute.xlu0 3
          %3996 = vperm.xlu0 %3995, %v3484
          %v3997 = vpop.permute.xlu0 %3996
          %3999 = vset.pattern.permute.xlu0 3
          %4000 = vperm.xlu0 %3999, %v3485
          %v4001 = vpop.permute.xlu0 %4000
          %4003 = vset.pattern.permute.xlu0 3
          %4004 = vperm.xlu0 %4003, %v3486
          %v4005 = vpop.permute.xlu0 %4004
          %4007 = vset.pattern.permute.xlu0 3
          %4008 = vperm.xlu0 %4007, %v3487
          %v4009 = vpop.permute.xlu0 %4008
          %4011 = vset.pattern.permute.xlu0 3
          %4012 = vperm.xlu0 %4011, %v3488
          %v4013 = vpop.permute.xlu0 %4012
          %4015 = vset.pattern.permute.xlu0 3
          %4016 = vperm.xlu0 %4015, %v3489
          %v4017 = vpop.permute.xlu0 %4016
          %v4019 = vperm.slane %v3959, 0
          %v4020 = vmul.f32 %v3989, %v4019
          %v4021 = vmul.f32 %v3993, %v4019
          %v4022 = vmul.f32 %v3997, %v4019
          %v4023 = vmul.f32 %v4001, %v4019
          %v4024 = vmul.f32 %v4005, %v4019
          %v4025 = vmul.f32 %v4009, %v4019
          %v4026 = vmul.f32 %v4013, %v4019
          %v4027 = vmul.f32 %v4017, %v4019
          %v4028 = vadd.f32 %v3979, %v4020
          %v4029 = vadd.f32 %v3980, %v4021
          %v4030 = vadd.f32 %v3981, %v4022
          %v4031 = vadd.f32 %v3982, %v4023
          %v4032 = vadd.f32 %v3983, %v4024
          %v4033 = vadd.f32 %v3984, %v4025
          %v4034 = vadd.f32 %v3985, %v4026
          %v4035 = vadd.f32 %v3986, %v4027
          %4036 = vst.msk [vmem:[%s3970] sm:$0xff] %vm1377, %v4028
          %4037 = vst.msk [vmem:[%s3970 + $0x8] sm:$0xff] %vm1377, %v4029
          %4038 = vst.msk [vmem:[%s3970 + $0x10] sm:$0xff] %vm1377, %v4030
          %4039 = vst.msk [vmem:[%s3970 + $0x18] sm:$0xff] %vm1377, %v4031
          %4040 = vst.msk [vmem:[%s3970 + $0x20] sm:$0xff] %vm1377, %v4032
          %4041 = vst.msk [vmem:[%s3970 + $0x28] sm:$0xff] %vm1377, %v4033
          %4042 = vst.msk [vmem:[%s3970 + $0x30] sm:$0xff] %vm1377, %v4034
          %4043 = vst.msk [vmem:[%s3970 + $0x38] sm:$0xff] %vm1377, %v4035
          %4044 = vset.pattern.permute.xlu0 3
          %4045 = vperm.xlu0 %4044, %v3490
          %v4046 = vpop.permute.xlu0 %4045
          %4048 = vset.pattern.permute.xlu0 3
          %4049 = vperm.xlu0 %4048, %v3491
          %v4050 = vpop.permute.xlu0 %4049
          %4052 = vset.pattern.permute.xlu0 3
          %4053 = vperm.xlu0 %4052, %v3492
          %v4054 = vpop.permute.xlu0 %4053
          %4056 = vset.pattern.permute.xlu0 3
          %4057 = vperm.xlu0 %4056, %v3493
          %v4058 = vpop.permute.xlu0 %4057
          %4060 = vset.pattern.permute.xlu0 3
          %4061 = vperm.xlu0 %4060, %v3494
          %v4062 = vpop.permute.xlu0 %4061
          %4064 = vset.pattern.permute.xlu0 3
          %4065 = vperm.xlu0 %4064, %v3495
          %v4066 = vpop.permute.xlu0 %4065
          %4068 = vset.pattern.permute.xlu0 3
          %4069 = vperm.xlu0 %4068, %v3496
          %v4070 = vpop.permute.xlu0 %4069
          %4072 = vset.pattern.permute.xlu0 3
          %4073 = vperm.xlu0 %4072, %v3497
          %v4074 = vpop.permute.xlu0 %4073
          %v4076 = vmul.f32 %v4028, %v4046
          %v4077 = vmul.f32 %v4029, %v4050
          %v4078 = vmul.f32 %v4030, %v4054
          %v4079 = vmul.f32 %v4031, %v4058
          %v4080 = vmul.f32 %v4032, %v4062
          %v4081 = vmul.f32 %v4033, %v4066
          %v4082 = vmul.f32 %v4034, %v4070
          %v4083 = vmul.f32 %v4035, %v4074
          %v4084 = vsel %vm1377, %v4076, 0.0
          %v4085 = vsel %vm1377, %v4077, 0.0
          %v4086 = vadd.f32 %v4084, %v4085
          %v4087 = vsel %vm1377, %v4078, 0.0
          %v4088 = vadd.f32 %v4086, %v4087
          %v4089 = vsel %vm1377, %v4079, 0.0
          %v4090 = vadd.f32 %v4088, %v4089
          %v4091 = vsel %vm1377, %v4080, 0.0
          %v4092 = vadd.f32 %v4090, %v4091
          %v4093 = vsel %vm1377, %v4081, 0.0
          %v4094 = vadd.f32 %v4092, %v4093
          %v4095 = vsel %vm1377, %v4082, 0.0
          %v4096 = vadd.f32 %v4094, %v4095
          %v4097 = vsel %vm1377, %v4083, 0.0
          %v4098 = vadd.f32 %v4096, %v4097
          %v4099 = vrot.slane %v4098, 4
          %v4100 = vadd.f32 %v4098, %v4099
          %v4101 = vrot.slane %v4100, 2
          %v4102 = vadd.f32 %v4100, %v4101
          %v4103 = vrot.slane %v4102, 1
          %v4104 = vadd.f32 %v4102, %v4103
          %s4105 = sadd.s32 %s3498, 4
          %s4106 = scalar_lea.vmem [#allocation3], %s4105
          %v4107 = vld [vmem:[%s4106] sm:$0x1]
          %s4108 = smul.u32 %s4105, 64
          %s4109 = scalar_lea.vmem [#allocation5], %s4108
          %v4110 = vld [vmem:[%s4109] sm:$0xff]
          %v4111 = vld [vmem:[%s4109 + $0x8] sm:$0xff]
          %v4112 = vld [vmem:[%s4109 + $0x10] sm:$0xff]
          %v4113 = vld [vmem:[%s4109 + $0x18] sm:$0xff]
          %v4114 = vld [vmem:[%s4109 + $0x20] sm:$0xff]
          %v4115 = vld [vmem:[%s4109 + $0x28] sm:$0xff]
          %v4116 = vld [vmem:[%s4109 + $0x30] sm:$0xff]
          %v4117 = vld [vmem:[%s4109 + $0x38] sm:$0xff]
          %s4118 = scalar_lea.vmem [#allocation6], 256
          %v4119 = vld [vmem:[%s4118] sm:$0xff]
          %v4120 = vld [vmem:[%s4118 + $0x8] sm:$0xff]
          %v4121 = vld [vmem:[%s4118 + $0x10] sm:$0xff]
          %v4122 = vld [vmem:[%s4118 + $0x18] sm:$0xff]
          %v4123 = vld [vmem:[%s4118 + $0x20] sm:$0xff]
          %v4124 = vld [vmem:[%s4118 + $0x28] sm:$0xff]
          %v4125 = vld [vmem:[%s4118 + $0x30] sm:$0xff]
          %v4126 = vld [vmem:[%s4118 + $0x38] sm:$0xff]
          %v4127 = vmul.f32 %v4110, %v4119
          %v4128 = vmul.f32 %v4111, %v4120
          %v4129 = vmul.f32 %v4112, %v4121
          %v4130 = vmul.f32 %v4113, %v4122
          %v4131 = vmul.f32 %v4114, %v4123
          %v4132 = vmul.f32 %v4115, %v4124
          %v4133 = vmul.f32 %v4116, %v4125
          %v4134 = vmul.f32 %v4117, %v4126
          %4135 = vset.pattern.permute.xlu0 4
          %4136 = vperm.xlu0 %4135, %v3482
          %v4137 = vpop.permute.xlu0 %4136
          %4139 = vset.pattern.permute.xlu0 4
          %4140 = vperm.xlu0 %4139, %v3483
          %v4141 = vpop.permute.xlu0 %4140
          %4143 = vset.pattern.permute.xlu0 4
          %4144 = vperm.xlu0 %4143, %v3484
          %v4145 = vpop.permute.xlu0 %4144
          %4147 = vset.pattern.permute.xlu0 4
          %4148 = vperm.xlu0 %4147, %v3485
          %v4149 = vpop.permute.xlu0 %4148
          %4151 = vset.pattern.permute.xlu0 4
          %4152 = vperm.xlu0 %4151, %v3486
          %v4153 = vpop.permute.xlu0 %4152
          %4155 = vset.pattern.permute.xlu0 4
          %4156 = vperm.xlu0 %4155, %v3487
          %v4157 = vpop.permute.xlu0 %4156
          %4159 = vset.pattern.permute.xlu0 4
          %4160 = vperm.xlu0 %4159, %v3488
          %v4161 = vpop.permute.xlu0 %4160
          %4163 = vset.pattern.permute.xlu0 4
          %4164 = vperm.xlu0 %4163, %v3489
          %v4165 = vpop.permute.xlu0 %4164
          %v4167 = vperm.slane %v4107, 0
          %v4168 = vmul.f32 %v4137, %v4167
          %v4169 = vmul.f32 %v4141, %v4167
          %v4170 = vmul.f32 %v4145, %v4167
          %v4171 = vmul.f32 %v4149, %v4167
          %v4172 = vmul.f32 %v4153, %v4167
          %v4173 = vmul.f32 %v4157, %v4167
          %v4174 = vmul.f32 %v4161, %v4167
          %v4175 = vmul.f32 %v4165, %v4167
          %v4176 = vadd.f32 %v4127, %v4168
          %v4177 = vadd.f32 %v4128, %v4169
          %v4178 = vadd.f32 %v4129, %v4170
          %v4179 = vadd.f32 %v4130, %v4171
          %v4180 = vadd.f32 %v4131, %v4172
          %v4181 = vadd.f32 %v4132, %v4173
          %v4182 = vadd.f32 %v4133, %v4174
          %v4183 = vadd.f32 %v4134, %v4175
          %4184 = vst.msk [vmem:[%s4118] sm:$0xff] %vm1377, %v4176
          %4185 = vst.msk [vmem:[%s4118 + $0x8] sm:$0xff] %vm1377, %v4177
          %4186 = vst.msk [vmem:[%s4118 + $0x10] sm:$0xff] %vm1377, %v4178
          %4187 = vst.msk [vmem:[%s4118 + $0x18] sm:$0xff] %vm1377, %v4179
          %4188 = vst.msk [vmem:[%s4118 + $0x20] sm:$0xff] %vm1377, %v4180
          %4189 = vst.msk [vmem:[%s4118 + $0x28] sm:$0xff] %vm1377, %v4181
          %4190 = vst.msk [vmem:[%s4118 + $0x30] sm:$0xff] %vm1377, %v4182
          %4191 = vst.msk [vmem:[%s4118 + $0x38] sm:$0xff] %vm1377, %v4183
          %4192 = vset.pattern.permute.xlu0 4
          %4193 = vperm.xlu0 %4192, %v3490
          %v4194 = vpop.permute.xlu0 %4193
          %4196 = vset.pattern.permute.xlu0 4
          %4197 = vperm.xlu0 %4196, %v3491
          %v4198 = vpop.permute.xlu0 %4197
          %4200 = vset.pattern.permute.xlu0 4
          %4201 = vperm.xlu0 %4200, %v3492
          %v4202 = vpop.permute.xlu0 %4201
          %4204 = vset.pattern.permute.xlu0 4
          %4205 = vperm.xlu0 %4204, %v3493
          %v4206 = vpop.permute.xlu0 %4205
          %4208 = vset.pattern.permute.xlu0 4
          %4209 = vperm.xlu0 %4208, %v3494
          %v4210 = vpop.permute.xlu0 %4209
          %4212 = vset.pattern.permute.xlu0 4
          %4213 = vperm.xlu0 %4212, %v3495
          %v4214 = vpop.permute.xlu0 %4213
          %4216 = vset.pattern.permute.xlu0 4
          %4217 = vperm.xlu0 %4216, %v3496
          %v4218 = vpop.permute.xlu0 %4217
          %4220 = vset.pattern.permute.xlu0 4
          %4221 = vperm.xlu0 %4220, %v3497
          %v4222 = vpop.permute.xlu0 %4221
          %v4224 = vmul.f32 %v4176, %v4194
          %v4225 = vmul.f32 %v4177, %v4198
          %v4226 = vmul.f32 %v4178, %v4202
          %v4227 = vmul.f32 %v4179, %v4206
          %v4228 = vmul.f32 %v4180, %v4210
          %v4229 = vmul.f32 %v4181, %v4214
          %v4230 = vmul.f32 %v4182, %v4218
          %v4231 = vmul.f32 %v4183, %v4222
          %v4232 = vsel %vm1377, %v4224, 0.0
          %v4233 = vsel %vm1377, %v4225, 0.0
          %v4234 = vadd.f32 %v4232, %v4233
          %v4235 = vsel %vm1377, %v4226, 0.0
          %v4236 = vadd.f32 %v4234, %v4235
          %v4237 = vsel %vm1377, %v4227, 0.0
          %v4238 = vadd.f32 %v4236, %v4237
          %v4239 = vsel %vm1377, %v4228, 0.0
          %v4240 = vadd.f32 %v4238, %v4239
          %v4241 = vsel %vm1377, %v4229, 0.0
          %v4242 = vadd.f32 %v4240, %v4241
          %v4243 = vsel %vm1377, %v4230, 0.0
          %v4244 = vadd.f32 %v4242, %v4243
          %v4245 = vsel %vm1377, %v4231, 0.0
          %v4246 = vadd.f32 %v4244, %v4245
          %v4247 = vrot.slane %v4246, 4
          %v4248 = vadd.f32 %v4246, %v4247
          %v4249 = vrot.slane %v4248, 2
          %v4250 = vadd.f32 %v4248, %v4249
          %v4251 = vrot.slane %v4250, 1
          %v4252 = vadd.f32 %v4250, %v4251
          %s4253 = sadd.s32 %s3498, 5
          %s4254 = scalar_lea.vmem [#allocation3], %s4253
          %v4255 = vld [vmem:[%s4254] sm:$0x1]
          %s4256 = smul.u32 %s4253, 64
          %s4257 = scalar_lea.vmem [#allocation5], %s4256
          %v4258 = vld [vmem:[%s4257] sm:$0xff]
          %v4259 = vld [vmem:[%s4257 + $0x8] sm:$0xff]
          %v4260 = vld [vmem:[%s4257 + $0x10] sm:$0xff]
          %v4261 = vld [vmem:[%s4257 + $0x18] sm:$0xff]
          %v4262 = vld [vmem:[%s4257 + $0x20] sm:$0xff]
          %v4263 = vld [vmem:[%s4257 + $0x28] sm:$0xff]
          %v4264 = vld [vmem:[%s4257 + $0x30] sm:$0xff]
          %v4265 = vld [vmem:[%s4257 + $0x38] sm:$0xff]
          %s4266 = scalar_lea.vmem [#allocation6], 320
          %v4267 = vld [vmem:[%s4266] sm:$0xff]
          %v4268 = vld [vmem:[%s4266 + $0x8] sm:$0xff]
          %v4269 = vld [vmem:[%s4266 + $0x10] sm:$0xff]
          %v4270 = vld [vmem:[%s4266 + $0x18] sm:$0xff]
          %v4271 = vld [vmem:[%s4266 + $0x20] sm:$0xff]
          %v4272 = vld [vmem:[%s4266 + $0x28] sm:$0xff]
          %v4273 = vld [vmem:[%s4266 + $0x30] sm:$0xff]
          %v4274 = vld [vmem:[%s4266 + $0x38] sm:$0xff]
          %v4275 = vmul.f32 %v4258, %v4267
          %v4276 = vmul.f32 %v4259, %v4268
          %v4277 = vmul.f32 %v4260, %v4269
          %v4278 = vmul.f32 %v4261, %v4270
          %v4279 = vmul.f32 %v4262, %v4271
          %v4280 = vmul.f32 %v4263, %v4272
          %v4281 = vmul.f32 %v4264, %v4273
          %v4282 = vmul.f32 %v4265, %v4274
          %4283 = vset.pattern.permute.xlu0 5
          %4284 = vperm.xlu0 %4283, %v3482
          %v4285 = vpop.permute.xlu0 %4284
          %4287 = vset.pattern.permute.xlu0 5
          %4288 = vperm.xlu0 %4287, %v3483
          %v4289 = vpop.permute.xlu0 %4288
          %4291 = vset.pattern.permute.xlu0 5
          %4292 = vperm.xlu0 %4291, %v3484
          %v4293 = vpop.permute.xlu0 %4292
          %4295 = vset.pattern.permute.xlu0 5
          %4296 = vperm.xlu0 %4295, %v3485
          %v4297 = vpop.permute.xlu0 %4296
          %4299 = vset.pattern.permute.xlu0 5
          %4300 = vperm.xlu0 %4299, %v3486
          %v4301 = vpop.permute.xlu0 %4300
          %4303 = vset.pattern.permute.xlu0 5
          %4304 = vperm.xlu0 %4303, %v3487
          %v4305 = vpop.permute.xlu0 %4304
          %4307 = vset.pattern.permute.xlu0 5
          %4308 = vperm.xlu0 %4307, %v3488
          %v4309 = vpop.permute.xlu0 %4308
          %4311 = vset.pattern.permute.xlu0 5
          %4312 = vperm.xlu0 %4311, %v3489
          %v4313 = vpop.permute.xlu0 %4312
          %v4315 = vperm.slane %v4255, 0
          %v4316 = vmul.f32 %v4285, %v4315
          %v4317 = vmul.f32 %v4289, %v4315
          %v4318 = vmul.f32 %v4293, %v4315
          %v4319 = vmul.f32 %v4297, %v4315
          %v4320 = vmul.f32 %v4301, %v4315
          %v4321 = vmul.f32 %v4305, %v4315
          %v4322 = vmul.f32 %v4309, %v4315
          %v4323 = vmul.f32 %v4313, %v4315
          %v4324 = vadd.f32 %v4275, %v4316
          %v4325 = vadd.f32 %v4276, %v4317
          %v4326 = vadd.f32 %v4277, %v4318
          %v4327 = vadd.f32 %v4278, %v4319
          %v4328 = vadd.f32 %v4279, %v4320
          %v4329 = vadd.f32 %v4280, %v4321
          %v4330 = vadd.f32 %v4281, %v4322
          %v4331 = vadd.f32 %v4282, %v4323
          %4332 = vst.msk [vmem:[%s4266] sm:$0xff] %vm1377, %v4324
          %4333 = vst.msk [vmem:[%s4266 + $0x8] sm:$0xff] %vm1377, %v4325
          %4334 = vst.msk [vmem:[%s4266 + $0x10] sm:$0xff] %vm1377, %v4326
          %4335 = vst.msk [vmem:[%s4266 + $0x18] sm:$0xff] %vm1377, %v4327
          %4336 = vst.msk [vmem:[%s4266 + $0x20] sm:$0xff] %vm1377, %v4328
          %4337 = vst.msk [vmem:[%s4266 + $0x28] sm:$0xff] %vm1377, %v4329
          %4338 = vst.msk [vmem:[%s4266 + $0x30] sm:$0xff] %vm1377, %v4330
          %4339 = vst.msk [vmem:[%s4266 + $0x38] sm:$0xff] %vm1377, %v4331
          %4340 = vset.pattern.permute.xlu0 5
          %4341 = vperm.xlu0 %4340, %v3490
          %v4342 = vpop.permute.xlu0 %4341
          %4344 = vset.pattern.permute.xlu0 5
          %4345 = vperm.xlu0 %4344, %v3491
          %v4346 = vpop.permute.xlu0 %4345
          %4348 = vset.pattern.permute.xlu0 5
          %4349 = vperm.xlu0 %4348, %v3492
          %v4350 = vpop.permute.xlu0 %4349
          %4352 = vset.pattern.permute.xlu0 5
          %4353 = vperm.xlu0 %4352, %v3493
          %v4354 = vpop.permute.xlu0 %4353
          %4356 = vset.pattern.permute.xlu0 5
          %4357 = vperm.xlu0 %4356, %v3494
          %v4358 = vpop.permute.xlu0 %4357
          %4360 = vset.pattern.permute.xlu0 5
          %4361 = vperm.xlu0 %4360, %v3495
          %v4362 = vpop.permute.xlu0 %4361
          %4364 = vset.pattern.permute.xlu0 5
          %4365 = vperm.xlu0 %4364, %v3496
          %v4366 = vpop.permute.xlu0 %4365
          %4368 = vset.pattern.permute.xlu0 5
          %4369 = vperm.xlu0 %4368, %v3497
          %v4370 = vpop.permute.xlu0 %4369
          %v4372 = vmul.f32 %v4324, %v4342
          %v4373 = vmul.f32 %v4325, %v4346
          %v4374 = vmul.f32 %v4326, %v4350
          %v4375 = vmul.f32 %v4327, %v4354
          %v4376 = vmul.f32 %v4328, %v4358
          %v4377 = vmul.f32 %v4329, %v4362
          %v4378 = vmul.f32 %v4330, %v4366
          %v4379 = vmul.f32 %v4331, %v4370
          %v4380 = vsel %vm1377, %v4372, 0.0
          %v4381 = vsel %vm1377, %v4373, 0.0
          %v4382 = vadd.f32 %v4380, %v4381
          %v4383 = vsel %vm1377, %v4374, 0.0
          %v4384 = vadd.f32 %v4382, %v4383
          %v4385 = vsel %vm1377, %v4375, 0.0
          %v4386 = vadd.f32 %v4384, %v4385
          %v4387 = vsel %vm1377, %v4376, 0.0
          %v4388 = vadd.f32 %v4386, %v4387
          %v4389 = vsel %vm1377, %v4377, 0.0
          %v4390 = vadd.f32 %v4388, %v4389
          %v4391 = vsel %vm1377, %v4378, 0.0
          %v4392 = vadd.f32 %v4390, %v4391
          %v4393 = vsel %vm1377, %v4379, 0.0
          %v4394 = vadd.f32 %v4392, %v4393
          %v4395 = vrot.slane %v4394, 4
          %v4396 = vadd.f32 %v4394, %v4395
          %v4397 = vrot.slane %v4396, 2
          %v4398 = vadd.f32 %v4396, %v4397
          %v4399 = vrot.slane %v4398, 1
          %v4400 = vadd.f32 %v4398, %v4399
          %s4401 = sadd.s32 %s3498, 6
          %s4402 = scalar_lea.vmem [#allocation3], %s4401
          %v4403 = vld [vmem:[%s4402] sm:$0x1]
          %s4404 = smul.u32 %s4401, 64
          %s4405 = scalar_lea.vmem [#allocation5], %s4404
          %v4406 = vld [vmem:[%s4405] sm:$0xff]
          %v4407 = vld [vmem:[%s4405 + $0x8] sm:$0xff]
          %v4408 = vld [vmem:[%s4405 + $0x10] sm:$0xff]
          %v4409 = vld [vmem:[%s4405 + $0x18] sm:$0xff]
          %v4410 = vld [vmem:[%s4405 + $0x20] sm:$0xff]
          %v4411 = vld [vmem:[%s4405 + $0x28] sm:$0xff]
          %v4412 = vld [vmem:[%s4405 + $0x30] sm:$0xff]
          %v4413 = vld [vmem:[%s4405 + $0x38] sm:$0xff]
          %s4414 = scalar_lea.vmem [#allocation6], 384
          %v4415 = vld [vmem:[%s4414] sm:$0xff]
          %v4416 = vld [vmem:[%s4414 + $0x8] sm:$0xff]
          %v4417 = vld [vmem:[%s4414 + $0x10] sm:$0xff]
          %v4418 = vld [vmem:[%s4414 + $0x18] sm:$0xff]
          %v4419 = vld [vmem:[%s4414 + $0x20] sm:$0xff]
          %v4420 = vld [vmem:[%s4414 + $0x28] sm:$0xff]
          %v4421 = vld [vmem:[%s4414 + $0x30] sm:$0xff]
          %v4422 = vld [vmem:[%s4414 + $0x38] sm:$0xff]
          %v4423 = vmul.f32 %v4406, %v4415
          %v4424 = vmul.f32 %v4407, %v4416
          %v4425 = vmul.f32 %v4408, %v4417
          %v4426 = vmul.f32 %v4409, %v4418
          %v4427 = vmul.f32 %v4410, %v4419
          %v4428 = vmul.f32 %v4411, %v4420
          %v4429 = vmul.f32 %v4412, %v4421
          %v4430 = vmul.f32 %v4413, %v4422
          %4431 = vset.pattern.permute.xlu0 6
          %4432 = vperm.xlu0 %4431, %v3482
          %v4433 = vpop.permute.xlu0 %4432
          %4435 = vset.pattern.permute.xlu0 6
          %4436 = vperm.xlu0 %4435, %v3483
          %v4437 = vpop.permute.xlu0 %4436
          %4439 = vset.pattern.permute.xlu0 6
          %4440 = vperm.xlu0 %4439, %v3484
          %v4441 = vpop.permute.xlu0 %4440
          %4443 = vset.pattern.permute.xlu0 6
          %4444 = vperm.xlu0 %4443, %v3485
          %v4445 = vpop.permute.xlu0 %4444
          %4447 = vset.pattern.permute.xlu0 6
          %4448 = vperm.xlu0 %4447, %v3486
          %v4449 = vpop.permute.xlu0 %4448
          %4451 = vset.pattern.permute.xlu0 6
          %4452 = vperm.xlu0 %4451, %v3487
          %v4453 = vpop.permute.xlu0 %4452
          %4455 = vset.pattern.permute.xlu0 6
          %4456 = vperm.xlu0 %4455, %v3488
          %v4457 = vpop.permute.xlu0 %4456
          %4459 = vset.pattern.permute.xlu0 6
          %4460 = vperm.xlu0 %4459, %v3489
          %v4461 = vpop.permute.xlu0 %4460
          %v4463 = vperm.slane %v4403, 0
          %v4464 = vmul.f32 %v4433, %v4463
          %v4465 = vmul.f32 %v4437, %v4463
          %v4466 = vmul.f32 %v4441, %v4463
          %v4467 = vmul.f32 %v4445, %v4463
          %v4468 = vmul.f32 %v4449, %v4463
          %v4469 = vmul.f32 %v4453, %v4463
          %v4470 = vmul.f32 %v4457, %v4463
          %v4471 = vmul.f32 %v4461, %v4463
          %v4472 = vadd.f32 %v4423, %v4464
          %v4473 = vadd.f32 %v4424, %v4465
          %v4474 = vadd.f32 %v4425, %v4466
          %v4475 = vadd.f32 %v4426, %v4467
          %v4476 = vadd.f32 %v4427, %v4468
          %v4477 = vadd.f32 %v4428, %v4469
          %v4478 = vadd.f32 %v4429, %v4470
          %v4479 = vadd.f32 %v4430, %v4471
          %4480 = vst.msk [vmem:[%s4414] sm:$0xff] %vm1377, %v4472
          %4481 = vst.msk [vmem:[%s4414 + $0x8] sm:$0xff] %vm1377, %v4473
          %4482 = vst.msk [vmem:[%s4414 + $0x10] sm:$0xff] %vm1377, %v4474
          %4483 = vst.msk [vmem:[%s4414 + $0x18] sm:$0xff] %vm1377, %v4475
          %4484 = vst.msk [vmem:[%s4414 + $0x20] sm:$0xff] %vm1377, %v4476
          %4485 = vst.msk [vmem:[%s4414 + $0x28] sm:$0xff] %vm1377, %v4477
          %4486 = vst.msk [vmem:[%s4414 + $0x30] sm:$0xff] %vm1377, %v4478
          %4487 = vst.msk [vmem:[%s4414 + $0x38] sm:$0xff] %vm1377, %v4479
          %4488 = vset.pattern.permute.xlu0 6
          %4489 = vperm.xlu0 %4488, %v3490
          %v4490 = vpop.permute.xlu0 %4489
          %4492 = vset.pattern.permute.xlu0 6
          %4493 = vperm.xlu0 %4492, %v3491
          %v4494 = vpop.permute.xlu0 %4493
          %4496 = vset.pattern.permute.xlu0 6
          %4497 = vperm.xlu0 %4496, %v3492
          %v4498 = vpop.permute.xlu0 %4497
          %4500 = vset.pattern.permute.xlu0 6
          %4501 = vperm.xlu0 %4500, %v3493
          %v4502 = vpop.permute.xlu0 %4501
          %4504 = vset.pattern.permute.xlu0 6
          %4505 = vperm.xlu0 %4504, %v3494
          %v4506 = vpop.permute.xlu0 %4505
          %4508 = vset.pattern.permute.xlu0 6
          %4509 = vperm.xlu0 %4508, %v3495
          %v4510 = vpop.permute.xlu0 %4509
          %4512 = vset.pattern.permute.xlu0 6
          %4513 = vperm.xlu0 %4512, %v3496
          %v4514 = vpop.permute.xlu0 %4513
          %4516 = vset.pattern.permute.xlu0 6
          %4517 = vperm.xlu0 %4516, %v3497
          %v4518 = vpop.permute.xlu0 %4517
          %v4520 = vmul.f32 %v4472, %v4490
          %v4521 = vmul.f32 %v4473, %v4494
          %v4522 = vmul.f32 %v4474, %v4498
          %v4523 = vmul.f32 %v4475, %v4502
          %v4524 = vmul.f32 %v4476, %v4506
          %v4525 = vmul.f32 %v4477, %v4510
          %v4526 = vmul.f32 %v4478, %v4514
          %v4527 = vmul.f32 %v4479, %v4518
          %v4528 = vsel %vm1377, %v4520, 0.0
          %v4529 = vsel %vm1377, %v4521, 0.0
          %v4530 = vadd.f32 %v4528, %v4529
          %v4531 = vsel %vm1377, %v4522, 0.0
          %v4532 = vadd.f32 %v4530, %v4531
          %v4533 = vsel %vm1377, %v4523, 0.0
          %v4534 = vadd.f32 %v4532, %v4533
          %v4535 = vsel %vm1377, %v4524, 0.0
          %v4536 = vadd.f32 %v4534, %v4535
          %v4537 = vsel %vm1377, %v4525, 0.0
          %v4538 = vadd.f32 %v4536, %v4537
          %v4539 = vsel %vm1377, %v4526, 0.0
          %v4540 = vadd.f32 %v4538, %v4539
          %v4541 = vsel %vm1377, %v4527, 0.0
          %v4542 = vadd.f32 %v4540, %v4541
          %v4543 = vrot.slane %v4542, 4
          %v4544 = vadd.f32 %v4542, %v4543
          %v4545 = vrot.slane %v4544, 2
          %v4546 = vadd.f32 %v4544, %v4545
          %v4547 = vrot.slane %v4546, 1
          %v4548 = vadd.f32 %v4546, %v4547
          %s4549 = sadd.s32 %s3498, 7
          %s4550 = scalar_lea.vmem [#allocation3], %s4549
          %v4551 = vld [vmem:[%s4550] sm:$0x1]
          %s4552 = smul.u32 %s4549, 64
          %s4553 = scalar_lea.vmem [#allocation5], %s4552
          %v4554 = vld [vmem:[%s4553] sm:$0xff]
          %v4555 = vld [vmem:[%s4553 + $0x8] sm:$0xff]
          %v4556 = vld [vmem:[%s4553 + $0x10] sm:$0xff]
          %v4557 = vld [vmem:[%s4553 + $0x18] sm:$0xff]
          %v4558 = vld [vmem:[%s4553 + $0x20] sm:$0xff]
          %v4559 = vld [vmem:[%s4553 + $0x28] sm:$0xff]
          %v4560 = vld [vmem:[%s4553 + $0x30] sm:$0xff]
          %v4561 = vld [vmem:[%s4553 + $0x38] sm:$0xff]
          %s4562 = scalar_lea.vmem [#allocation6], 448
          %v4563 = vld [vmem:[%s4562] sm:$0xff]
          %v4564 = vld [vmem:[%s4562 + $0x8] sm:$0xff]
          %v4565 = vld [vmem:[%s4562 + $0x10] sm:$0xff]
          %v4566 = vld [vmem:[%s4562 + $0x18] sm:$0xff]
          %v4567 = vld [vmem:[%s4562 + $0x20] sm:$0xff]
          %v4568 = vld [vmem:[%s4562 + $0x28] sm:$0xff]
          %v4569 = vld [vmem:[%s4562 + $0x30] sm:$0xff]
          %v4570 = vld [vmem:[%s4562 + $0x38] sm:$0xff]
          %v4571 = vmul.f32 %v4554, %v4563
          %v4572 = vmul.f32 %v4555, %v4564
          %v4573 = vmul.f32 %v4556, %v4565
          %v4574 = vmul.f32 %v4557, %v4566
          %v4575 = vmul.f32 %v4558, %v4567
          %v4576 = vmul.f32 %v4559, %v4568
          %v4577 = vmul.f32 %v4560, %v4569
          %v4578 = vmul.f32 %v4561, %v4570
          %4579 = vset.pattern.permute.xlu0 7
          %4580 = vperm.xlu0 %4579, %v3482
          %v4581 = vpop.permute.xlu0 %4580
          %4583 = vset.pattern.permute.xlu0 7
          %4584 = vperm.xlu0 %4583, %v3483
          %v4585 = vpop.permute.xlu0 %4584
          %4587 = vset.pattern.permute.xlu0 7
          %4588 = vperm.xlu0 %4587, %v3484
          %v4589 = vpop.permute.xlu0 %4588
          %4591 = vset.pattern.permute.xlu0 7
          %4592 = vperm.xlu0 %4591, %v3485
          %v4593 = vpop.permute.xlu0 %4592
          %4595 = vset.pattern.permute.xlu0 7
          %4596 = vperm.xlu0 %4595, %v3486
          %v4597 = vpop.permute.xlu0 %4596
          %4599 = vset.pattern.permute.xlu0 7
          %4600 = vperm.xlu0 %4599, %v3487
          %v4601 = vpop.permute.xlu0 %4600
          %4603 = vset.pattern.permute.xlu0 7
          %4604 = vperm.xlu0 %4603, %v3488
          %v4605 = vpop.permute.xlu0 %4604
          %4607 = vset.pattern.permute.xlu0 7
          %4608 = vperm.xlu0 %4607, %v3489
          %v4609 = vpop.permute.xlu0 %4608
          %v4611 = vperm.slane %v4551, 0
          %v4612 = vmul.f32 %v4581, %v4611
          %v4613 = vmul.f32 %v4585, %v4611
          %v4614 = vmul.f32 %v4589, %v4611
          %v4615 = vmul.f32 %v4593, %v4611
          %v4616 = vmul.f32 %v4597, %v4611
          %v4617 = vmul.f32 %v4601, %v4611
          %v4618 = vmul.f32 %v4605, %v4611
          %v4619 = vmul.f32 %v4609, %v4611
          %v4620 = vadd.f32 %v4571, %v4612
          %v4621 = vadd.f32 %v4572, %v4613
          %v4622 = vadd.f32 %v4573, %v4614
          %v4623 = vadd.f32 %v4574, %v4615
          %v4624 = vadd.f32 %v4575, %v4616
          %v4625 = vadd.f32 %v4576, %v4617
          %v4626 = vadd.f32 %v4577, %v4618
          %v4627 = vadd.f32 %v4578, %v4619
          %4628 = vst.msk [vmem:[%s4562] sm:$0xff] %vm1377, %v4620
          %4629 = vst.msk [vmem:[%s4562 + $0x8] sm:$0xff] %vm1377, %v4621
          %4630 = vst.msk [vmem:[%s4562 + $0x10] sm:$0xff] %vm1377, %v4622
          %4631 = vst.msk [vmem:[%s4562 + $0x18] sm:$0xff] %vm1377, %v4623
          %4632 = vst.msk [vmem:[%s4562 + $0x20] sm:$0xff] %vm1377, %v4624
          %4633 = vst.msk [vmem:[%s4562 + $0x28] sm:$0xff] %vm1377, %v4625
          %4634 = vst.msk [vmem:[%s4562 + $0x30] sm:$0xff] %vm1377, %v4626
          %4635 = vst.msk [vmem:[%s4562 + $0x38] sm:$0xff] %vm1377, %v4627
          %4636 = vset.pattern.permute.xlu0 7
          %4637 = vperm.xlu0 %4636, %v3490
          %v4638 = vpop.permute.xlu0 %4637
          %4640 = vset.pattern.permute.xlu0 7
          %4641 = vperm.xlu0 %4640, %v3491
          %v4642 = vpop.permute.xlu0 %4641
          %4644 = vset.pattern.permute.xlu0 7
          %4645 = vperm.xlu0 %4644, %v3492
          %v4646 = vpop.permute.xlu0 %4645
          %4648 = vset.pattern.permute.xlu0 7
          %4649 = vperm.xlu0 %4648, %v3493
          %v4650 = vpop.permute.xlu0 %4649
          %4652 = vset.pattern.permute.xlu0 7
          %4653 = vperm.xlu0 %4652, %v3494
          %v4654 = vpop.permute.xlu0 %4653
          %4656 = vset.pattern.permute.xlu0 7
          %4657 = vperm.xlu0 %4656, %v3495
          %v4658 = vpop.permute.xlu0 %4657
          %4660 = vset.pattern.permute.xlu0 7
          %4661 = vperm.xlu0 %4660, %v3496
          %v4662 = vpop.permute.xlu0 %4661
          %4664 = vset.pattern.permute.xlu0 7
          %4665 = vperm.xlu0 %4664, %v3497
          %v4666 = vpop.permute.xlu0 %4665
          %v4668 = vmul.f32 %v4620, %v4638
          %v4669 = vmul.f32 %v4621, %v4642
          %v4670 = vmul.f32 %v4622, %v4646
          %v4671 = vmul.f32 %v4623, %v4650
          %v4672 = vmul.f32 %v4624, %v4654
          %v4673 = vmul.f32 %v4625, %v4658
          %v4674 = vmul.f32 %v4626, %v4662
          %v4675 = vmul.f32 %v4627, %v4666
          %v4676 = vsel %vm1377, %v4668, 0.0
          %v4677 = vsel %vm1377, %v4669, 0.0
          %v4678 = vadd.f32 %v4676, %v4677
          %v4679 = vsel %vm1377, %v4670, 0.0
          %v4680 = vadd.f32 %v4678, %v4679
          %v4681 = vsel %vm1377, %v4671, 0.0
          %v4682 = vadd.f32 %v4680, %v4681
          %v4683 = vsel %vm1377, %v4672, 0.0
          %v4684 = vadd.f32 %v4682, %v4683
          %v4685 = vsel %vm1377, %v4673, 0.0
          %v4686 = vadd.f32 %v4684, %v4685
          %v4687 = vsel %vm1377, %v4674, 0.0
          %v4688 = vadd.f32 %v4686, %v4687
          %v4689 = vsel %vm1377, %v4675, 0.0
          %v4690 = vadd.f32 %v4688, %v4689
          %v4691 = vrot.slane %v4690, 4
          %v4692 = vadd.f32 %v4690, %v4691
          %v4693 = vrot.slane %v4692, 2
          %v4694 = vadd.f32 %v4692, %v4693
          %v4695 = vrot.slane %v4694, 1
          %v4696 = vadd.f32 %v4694, %v4695
          %vm4697 = vcmask 1040384
          %v4698 = vsel %vm4697, %v3660, %v3808
          %vm4699 = vcmask 1041408
          %v4700 = vsel %vm4699, %v4698, %v3956
          %vm4701 = vcmask 1042432
          %v4702 = vsel %vm4701, %v4700, %v4104
          %vm4703 = vcmask 1043456
          %v4704 = vsel %vm4703, %v4702, %v4252
          %vm4705 = vcmask 1044480
          %v4706 = vsel %vm4705, %v4704, %v4400
          %vm4707 = vcmask 1045504
          %v4708 = vsel %vm4707, %v4706, %v4548
          %vm4709 = vcmask 1046528
          %v4710 = vsel %vm4709, %v4708, %v4696
          %s4711 = scalar_lea.vmem [#allocation7], %s3498
          %4712 = vst.msk [vmem:[%s4711] sm:$0xff] %vm1377, %v4710
        $region76: #{tpu_custom_call.1} parent=59 // loop_footer
          %s3479 = sadd.s32 1, %s3475
        $region77: #{tpu_custom_call.1} parent=59 // loop_footer_branch
          %3474 = sbr.rel target = $region73
        $region78: #{tpu_custom_call.1} parent=59 // loop_exit
          _
        %v4713 = vld [vmem:[#allocation7] sm:$0xff]
        %v4714 = vld [vmem:[#allocation7 + $0x8] sm:$0xff]
        %v4715 = vld [vmem:[#allocation7 + $0x10] sm:$0xff]
        %v4716 = vld [vmem:[#allocation7 + $0x18] sm:$0xff]
        %v4717 = vld [vmem:[#allocation7 + $0x20] sm:$0xff]
        %v4718 = vld [vmem:[#allocation7 + $0x28] sm:$0xff]
        %v4719 = vld [vmem:[#allocation7 + $0x30] sm:$0xff]
        %v4720 = vld [vmem:[#allocation7 + $0x38] sm:$0xff]
        %v4721 = vld [vmem:[#allocation7 + $0x40] sm:$0xff]
        %v4722 = vld [vmem:[#allocation7 + $0x48] sm:$0xff]
        %v4723 = vld [vmem:[#allocation7 + $0x50] sm:$0xff]
        %v4724 = vld [vmem:[#allocation7 + $0x58] sm:$0xff]
        %v4725 = vld [vmem:[#allocation7 + $0x60] sm:$0xff]
        %v4726 = vld [vmem:[#allocation7 + $0x68] sm:$0xff]
        %v4727 = vld [vmem:[#allocation7 + $0x70] sm:$0xff]
        %v4728 = vld [vmem:[#allocation7 + $0x78] sm:$0xff]
        %v4729 = vld [vmem:[%s4 + $0x2] sm:$0x1]
        %v4730 = vperm.slane %v4729, 0
        %v4731 = vmul.f32 %v1345, %v4730
        %v4732 = vmul.f32 %v1346, %v4730
        %v4733 = vmul.f32 %v1347, %v4730
        %v4734 = vmul.f32 %v1348, %v4730
        %v4735 = vmul.f32 %v1349, %v4730
        %v4736 = vmul.f32 %v1350, %v4730
        %v4737 = vmul.f32 %v1351, %v4730
        %v4738 = vmul.f32 %v1352, %v4730
        %v4739 = vmul.f32 %v1353, %v4730
        %v4740 = vmul.f32 %v1354, %v4730
        %v4741 = vmul.f32 %v1355, %v4730
        %v4742 = vmul.f32 %v1356, %v4730
        %v4743 = vmul.f32 %v1357, %v4730
        %v4744 = vmul.f32 %v1358, %v4730
        %v4745 = vmul.f32 %v1359, %v4730
        %v4746 = vmul.f32 %v1360, %v4730
        %v4747 = vadd.f32 %v4713, %v4731
        %v4748 = vadd.f32 %v4714, %v4732
        %v4749 = vadd.f32 %v4715, %v4733
        %v4750 = vadd.f32 %v4716, %v4734
        %v4751 = vadd.f32 %v4717, %v4735
        %v4752 = vadd.f32 %v4718, %v4736
        %v4753 = vadd.f32 %v4719, %v4737
        %v4754 = vadd.f32 %v4720, %v4738
        %v4755 = vadd.f32 %v4721, %v4739
        %v4756 = vadd.f32 %v4722, %v4740
        %v4757 = vadd.f32 %v4723, %v4741
        %v4758 = vadd.f32 %v4724, %v4742
        %v4759 = vadd.f32 %v4725, %v4743
        %v4760 = vadd.f32 %v4726, %v4744
        %v4761 = vadd.f32 %v4727, %v4745
        %v4762 = vadd.f32 %v4728, %v4746
        %v4763 = vxor.u32 %v859, 2147483648
        %v4764 = vxor.u32 %v862, 2147483648
        %v4765 = vxor.u32 %v865, 2147483648
        %v4766 = vxor.u32 %v868, 2147483648
        %v4767 = vxor.u32 %v871, 2147483648
        %v4768 = vxor.u32 %v874, 2147483648
        %v4769 = vxor.u32 %v877, 2147483648
        %v4770 = vxor.u32 %v880, 2147483648
        %v4771 = vxor.u32 %v883, 2147483648
        %v4772 = vxor.u32 %v886, 2147483648
        %v4773 = vxor.u32 %v889, 2147483648
        %v4774 = vxor.u32 %v892, 2147483648
        %v4775 = vxor.u32 %v895, 2147483648
        %v4776 = vxor.u32 %v898, 2147483648
        %v4777 = vxor.u32 %v901, 2147483648
        %v4778 = vxor.u32 %v904, 2147483648
        %v4779 = vmul.f32 %v4763, 1.442695
        %v4780 = vpow.pop %v4779
        %v4781 = vmul.f32 %v4764, 1.442695
        %v4782 = vpow.pop %v4781
        %v4783 = vmul.f32 %v4765, 1.442695
        %v4784 = vpow.pop %v4783
        %v4785 = vmul.f32 %v4766, 1.442695
        %v4786 = vpow.pop %v4785
        %v4787 = vmul.f32 %v4767, 1.442695
        %v4788 = vpow.pop %v4787
        %v4789 = vmul.f32 %v4768, 1.442695
        %v4790 = vpow.pop %v4789
        %v4791 = vmul.f32 %v4769, 1.442695
        %v4792 = vpow.pop %v4791
        %v4793 = vmul.f32 %v4770, 1.442695
        %v4794 = vpow.pop %v4793
        %v4795 = vmul.f32 %v4771, 1.442695
        %v4796 = vpow.pop %v4795
        %v4797 = vmul.f32 %v4772, 1.442695
        %v4798 = vpow.pop %v4797
        %v4799 = vmul.f32 %v4773, 1.442695
        %v4800 = vpow.pop %v4799
        %v4801 = vmul.f32 %v4774, 1.442695
        %v4802 = vpow.pop %v4801
        %v4803 = vmul.f32 %v4775, 1.442695
        %v4804 = vpow.pop %v4803
        %v4805 = vmul.f32 %v4776, 1.442695
        %v4806 = vpow.pop %v4805
        %v4807 = vmul.f32 %v4777, 1.442695
        %v4808 = vpow.pop %v4807
        %v4809 = vmul.f32 %v4778, 1.442695
        %v4810 = vpow.pop %v4809
        %v4811 = vadd.f32 %v4780, 1.0
        %v4812 = vadd.f32 %v4782, 1.0
        %v4813 = vadd.f32 %v4784, 1.0
        %v4814 = vadd.f32 %v4786, 1.0
        %v4815 = vadd.f32 %v4788, 1.0
        %v4816 = vadd.f32 %v4790, 1.0
        %v4817 = vadd.f32 %v4792, 1.0
        %v4818 = vadd.f32 %v4794, 1.0
        %v4819 = vadd.f32 %v4796, 1.0
        %v4820 = vadd.f32 %v4798, 1.0
        %v4821 = vadd.f32 %v4800, 1.0
        %v4822 = vadd.f32 %v4802, 1.0
        %v4823 = vadd.f32 %v4804, 1.0
        %v4824 = vadd.f32 %v4806, 1.0
        %v4825 = vadd.f32 %v4808, 1.0
        %v4826 = vadd.f32 %v4810, 1.0
        %v4827 = vrcp.pop %v4811
        %v4828 = vmul.f32 %v4811, %v4827
        %v4829 = vsub.f32 1.0, %v4828
        %v4830 = vmul.f32 %v4827, %v4829
        %v4831 = vadd.f32 %v4827, %v4830
        %vm4832 = vweird.f32 %v4811
        %vm4833 = vweird.f32 %v4827
        %vm4834 = vmor %vm4832, %vm4833
        %v4835 = vsel %vm4834, %v4827, %v4831
        %v4836 = vand.u32 2147483647, %v4811
        %vm4837 = vcmp.eq.f32.partialorder %v4836, 8.507059e+37
        %v4838 = vand.u32 %v4811, 2147483648
        %v4839 = vor.u32 1.1754944e-38, %v4838
        %v4840 = vsel %vm4837, %v4839, %v4835
        %v4841 = vmul.f32 1.0, %v4840
        %v4842 = vrcp.pop %v4812
        %v4843 = vmul.f32 %v4812, %v4842
        %v4844 = vsub.f32 1.0, %v4843
        %v4845 = vmul.f32 %v4842, %v4844
        %v4846 = vadd.f32 %v4842, %v4845
        %vm4847 = vweird.f32 %v4812
        %vm4848 = vweird.f32 %v4842
        %vm4849 = vmor %vm4847, %vm4848
        %v4850 = vsel %vm4849, %v4842, %v4846
        %v4851 = vand.u32 2147483647, %v4812
        %vm4852 = vcmp.eq.f32.partialorder %v4851, 8.507059e+37
        %v4853 = vand.u32 %v4812, 2147483648
        %v4854 = vor.u32 1.1754944e-38, %v4853
        %v4855 = vsel %vm4852, %v4854, %v4850
        %v4856 = vmul.f32 1.0, %v4855
        %v4857 = vrcp.pop %v4813
        %v4858 = vmul.f32 %v4813, %v4857
        %v4859 = vsub.f32 1.0, %v4858
        %v4860 = vmul.f32 %v4857, %v4859
        %v4861 = vadd.f32 %v4857, %v4860
        %vm4862 = vweird.f32 %v4813
        %vm4863 = vweird.f32 %v4857
        %vm4864 = vmor %vm4862, %vm4863
        %v4865 = vsel %vm4864, %v4857, %v4861
        %v4866 = vand.u32 2147483647, %v4813
        %vm4867 = vcmp.eq.f32.partialorder %v4866, 8.507059e+37
        %v4868 = vand.u32 %v4813, 2147483648
        %v4869 = vor.u32 1.1754944e-38, %v4868
        %v4870 = vsel %vm4867, %v4869, %v4865
        %v4871 = vmul.f32 1.0, %v4870
        %v4872 = vrcp.pop %v4814
        %v4873 = vmul.f32 %v4814, %v4872
        %v4874 = vsub.f32 1.0, %v4873
        %v4875 = vmul.f32 %v4872, %v4874
        %v4876 = vadd.f32 %v4872, %v4875
        %vm4877 = vweird.f32 %v4814
        %vm4878 = vweird.f32 %v4872
        %vm4879 = vmor %vm4877, %vm4878
        %v4880 = vsel %vm4879, %v4872, %v4876
        %v4881 = vand.u32 2147483647, %v4814
        %vm4882 = vcmp.eq.f32.partialorder %v4881, 8.507059e+37
        %v4883 = vand.u32 %v4814, 2147483648
        %v4884 = vor.u32 1.1754944e-38, %v4883
        %v4885 = vsel %vm4882, %v4884, %v4880
        %v4886 = vmul.f32 1.0, %v4885
        %v4887 = vrcp.pop %v4815
        %v4888 = vmul.f32 %v4815, %v4887
        %v4889 = vsub.f32 1.0, %v4888
        %v4890 = vmul.f32 %v4887, %v4889
        %v4891 = vadd.f32 %v4887, %v4890
        %vm4892 = vweird.f32 %v4815
        %vm4893 = vweird.f32 %v4887
        %vm4894 = vmor %vm4892, %vm4893
        %v4895 = vsel %vm4894, %v4887, %v4891
        %v4896 = vand.u32 2147483647, %v4815
        %vm4897 = vcmp.eq.f32.partialorder %v4896, 8.507059e+37
        %v4898 = vand.u32 %v4815, 2147483648
        %v4899 = vor.u32 1.1754944e-38, %v4898
        %v4900 = vsel %vm4897, %v4899, %v4895
        %v4901 = vmul.f32 1.0, %v4900
        %v4902 = vrcp.pop %v4816
        %v4903 = vmul.f32 %v4816, %v4902
        %v4904 = vsub.f32 1.0, %v4903
        %v4905 = vmul.f32 %v4902, %v4904
        %v4906 = vadd.f32 %v4902, %v4905
        %vm4907 = vweird.f32 %v4816
        %vm4908 = vweird.f32 %v4902
        %vm4909 = vmor %vm4907, %vm4908
        %v4910 = vsel %vm4909, %v4902, %v4906
        %v4911 = vand.u32 2147483647, %v4816
        %vm4912 = vcmp.eq.f32.partialorder %v4911, 8.507059e+37
        %v4913 = vand.u32 %v4816, 2147483648
        %v4914 = vor.u32 1.1754944e-38, %v4913
        %v4915 = vsel %vm4912, %v4914, %v4910
        %v4916 = vmul.f32 1.0, %v4915
        %v4917 = vrcp.pop %v4817
        %v4918 = vmul.f32 %v4817, %v4917
        %v4919 = vsub.f32 1.0, %v4918
        %v4920 = vmul.f32 %v4917, %v4919
        %v4921 = vadd.f32 %v4917, %v4920
        %vm4922 = vweird.f32 %v4817
        %vm4923 = vweird.f32 %v4917
        %vm4924 = vmor %vm4922, %vm4923
        %v4925 = vsel %vm4924, %v4917, %v4921
        %v4926 = vand.u32 2147483647, %v4817
        %vm4927 = vcmp.eq.f32.partialorder %v4926, 8.507059e+37
        %v4928 = vand.u32 %v4817, 2147483648
        %v4929 = vor.u32 1.1754944e-38, %v4928
        %v4930 = vsel %vm4927, %v4929, %v4925
        %v4931 = vmul.f32 1.0, %v4930
        %v4932 = vrcp.pop %v4818
        %v4933 = vmul.f32 %v4818, %v4932
        %v4934 = vsub.f32 1.0, %v4933
        %v4935 = vmul.f32 %v4932, %v4934
        %v4936 = vadd.f32 %v4932, %v4935
        %vm4937 = vweird.f32 %v4818
        %vm4938 = vweird.f32 %v4932
        %vm4939 = vmor %vm4937, %vm4938
        %v4940 = vsel %vm4939, %v4932, %v4936
        %v4941 = vand.u32 2147483647, %v4818
        %vm4942 = vcmp.eq.f32.partialorder %v4941, 8.507059e+37
        %v4943 = vand.u32 %v4818, 2147483648
        %v4944 = vor.u32 1.1754944e-38, %v4943
        %v4945 = vsel %vm4942, %v4944, %v4940
        %v4946 = vmul.f32 1.0, %v4945
        %v4947 = vrcp.pop %v4819
        %v4948 = vmul.f32 %v4819, %v4947
        %v4949 = vsub.f32 1.0, %v4948
        %v4950 = vmul.f32 %v4947, %v4949
        %v4951 = vadd.f32 %v4947, %v4950
        %vm4952 = vweird.f32 %v4819
        %vm4953 = vweird.f32 %v4947
        %vm4954 = vmor %vm4952, %vm4953
        %v4955 = vsel %vm4954, %v4947, %v4951
        %v4956 = vand.u32 2147483647, %v4819
        %vm4957 = vcmp.eq.f32.partialorder %v4956, 8.507059e+37
        %v4958 = vand.u32 %v4819, 2147483648
        %v4959 = vor.u32 1.1754944e-38, %v4958
        %v4960 = vsel %vm4957, %v4959, %v4955
        %v4961 = vmul.f32 1.0, %v4960
        %v4962 = vrcp.pop %v4820
        %v4963 = vmul.f32 %v4820, %v4962
        %v4964 = vsub.f32 1.0, %v4963
        %v4965 = vmul.f32 %v4962, %v4964
        %v4966 = vadd.f32 %v4962, %v4965
        %vm4967 = vweird.f32 %v4820
        %vm4968 = vweird.f32 %v4962
        %vm4969 = vmor %vm4967, %vm4968
        %v4970 = vsel %vm4969, %v4962, %v4966
        %v4971 = vand.u32 2147483647, %v4820
        %vm4972 = vcmp.eq.f32.partialorder %v4971, 8.507059e+37
        %v4973 = vand.u32 %v4820, 2147483648
        %v4974 = vor.u32 1.1754944e-38, %v4973
        %v4975 = vsel %vm4972, %v4974, %v4970
        %v4976 = vmul.f32 1.0, %v4975
        %v4977 = vrcp.pop %v4821
        %v4978 = vmul.f32 %v4821, %v4977
        %v4979 = vsub.f32 1.0, %v4978
        %v4980 = vmul.f32 %v4977, %v4979
        %v4981 = vadd.f32 %v4977, %v4980
        %vm4982 = vweird.f32 %v4821
        %vm4983 = vweird.f32 %v4977
        %vm4984 = vmor %vm4982, %vm4983
        %v4985 = vsel %vm4984, %v4977, %v4981
        %v4986 = vand.u32 2147483647, %v4821
        %vm4987 = vcmp.eq.f32.partialorder %v4986, 8.507059e+37
        %v4988 = vand.u32 %v4821, 2147483648
        %v4989 = vor.u32 1.1754944e-38, %v4988
        %v4990 = vsel %vm4987, %v4989, %v4985
        %v4991 = vmul.f32 1.0, %v4990
        %v4992 = vrcp.pop %v4822
        %v4993 = vmul.f32 %v4822, %v4992
        %v4994 = vsub.f32 1.0, %v4993
        %v4995 = vmul.f32 %v4992, %v4994
        %v4996 = vadd.f32 %v4992, %v4995
        %vm4997 = vweird.f32 %v4822
        %vm4998 = vweird.f32 %v4992
        %vm4999 = vmor %vm4997, %vm4998
        %v5000 = vsel %vm4999, %v4992, %v4996
        %v5001 = vand.u32 2147483647, %v4822
        %vm5002 = vcmp.eq.f32.partialorder %v5001, 8.507059e+37
        %v5003 = vand.u32 %v4822, 2147483648
        %v5004 = vor.u32 1.1754944e-38, %v5003
        %v5005 = vsel %vm5002, %v5004, %v5000
        %v5006 = vmul.f32 1.0, %v5005
        %v5007 = vrcp.pop %v4823
        %v5008 = vmul.f32 %v4823, %v5007
        %v5009 = vsub.f32 1.0, %v5008
        %v5010 = vmul.f32 %v5007, %v5009
        %v5011 = vadd.f32 %v5007, %v5010
        %vm5012 = vweird.f32 %v4823
        %vm5013 = vweird.f32 %v5007
        %vm5014 = vmor %vm5012, %vm5013
        %v5015 = vsel %vm5014, %v5007, %v5011
        %v5016 = vand.u32 2147483647, %v4823
        %vm5017 = vcmp.eq.f32.partialorder %v5016, 8.507059e+37
        %v5018 = vand.u32 %v4823, 2147483648
        %v5019 = vor.u32 1.1754944e-38, %v5018
        %v5020 = vsel %vm5017, %v5019, %v5015
        %v5021 = vmul.f32 1.0, %v5020
        %v5022 = vrcp.pop %v4824
        %v5023 = vmul.f32 %v4824, %v5022
        %v5024 = vsub.f32 1.0, %v5023
        %v5025 = vmul.f32 %v5022, %v5024
        %v5026 = vadd.f32 %v5022, %v5025
        %vm5027 = vweird.f32 %v4824
        %vm5028 = vweird.f32 %v5022
        %vm5029 = vmor %vm5027, %vm5028
        %v5030 = vsel %vm5029, %v5022, %v5026
        %v5031 = vand.u32 2147483647, %v4824
        %vm5032 = vcmp.eq.f32.partialorder %v5031, 8.507059e+37
        %v5033 = vand.u32 %v4824, 2147483648
        %v5034 = vor.u32 1.1754944e-38, %v5033
        %v5035 = vsel %vm5032, %v5034, %v5030
        %v5036 = vmul.f32 1.0, %v5035
        %v5037 = vrcp.pop %v4825
        %v5038 = vmul.f32 %v4825, %v5037
        %v5039 = vsub.f32 1.0, %v5038
        %v5040 = vmul.f32 %v5037, %v5039
        %v5041 = vadd.f32 %v5037, %v5040
        %vm5042 = vweird.f32 %v4825
        %vm5043 = vweird.f32 %v5037
        %vm5044 = vmor %vm5042, %vm5043
        %v5045 = vsel %vm5044, %v5037, %v5041
        %v5046 = vand.u32 2147483647, %v4825
        %vm5047 = vcmp.eq.f32.partialorder %v5046, 8.507059e+37
        %v5048 = vand.u32 %v4825, 2147483648
        %v5049 = vor.u32 1.1754944e-38, %v5048
        %v5050 = vsel %vm5047, %v5049, %v5045
        %v5051 = vmul.f32 1.0, %v5050
        %v5052 = vrcp.pop %v4826
        %v5053 = vmul.f32 %v4826, %v5052
        %v5054 = vsub.f32 1.0, %v5053
        %v5055 = vmul.f32 %v5052, %v5054
        %v5056 = vadd.f32 %v5052, %v5055
        %vm5057 = vweird.f32 %v4826
        %vm5058 = vweird.f32 %v5052
        %vm5059 = vmor %vm5057, %vm5058
        %v5060 = vsel %vm5059, %v5052, %v5056
        %v5061 = vand.u32 2147483647, %v4826
        %vm5062 = vcmp.eq.f32.partialorder %v5061, 8.507059e+37
        %v5063 = vand.u32 %v4826, 2147483648
        %v5064 = vor.u32 1.1754944e-38, %v5063
        %v5065 = vsel %vm5062, %v5064, %v5060
        %v5066 = vmul.f32 1.0, %v5065
        %v5067 = vmul.f32 %v859, %v4841
        %v5068 = vmul.f32 %v862, %v4856
        %v5069 = vmul.f32 %v865, %v4871
        %v5070 = vmul.f32 %v868, %v4886
        %v5071 = vmul.f32 %v871, %v4901
        %v5072 = vmul.f32 %v874, %v4916
        %v5073 = vmul.f32 %v877, %v4931
        %v5074 = vmul.f32 %v880, %v4946
        %v5075 = vmul.f32 %v883, %v4961
        %v5076 = vmul.f32 %v886, %v4976
        %v5077 = vmul.f32 %v889, %v4991
        %v5078 = vmul.f32 %v892, %v5006
        %v5079 = vmul.f32 %v895, %v5021
        %v5080 = vmul.f32 %v898, %v5036
        %v5081 = vmul.f32 %v901, %v5051
        %v5082 = vmul.f32 %v904, %v5066
        %5099 = vrot.lane.b32.xlu0 %v5067, 96
        %v5100 = vpop.permute.xlu0 %5099
        %5101 = vrot.lane.b32.xlu0 %v5068, 96
        %v5102 = vpop.permute.xlu0 %5101
        %5103 = vrot.lane.b32.xlu0 %v5069, 96
        %v5104 = vpop.permute.xlu0 %5103
        %5105 = vrot.lane.b32.xlu0 %v5070, 96
        %v5106 = vpop.permute.xlu0 %5105
        %5107 = vrot.lane.b32.xlu0 %v5071, 96
        %v5108 = vpop.permute.xlu0 %5107
        %5109 = vrot.lane.b32.xlu0 %v5072, 96
        %v5110 = vpop.permute.xlu0 %5109
        %5111 = vrot.lane.b32.xlu0 %v5073, 96
        %v5112 = vpop.permute.xlu0 %5111
        %5113 = vrot.lane.b32.xlu0 %v5074, 96
        %v5114 = vpop.permute.xlu0 %5113
        %5115 = vrot.lane.b32.xlu0 %v5075, 96
        %v5116 = vpop.permute.xlu0 %5115
        %5117 = vrot.lane.b32.xlu0 %v5076, 96
        %v5118 = vpop.permute.xlu0 %5117
        %5119 = vrot.lane.b32.xlu0 %v5077, 96
        %v5120 = vpop.permute.xlu0 %5119
        %5121 = vrot.lane.b32.xlu0 %v5078, 96
        %v5122 = vpop.permute.xlu0 %5121
        %5123 = vrot.lane.b32.xlu0 %v5079, 96
        %v5124 = vpop.permute.xlu0 %5123
        %5125 = vrot.lane.b32.xlu0 %v5080, 96
        %v5126 = vpop.permute.xlu0 %5125
        %5127 = vrot.lane.b32.xlu0 %v5081, 96
        %v5128 = vpop.permute.xlu0 %5127
        %5129 = vrot.lane.b32.xlu0 %v5082, 96
        %v5130 = vpop.permute.xlu0 %5129
        %v5147 = vmul.f32 %v4747, %v5100
        %v5148 = vmul.f32 %v4748, %v5102
        %v5149 = vmul.f32 %v4749, %v5104
        %v5150 = vmul.f32 %v4750, %v5106
        %v5151 = vmul.f32 %v4751, %v5108
        %v5152 = vmul.f32 %v4752, %v5110
        %v5153 = vmul.f32 %v4753, %v5112
        %v5154 = vmul.f32 %v4754, %v5114
        %v5155 = vmul.f32 %v4755, %v5116
        %v5156 = vmul.f32 %v4756, %v5118
        %v5157 = vmul.f32 %v4757, %v5120
        %v5158 = vmul.f32 %v4758, %v5122
        %v5159 = vmul.f32 %v4759, %v5124
        %v5160 = vmul.f32 %v4760, %v5126
        %v5161 = vmul.f32 %v4761, %v5128
        %v5162 = vmul.f32 %v4762, %v5130
        %v5163 = vld [vmem:[%s9] sm:$0xff]
        %v5164 = vld [vmem:[%s9 + $0x8] sm:$0xff]
        %v5165 = vld [vmem:[%s9 + $0x10] sm:$0xff]
        %v5166 = vld [vmem:[%s9 + $0x18] sm:$0xff]
        %v5168 = vsel %vm1377, %v5147, 0
        %v5171 = vsel %vm1377, %v5148, 0
        %v5174 = vsel %vm1377, %v5149, 0
        %v5177 = vsel %vm1377, %v5150, 0
        %v5180 = vsel %vm1377, %v5151, 0
        %v5183 = vsel %vm1377, %v5152, 0
        %v5186 = vsel %vm1377, %v5153, 0
        %v5189 = vsel %vm1377, %v5154, 0
        %v5192 = vsel %vm1377, %v5155, 0
        %v5195 = vsel %vm1377, %v5156, 0
        %v5198 = vsel %vm1377, %v5157, 0
        %v5201 = vsel %vm1377, %v5158, 0
        %v5204 = vsel %vm1377, %v5159, 0
        %v5207 = vsel %vm1377, %v5160, 0
        %v5210 = vsel %vm1377, %v5161, 0
        %v5213 = vsel %vm1377, %v5162, 0
        %5215 = vmatpush.msra.mxu0 0.0
        %5216 = vmatpush.msra.mxu0 0.0
        %5217 = vmatpush.msra.mxu0 0.0
        %5218 = vmatpush.msra.mxu0 0.0
        %5219 = vmatpush.msra.mxu0 0.0
        %5220 = vmatpush.msra.mxu0 0.0
        %5221 = vmatpush.msra.mxu0 0.0
        %5222 = vmatpush.msra.mxu0 0.0
        %5223 = vmatpush.msra.mxu0 0.0
        %5224 = vmatpush.msra.mxu0 0.0
        %5225 = vmatpush.msra.mxu0 0.0
        %5226 = vmatpush.msra.mxu0 0.0
        %5227 = vmatpush.msra.mxu0 %v5166
        %5228 = vmatpush.msra.mxu0 %v5165
        %5229 = vmatpush.msra.mxu0 %v5164
        %5230 = vmatpush.msra.mxu0 %v5163
        %5231 = vmatmul.f32.gmra.mxu0 %v5168
        %v5232 = vpop.f32.mrf.mxu0
        %v5233 = vadd.f32 0.0, %v5232
        %5234 = vmatmul.f32.gmra.mxu0 %v5171
        %v5235 = vpop.f32.mrf.mxu0
        %v5236 = vadd.f32 0.0, %v5235
        %5237 = vmatmul.f32.gmra.mxu0 %v5174
        %v5238 = vpop.f32.mrf.mxu0
        %v5239 = vadd.f32 0.0, %v5238
        %5240 = vmatmul.f32.gmra.mxu0 %v5177
        %v5241 = vpop.f32.mrf.mxu0
        %v5242 = vadd.f32 0.0, %v5241
        %5243 = vmatmul.f32.gmra.mxu0 %v5180
        %v5244 = vpop.f32.mrf.mxu0
        %v5245 = vadd.f32 0.0, %v5244
        %5246 = vmatmul.f32.gmra.mxu0 %v5183
        %v5247 = vpop.f32.mrf.mxu0
        %v5248 = vadd.f32 0.0, %v5247
        %5249 = vmatmul.f32.gmra.mxu0 %v5186
        %v5250 = vpop.f32.mrf.mxu0
        %v5251 = vadd.f32 0.0, %v5250
        %5252 = vmatmul.f32.gmra.mxu0 %v5189
        %v5253 = vpop.f32.mrf.mxu0
        %v5254 = vadd.f32 0.0, %v5253
        %5255 = vmatmul.f32.gmra.mxu0 %v5192
        %v5256 = vpop.f32.mrf.mxu0
        %v5257 = vadd.f32 0.0, %v5256
        %5258 = vmatmul.f32.gmra.mxu0 %v5195
        %v5259 = vpop.f32.mrf.mxu0
        %v5260 = vadd.f32 0.0, %v5259
        %5261 = vmatmul.f32.gmra.mxu0 %v5198
        %v5262 = vpop.f32.mrf.mxu0
        %v5263 = vadd.f32 0.0, %v5262
        %5264 = vmatmul.f32.gmra.mxu0 %v5201
        %v5265 = vpop.f32.mrf.mxu0
        %v5266 = vadd.f32 0.0, %v5265
        %5267 = vmatmul.f32.gmra.mxu0 %v5204
        %v5268 = vpop.f32.mrf.mxu0
        %v5269 = vadd.f32 0.0, %v5268
        %5270 = vmatmul.f32.gmra.mxu0 %v5207
        %v5271 = vpop.f32.mrf.mxu0
        %v5272 = vadd.f32 0.0, %v5271
        %5273 = vmatmul.f32.gmra.mxu0 %v5210
        %v5274 = vpop.f32.mrf.mxu0
        %v5275 = vadd.f32 0.0, %v5274
        %5276 = vmatmul.f32.gmra.mxu0 %v5213
        %v5277 = vpop.f32.mrf.mxu0
        %v5278 = vadd.f32 0.0, %v5277
        %5279 = vdwg.mxu0
        %5280 = vst.msk [vmem:[%s378] sm:$0xff] %vm395, %v5233
        %5281 = vst.msk [vmem:[%s378 + $0x8] sm:$0xff] %vm395, %v5236
        %5282 = vst.msk [vmem:[%s378 + $0x10] sm:$0xff] %vm395, %v5239
        %5283 = vst.msk [vmem:[%s378 + $0x18] sm:$0xff] %vm395, %v5242
        %5284 = vst.msk [vmem:[%s378 + $0x20] sm:$0xff] %vm395, %v5245
        %5285 = vst.msk [vmem:[%s378 + $0x28] sm:$0xff] %vm395, %v5248
        %5286 = vst.msk [vmem:[%s378 + $0x30] sm:$0xff] %vm395, %v5251
        %5287 = vst.msk [vmem:[%s378 + $0x38] sm:$0xff] %vm395, %v5254
        %5288 = vst.msk [vmem:[%s378 + $0x40] sm:$0xff] %vm395, %v5257
        %5289 = vst.msk [vmem:[%s378 + $0x48] sm:$0xff] %vm395, %v5260
        %5290 = vst.msk [vmem:[%s378 + $0x50] sm:$0xff] %vm395, %v5263
        %5291 = vst.msk [vmem:[%s378 + $0x58] sm:$0xff] %vm395, %v5266
        %5292 = vst.msk [vmem:[%s378 + $0x60] sm:$0xff] %vm395, %v5269
        %5293 = vst.msk [vmem:[%s378 + $0x68] sm:$0xff] %vm395, %v5272
        %5294 = vst.msk [vmem:[%s378 + $0x70] sm:$0xff] %vm395, %v5275
        %5295 = vst.msk [vmem:[%s378 + $0x78] sm:$0xff] %vm395, %v5278
        %s5296 = sand.u32 %s250, 1
        %s5297 = scalar_lea.sflag [#allocation10], %s5296
        %s5298 = sand.u32 %s250, 1
        %s5299 = smul.addr %s5298, 128
        %s5300 = scalar_lea.vmem [#allocation11], %s5299
        // Predicated region
        $region79: #{tpu_custom_call.1} parent=59 // pred_check
          %p5301 = pneg %p260
        $region80: #{tpu_custom_call.1} parent=59 // pred_check_branch
          %5303 = sbr.rel (%p5301) target = $region82
        $region81: #{tpu_custom_call.1} parent=59 // pred_region
          %5305 = vsyncadd %s5297, 0
          %s5306 = smul.addr %s27, 8
          %s5307 = scalar_lea.hbm %s10, %s5306
          %s5308 = sshll.u32 %s5300, 4
          %s5309 = int_to_ptr.vmem [resolvable:$true] %s5308
          %s5310 = sshll.u32 %s5307, 4
          %s5311 = int_to_ptr.hbm [resolvable:$true] %s5310
          %5316 = dma.vmem_to_hbm [thread:$0]  %s5309, 2048, %s5311, %s5297, 128, 256, 8
        $region82: #{tpu_custom_call.1} parent=59 // pred_fallthru
          _
      $region60: #{tpu_custom_call.1} parent=5 // pred_fallthru
        _
      %p5317 = scmp.le.s32.totalorder 2, %s22
      // Predicated region
      $region83: #{tpu_custom_call.1} parent=5 // pred_check
        %p5318 = pneg %p5317
      $region84: #{tpu_custom_call.1} parent=5 // pred_check_branch
        %5320 = sbr.rel (%p5318) target = $region86
      $region85: #{tpu_custom_call.1} parent=5 // pred_region
        %s5321 = ssub.s32 %s22, 2
        // Predicated region
        $region87: #{tpu_custom_call.1} parent=85 // pred_check
          %p5322 = pneg %p266
        $region88: #{tpu_custom_call.1} parent=85 // pred_check_branch
          %5324 = sbr.rel (%p5322) target = $region90
        $region89: #{tpu_custom_call.1} parent=85 // pred_region
          %s5325 = sand.u32 %s251, 1
          %s5326 = scalar_lea.sflag [#allocation10], %s5325
          %s5327 = sand.u32 %s251, 1
          %s5328 = smul.addr %s5327, 128
          %s5329 = scalar_lea.vmem [#allocation11], %s5328
          %5331 = dma.done %s5326, 2048
        $region90: #{tpu_custom_call.1} parent=85 // pred_fallthru
          _
      $region86: #{tpu_custom_call.1} parent=5 // pred_fallthru
        _
    $region6: #{tpu_custom_call.1} parent=1 // loop_footer
      %s26 = sadd.s32 1, %s22
    $region7: #{tpu_custom_call.1} parent=1 // loop_footer_branch
      %21 = sbr.rel target = $region3
    $region8: #{tpu_custom_call.1} parent=1 // loop_exit
      _
    %5332 = vsyncpa [#allocation9], 1
    %s5333 = scalar_lea.sflag [#allocation9], 1
    %5334 = vsyncpa %s5333, 1
    %5335 = vsyncpa [#allocation10], 1
    %s5336 = scalar_lea.sflag [#allocation10], 1
    %5337 = vsyncpa %s5336, 1

</llo_original>
